<compile_context>
chip_gen: v6e
topology: v6e:2x2x1
jax: 0.10.0
libtpu: 0.0.40
codegen_flags: <defaults>
</compile_context>

<pallas_src>
import numpy as np
import jax
import jax.numpy as jnp
from jax.experimental import pallas as pl
from jax.experimental.pallas import tpu as pltpu

NR1 = 8                  # Nr[1]
K1 = 2                   # K[1]
H = W = K1 * NR1         # 16 (spatial size)
HP = H + 1               # 17: padded pitch (deconv-input / conv0-output grid)
IMG = HP * HP            # 289: rows per image on the padded grid
NROW = 312               # IMG padded up (>= IMG + 18, multiple of 8)
DC = 8                   # channels per branch after conv0 + AntiRectifier


# ----------------------------- fused Pallas kernel ---------------------------

def _encoder12k_kernel(xn_ref, p0_ref, mask_ref, gx_ref, gy_ref, g2_ref,
                       w0_ref, b0_ref, wd_ref, bd_ref,
                       w1_ref, b1_ref, w2_ref, b2_ref,
                       out_ref, skip_ref,
                       s1_ref, ar_ref):
    f32 = jnp.float32

    # ---- per-image L2 normalization scale (matches F.normalize, eps=1e-12) ----
    xn = xn_ref[0]                                               # (8, 64)
    inv = 1.0 / jnp.maximum(jnp.sqrt(jnp.sum(xn * xn)), 1e-12)   # scalar

    # ---- x/y conv (k=2, s=1, AntiRectifier folded into W0/b0), written straight
    #      into the zero-padded ConvTranspose input layout with one masked store -
    z0 = jnp.dot(p0_ref[0], w0_ref[...], preferred_element_type=f32) * inv
    s1_ref[...] = jnp.maximum(z0 + b0_ref[...], 0.0) * mask_ref[...]     # (312, 16)

    # ---- x/y deconv (ConvTranspose2d k=2,s=1) as 4 accumulated tap matmuls ----
    d1 = jnp.dot(s1_ref[pl.ds(0, IMG), :], wd_ref[0], preferred_element_type=f32)
    for t, sh in ((1, 1), (2, HP), (3, HP + 1)):
        d1 = d1 + jnp.dot(s1_ref[pl.ds(sh, IMG), :], wd_ref[t],
                          preferred_element_type=f32)
    d1 = d1 + bd_ref[...]                                        # (289, 16)

    # ---- AntiRectifier once on the whole buffer -> 32 channels ----------------
    ar_ref[...] = jnp.concatenate([jnp.maximum(d1, 0.0),
                                   jnp.maximum(-d1, 0.0)], axis=1)   # (289, 32)

    # ---- order_back(y) + stride-2 tap regroup via 0/1 permutation matmuls -----
    tx = jnp.dot(gx_ref[...], ar_ref[...], preferred_element_type=f32)  # (256, 32)
    ty = jnp.dot(gy_ref[...], ar_ref[...], preferred_element_type=f32)  # (256, 32)
    lane = jax.lax.broadcasted_iota(jnp.int32, (256, 32), 1)
    # x-branch channels live in lane groups {0:8, 16:24}; y-branch in {8:16, 24:32}
    c1in = jnp.where((lane & 8) == 0, tx, ty)                    # (256, 32), tap-major

    # ---- conv1 (k=2, s=2, AR folded) -> x_skip --------------------------------
    acc1 = jnp.dot(c1in[0:64, :], w1_ref[0], preferred_element_type=f32)
    for t in range(1, 4):
        acc1 = acc1 + jnp.dot(c1in[t * 64:(t + 1) * 64, :], w1_ref[t],
                              preferred_element_type=f32)
    skip = jnp.maximum(acc1 + b1_ref[...], 0.0)                  # (64, 32)
    skip_ref[0, :, :] = skip

    # ---- conv2 (k=2, s=2, AR folded) ------------------------------------------
    c2in = jnp.dot(g2_ref[...], skip, preferred_element_type=f32)    # (64, 32)
    acc2 = jnp.dot(c2in[0:16, :], w2_ref[0], preferred_element_type=f32)
    for t in range(1, 4):
        acc2 = acc2 + jnp.dot(c2in[t * 16:(t + 1) * 16, :], w2_ref[t],
                              preferred_element_type=f32)
    out_ref[0, :, :] = jnp.maximum(acc2 + b2_ref[...], 0.0)      # (16, 64)


# ------------------------------- static tables --------------------------------

def _static_tables():
    # Pad/validity mask over the 17x17 (pitch-HP) deconv-input grid, NROW rows.
    mask = np.zeros((NROW, 16), np.float32)
    for p in range(IMG):
        a, c = divmod(p, HP)
        if 1 <= a <= H - 1 and 1 <= c <= W - 1:
            mask[p, :] = 1.0

    def rmap(v):  # order_back row map: output row -> source row in reordered space
        return (v % NR1) * K1 + (v // NR1)

    # Gx / Gy: (4*64, 289).  Row (tap, i1, j1) selects the deconv-output row that
    # feeds conv1 tap (di, dj) at output (i1, j1); Gy additionally applies order_back.
    gx = np.zeros((256, IMG), np.float32)
    gy = np.zeros((256, IMG), np.float32)
    for di in range(2):
        for dj in range(2):
            t = di * 2 + dj
            for i1 in range(8):
                for j1 in range(8):
                    r = t * 64 + i1 * 8 + j1
                    rr, cc = 2 * i1 + di, 2 * j1 + dj
                    gx[r, rr * HP + cc] = 1.0
                    gy[r, rmap(rr) * HP + rmap(cc)] = 1.0

    # G2: (4*16, 64) selection for conv2's stride-2 taps over the 8x8 skip grid.
    g2 = np.zeros((64, 64), np.float32)
    for di in range(2):
        for dj in range(2):
            t = di * 2 + dj
            for i2 in range(4):
                for j2 in range(4):
                    g2[t * 16 + i2 * 4 + j2, (2 * i2 + di) * 8 + (2 * j2 + dj)] = 1.0
    return mask, gx, gy, g2


# ------------------------------- JAX wrapper -----------------------------------

def _conv_w_mat(w):
    # (Cout, Cin, 2, 2) -> (4*Cin, Cout); row order (di, dj, cin)
    return jnp.transpose(w, (2, 3, 1, 0)).reshape(-1, w.shape[0])


def _fold_antirect(wm, b):
    # relu(x @ [W, -W] + [b, -b]) == cat(relu(z), relu(-z))
    return jnp.concatenate([wm, -wm], axis=1), jnp.concatenate([b, -b])


def _conv0_patches(img):
    # img: (B, 16, 16, 2).  Patch rows indexed by the padded 17x17 deconv-input
    # position p = a*17 + b (conv0 output (a-1, b-1)); cols ordered (di, dj, cin).
    B = img.shape[0]
    pim = jnp.pad(img, ((0, 0), (1, 1), (1, 1), (0, 0)))           # (B, 18, 18, 2)
    taps = [pim[:, di:di + HP, dj:dj + HP, :] for di in (0, 1) for dj in (0, 1)]
    pat = jnp.stack(taps, axis=3)                                   # (B, 17, 17, 4, 2)
    return pat.reshape(B, IMG, 8)


def encoder_12k(x_complex, params):
    f32 = jnp.float32
    B = x_complex.shape[0]

    xr = jnp.real(x_complex).astype(f32)
    xi = jnp.imag(x_complex).astype(f32)
    xc = jnp.stack([xr, xi], axis=-1)                               # (B, 16, 16, 2)
    # reorder(x, Nr[1], K[1]) — spatial permutation only; commutes with the
    # per-image L2 normalization applied inside the kernel.
    yc = xc.reshape(B, K1, NR1, K1, NR1, 2).transpose(0, 2, 1, 4, 3, 5).reshape(B, H, W, 2)

    # conv0 im2col patches (wrapper-side static layout plumbing).
    p0 = jnp.concatenate([_conv0_patches(xc), _conv0_patches(yc)], axis=-1)   # (B,289,16)
    p0 = jnp.pad(p0, ((0, 0), (0, NROW - IMG), (0, 0)))                       # (B,312,16)

    # raw values for the in-kernel per-image L2 norm (re & im, 512 values/image).
    xn = jnp.concatenate([xr.reshape(B, H * W), xi.reshape(B, H * W)], axis=-1)
    xn = xn.reshape(B, 8, 64)

    mask_np, gx_np, gy_np, g2_np = _static_tables()
    mask = jnp.asarray(mask_np)
    gx = jnp.asarray(gx_np)
    gy = jnp.asarray(gy_np)
    g2 = jnp.asarray(g2_np)

    # --- weights: AR folded; deconv expressed as flipped-kernel conv of the
    #     padded input; x/y branches block-diagonal so both share one matmul. ----
    w0x, b0x = _fold_antirect(_conv_w_mat(params["xconv_w"]), params["xconv_b"])
    w0y, b0y = _fold_antirect(_conv_w_mat(params["yconv_w"]), params["yconv_b"])
    w0 = jnp.zeros((16, 16), f32).at[0:8, 0:8].set(w0x).at[8:16, 8:16].set(w0y)
    b0 = jnp.concatenate([b0x, b0y]).reshape(1, 16)

    wd = jnp.zeros((4, 16, 16), f32)
    for t, (ei, ej) in enumerate(((0, 0), (0, 1), (1, 0), (1, 1))):
        wd = wd.at[t, 0:8, 0:8].set(params["xdeconv_w"][:, :, 1 - ei, 1 - ej])
        wd = wd.at[t, 8:16, 8:16].set(params["ydeconv_w"][:, :, 1 - ei, 1 - ej])
    bd = jnp.concatenate([params["xdeconv_b"], params["ydeconv_b"]]).reshape(1, 16)

    w1 = jnp.stack([jnp.concatenate([params["conv1_w"][:, :, di, dj].T,
                                     -params["conv1_w"][:, :, di, dj].T], axis=1)
                    for di in (0, 1) for dj in (0, 1)], axis=0)       # (4, 32, 32)
    b1 = jnp.concatenate([params["conv1_b"], -params["conv1_b"]]).reshape(1, 32)
    w2 = jnp.stack([jnp.concatenate([params["conv2_w"][:, :, di, dj].T,
                                     -params["conv2_w"][:, :, di, dj].T], axis=1)
                    for di in (0, 1) for dj in (0, 1)], axis=0)       # (4, 32, 64)
    b2 = jnp.concatenate([params["conv2_b"], -params["conv2_b"]]).reshape(1, 64)

    cst2 = lambda b: (0, 0)
    cst3 = lambda b: (0, 0, 0)

    out2, skip2 = pl.pallas_call(
        _encoder12k_kernel,
        out_shape=(jax.ShapeDtypeStruct((B, 16, 64), f32),   # conv2 + AR
                   jax.ShapeDtypeStruct((B, 64, 32), f32)),  # x_skip
        grid=(B,),
        in_specs=[
            pl.BlockSpec((1, 8, 64), lambda b: (b, 0, 0)),      # xn (norm input)
            pl.BlockSpec((1, NROW, 16), lambda b: (b, 0, 0)),   # conv0 patches
            pl.BlockSpec((NROW, 16), cst2),                     # pad mask
            pl.BlockSpec((256, IMG), cst2),                     # Gx
            pl.BlockSpec((256, IMG), cst2),                     # Gy
            pl.BlockSpec((64, 64), cst2),                       # G2
            pl.BlockSpec((16, 16), cst2),                       # w0
            pl.BlockSpec((1, 16), cst2),                        # b0
            pl.BlockSpec((4, 16, 16), cst3),                    # wd (per tap)
            pl.BlockSpec((1, 16), cst2),                        # bd
            pl.BlockSpec((4, 32, 32), cst3),                    # w1 (per tap)
            pl.BlockSpec((1, 32), cst2),                        # b1
            pl.BlockSpec((4, 32, 64), cst3),                    # w2 (per tap)
            pl.BlockSpec((1, 64), cst2),                        # b2
        ],
        out_specs=(pl.BlockSpec((1, 16, 64), lambda b: (b, 0, 0)),
                   pl.BlockSpec((1, 64, 32), lambda b: (b, 0, 0))),
        scratch_shapes=[
            pltpu.VMEM((NROW, 16), jnp.float32),   # s1: zero-padded deconv input
            pltpu.VMEM((IMG, 32), jnp.float32),    # AntiRectified deconv output
        ],
        compiler_params=pltpu.CompilerParams(dimension_semantics=("parallel",)),
    )(xn, p0, mask, gx, gy, g2, w0, b0, wd, bd, w1, b1, w2, b2)

    # NCHW only once, at the wrapper boundary.
    out = out2.reshape(B, 4, 4, 64).transpose(0, 3, 1, 2)        # (B, 64, 4, 4)
    x_skip = skip2.reshape(B, 8, 8, 32).transpose(0, 3, 1, 2)    # (B, 32, 8, 8)
    return out, x_skip


# ------------------------- deterministic parameters ----------------------------

def init_params(key):
    def conv_init(k, cout, cin, ks=2):
        k1, k2 = jax.random.split(k)
        bound = 1.0 / (cin * ks * ks) ** 0.5
        w = jax.random.uniform(k1, (cout, cin, ks, ks), jnp.float32, -bound, bound)
        b = jax.random.uniform(k2, (cout,), jnp.float32, -bound, bound)
        return w, b

    def deconv_init(k, cin, cout, ks=2):
        k1, k2 = jax.random.split(k)
        bound = 1.0 / (cout * ks * ks) ** 0.5
        w = jax.random.uniform(k1, (cin, cout, ks, ks), jnp.float32, -bound, bound)
        b = jax.random.uniform(k2, (cout,), jnp.float32, -bound, bound)
        return w, b

    keys = jax.random.split(key, 6)
    p = {}
    p["yconv_w"], p["yconv_b"] = conv_init(keys[0], 4, 2)
    p["xconv_w"], p["xconv_b"] = conv_init(keys[1], 4, 2)
    p["ydeconv_w"], p["ydeconv_b"] = deconv_init(keys[2], 8, 8)
    p["xdeconv_w"], p["xdeconv_b"] = deconv_init(keys[3], 8, 8)
    p["conv1_w"], p["conv1_b"] = conv_init(keys[4], 16, 32)
    p["conv2_w"], p["conv2_b"] = conv_init(keys[5], 32, 32)
    return p


if __name__ == "__main__":
    key = jax.random.PRNGKey(0)
    kp, kr, ki = jax.random.split(key, 3)
    B = 2
    params = init_params(kp)
    xr = jax.random.normal(kr, (B, H, W), jnp.float32)
    xi = jax.random.normal(ki, (B, H, W), jnp.float32)
    x = jax.lax.complex(xr, xi)             # (B, 16, 16) complex64

    fwd = jax.jit(encoder_12k)
    out, x_skip = fwd(x, params)
    jax.block_until_ready((out, x_skip))

    assert out.shape == (B, 64, 4, 4), out.shape
    assert x_skip.shape == (B, 32, 8, 8), x_skip.shape
    assert out.dtype == jnp.float32 and x_skip.dtype == jnp.float32
    assert bool(jnp.all(jnp.isfinite(out))) and bool(jnp.all(jnp.isfinite(x_skip)))
    print("KERNEL_OK")
</pallas_src>

<mosaic_0001>
module attributes {stable_mosaic.version = 11 : i64} {
  func.func @_encoder12k_kernel(%arg0: i32, %arg1: memref<1x8x64xf32, #tpu.memory_space<vmem>>, %arg2: memref<1x312x16xf32, #tpu.memory_space<vmem>>, %arg3: memref<312x16xf32, #tpu.memory_space<vmem>>, %arg4: memref<256x289xf32, #tpu.memory_space<vmem>>, %arg5: memref<256x289xf32, #tpu.memory_space<vmem>>, %arg6: memref<64x64xf32, #tpu.memory_space<vmem>>, %arg7: memref<16x16xf32, #tpu.memory_space<vmem>>, %arg8: memref<1x16xf32, #tpu.memory_space<vmem>>, %arg9: memref<4x16x16xf32, #tpu.memory_space<vmem>>, %arg10: memref<1x16xf32, #tpu.memory_space<vmem>>, %arg11: memref<4x32x32xf32, #tpu.memory_space<vmem>>, %arg12: memref<1x32xf32, #tpu.memory_space<vmem>>, %arg13: memref<4x32x64xf32, #tpu.memory_space<vmem>>, %arg14: memref<1x64xf32, #tpu.memory_space<vmem>>, %arg15: memref<1x16x64xf32, #tpu.memory_space<vmem>>, %arg16: memref<1x64x32xf32, #tpu.memory_space<vmem>>, %arg17: memref<312x16xf32, #tpu.memory_space<vmem>>, %arg18: memref<289x32xf32, #tpu.memory_space<vmem>>) attributes {dimension_semantics = [#tpu.dimension_semantics<parallel>], iteration_bounds = array<i64: 2>, scalar_prefetch = 0 : i64, scratch_operands = 2 : i64, tpu.core_type = #tpu.core_type<tc>, window_params = [{transform_indices = @transform_0, window_bounds = array<i64: 1, 8, 64>}, {transform_indices = @transform_1, window_bounds = array<i64: 1, 312, 16>}, {pipeline_mode = #tpu.pipeline_mode<synchronous>, transform_indices = @transform_2, window_bounds = array<i64: 312, 16>}, {pipeline_mode = #tpu.pipeline_mode<synchronous>, transform_indices = @transform_3, window_bounds = array<i64: 256, 289>}, {pipeline_mode = #tpu.pipeline_mode<synchronous>, transform_indices = @transform_4, window_bounds = array<i64: 256, 289>}, {pipeline_mode = #tpu.pipeline_mode<synchronous>, transform_indices = @transform_5, window_bounds = array<i64: 64, 64>}, {pipeline_mode = #tpu.pipeline_mode<synchronous>, transform_indices = @transform_6, window_bounds = array<i64: 16, 16>}, {pipeline_mode = #tpu.pipeline_mode<synchronous>, transform_indices = @transform_7, window_bounds = array<i64: 1, 16>}, {pipeline_mode = #tpu.pipeline_mode<synchronous>, transform_indices = @transform_8, window_bounds = array<i64: 4, 16, 16>}, {pipeline_mode = #tpu.pipeline_mode<synchronous>, transform_indices = @transform_9, window_bounds = array<i64: 1, 16>}, {pipeline_mode = #tpu.pipeline_mode<synchronous>, transform_indices = @transform_10, window_bounds = array<i64: 4, 32, 32>}, {pipeline_mode = #tpu.pipeline_mode<synchronous>, transform_indices = @transform_11, window_bounds = array<i64: 1, 32>}, {pipeline_mode = #tpu.pipeline_mode<synchronous>, transform_indices = @transform_12, window_bounds = array<i64: 4, 32, 64>}, {pipeline_mode = #tpu.pipeline_mode<synchronous>, transform_indices = @transform_13, window_bounds = array<i64: 1, 64>}, {transform_indices = @transform_14, window_bounds = array<i64: 1, 16, 64>}, {transform_indices = @transform_15, window_bounds = array<i64: 1, 64, 32>}]} {
    %c0 = arith.constant 0 : index
    %c0_0 = arith.constant 0 : index
    %c0_1 = arith.constant 0 : index
    %0 = vector.load %arg1[%c0, %c0_0, %c0_1] : memref<1x8x64xf32, #tpu.memory_space<vmem>>, vector<1x8x64xf32>
    %1 = vector.shape_cast %0 : vector<1x8x64xf32> to vector<8x64xf32>
    %2 = arith.mulf %1, %1 : vector<8x64xf32>
    %3 = vector.shape_cast %2 : vector<8x64xf32> to vector<1x8x64xf32>
    %cst = arith.constant dense<0.000000e+00> : vector<1xf32>
    %4 = vector.multi_reduction <add>, %3, %cst [1, 2] : vector<1x8x64xf32> to vector<1xf32>
    %5 = vector.shape_cast %4 : vector<1xf32> to vector<1x1x1xf32>
    %6 = vector.extract %5[0, 0, 0] : f32 from vector<1x1x1xf32>
    %7 = math.sqrt %6 : f32
    %cst_2 = arith.constant 9.99999996E-13 : f32
    %8 = arith.maximumf %7, %cst_2 : f32
    %cst_3 = arith.constant 1.000000e+00 : f32
    %9 = arith.divf %cst_3, %8 : f32
    %c0_4 = arith.constant 0 : index
    %c0_5 = arith.constant 0 : index
    %c0_6 = arith.constant 0 : index
    %10 = vector.load %arg2[%c0_4, %c0_5, %c0_6] : memref<1x312x16xf32, #tpu.memory_space<vmem>>, vector<1x312x16xf32>
    %11 = vector.shape_cast %10 : vector<1x312x16xf32> to vector<312x16xf32>
    %c0_7 = arith.constant 0 : index
    %c0_8 = arith.constant 0 : index
    %12 = vector.load %arg7[%c0_7, %c0_8] : memref<16x16xf32, #tpu.memory_space<vmem>>, vector<16x16xf32>
    %cst_9 = arith.constant dense<0.000000e+00> : vector<312x16xf32>
    %13 = tpu.matmul %11, %12, %cst_9 {dimension_numbers = #tpu.dot_dimension_numbers<[1], [0], [0], [1], [0, 0, 1, 1], [], []>} : vector<312x16xf32>, vector<16x16xf32>, vector<312x16xf32> -> vector<312x16xf32>
    %14 = vector.broadcast %9 : f32 to vector<312x16xf32>
    %15 = arith.mulf %13, %14 : vector<312x16xf32>
    %c0_10 = arith.constant 0 : index
    %c0_11 = arith.constant 0 : index
    %16 = vector.load %arg8[%c0_10, %c0_11] : memref<1x16xf32, #tpu.memory_space<vmem>>, vector<1x16xf32>
    %17 = vector.broadcast %16 : vector<1x16xf32> to vector<312x16xf32>
    %18 = arith.addf %15, %17 : vector<312x16xf32>
    %cst_12 = arith.constant 0.000000e+00 : f32
    %19 = vector.broadcast %cst_12 : f32 to vector<312x16xf32>
    %20 = arith.maximumf %18, %19 : vector<312x16xf32>
    %c0_13 = arith.constant 0 : index
    %c0_14 = arith.constant 0 : index
    %21 = vector.load %arg3[%c0_13, %c0_14] : memref<312x16xf32, #tpu.memory_space<vmem>>, vector<312x16xf32>
    %22 = arith.mulf %20, %21 : vector<312x16xf32>
    %c0_15 = arith.constant 0 : index
    %c0_16 = arith.constant 0 : index
    %23 = vector.load %arg17[%c0_15, %c0_16] : memref<312x16xf32, #tpu.memory_space<vmem>>, vector<312x16xf32>
    tpu.vector_store %arg17[%c0_15, %c0_16], %22 {strides = array<i32>} : memref<312x16xf32, #tpu.memory_space<vmem>>, vector<312x16xf32>,
    %c0_17 = arith.constant 0 : index
    %c0_18 = arith.constant 0 : index
    %24 = vector.load %arg17[%c0_17, %c0_18] : memref<312x16xf32, #tpu.memory_space<vmem>>, vector<289x16xf32>
    %c0_19 = arith.constant 0 : index
    %c0_20 = arith.constant 0 : index
    %c0_21 = arith.constant 0 : index
    %25 = vector.load %arg9[%c0_19, %c0_20, %c0_21] : memref<4x16x16xf32, #tpu.memory_space<vmem>>, vector<1x16x16xf32>
    %26 = vector.shape_cast %25 : vector<1x16x16xf32> to vector<16x16xf32>
    %cst_22 = arith.constant dense<0.000000e+00> : vector<289x16xf32>
    %27 = tpu.matmul %24, %26, %cst_22 {dimension_numbers = #tpu.dot_dimension_numbers<[1], [0], [0], [1], [0, 0, 1, 1], [], []>} : vector<289x16xf32>, vector<16x16xf32>, vector<289x16xf32> -> vector<289x16xf32>
    %c1 = arith.constant 1 : index
    %c0_23 = arith.constant 0 : index
    %28 = vector.load %arg17[%c1, %c0_23] : memref<312x16xf32, #tpu.memory_space<vmem>>, vector<289x16xf32>
    %c1_24 = arith.constant 1 : index
    %c0_25 = arith.constant 0 : index
    %c0_26 = arith.constant 0 : index
    %29 = vector.load %arg9[%c1_24, %c0_25, %c0_26] : memref<4x16x16xf32, #tpu.memory_space<vmem>>, vector<1x16x16xf32>
    %30 = vector.shape_cast %29 : vector<1x16x16xf32> to vector<16x16xf32>
    %cst_27 = arith.constant dense<0.000000e+00> : vector<289x16xf32>
    %31 = tpu.matmul %28, %30, %cst_27 {dimension_numbers = #tpu.dot_dimension_numbers<[1], [0], [0], [1], [0, 0, 1, 1], [], []>} : vector<289x16xf32>, vector<16x16xf32>, vector<289x16xf32> -> vector<289x16xf32>
    %32 = arith.addf %27, %31 : vector<289x16xf32>
    %c17 = arith.constant 17 : index
    %c0_28 = arith.constant 0 : index
    %33 = vector.load %arg17[%c17, %c0_28] : memref<312x16xf32, #tpu.memory_space<vmem>>, vector<289x16xf32>
    %c2 = arith.constant 2 : index
    %c0_29 = arith.constant 0 : index
    %c0_30 = arith.constant 0 : index
    %34 = vector.load %arg9[%c2, %c0_29, %c0_30] : memref<4x16x16xf32, #tpu.memory_space<vmem>>, vector<1x16x16xf32>
    %35 = vector.shape_cast %34 : vector<1x16x16xf32> to vector<16x16xf32>
    %cst_31 = arith.constant dense<0.000000e+00> : vector<289x16xf32>
    %36 = tpu.matmul %33, %35, %cst_31 {dimension_numbers = #tpu.dot_dimension_numbers<[1], [0], [0], [1], [0, 0, 1, 1], [], []>} : vector<289x16xf32>, vector<16x16xf32>, vector<289x16xf32> -> vector<289x16xf32>
    %37 = arith.addf %32, %36 : vector<289x16xf32>
    %c18 = arith.constant 18 : index
    %c0_32 = arith.constant 0 : index
    %38 = vector.load %arg17[%c18, %c0_32] : memref<312x16xf32, #tpu.memory_space<vmem>>, vector<289x16xf32>
    %c3 = arith.constant 3 : index
    %c0_33 = arith.constant 0 : index
    %c0_34 = arith.constant 0 : index
    %39 = vector.load %arg9[%c3, %c0_33, %c0_34] : memref<4x16x16xf32, #tpu.memory_space<vmem>>, vector<1x16x16xf32>
    %40 = vector.shape_cast %39 : vector<1x16x16xf32> to vector<16x16xf32>
    %cst_35 = arith.constant dense<0.000000e+00> : vector<289x16xf32>
    %41 = tpu.matmul %38, %40, %cst_35 {dimension_numbers = #tpu.dot_dimension_numbers<[1], [0], [0], [1], [0, 0, 1, 1], [], []>} : vector<289x16xf32>, vector<16x16xf32>, vector<289x16xf32> -> vector<289x16xf32>
    %42 = arith.addf %37, %41 : vector<289x16xf32>
    %c0_36 = arith.constant 0 : index
    %c0_37 = arith.constant 0 : index
    %43 = vector.load %arg10[%c0_36, %c0_37] : memref<1x16xf32, #tpu.memory_space<vmem>>, vector<1x16xf32>
    %44 = vector.broadcast %43 : vector<1x16xf32> to vector<289x16xf32>
    %45 = arith.addf %42, %44 : vector<289x16xf32>
    %cst_38 = arith.constant 0.000000e+00 : f32
    %46 = vector.broadcast %cst_38 : f32 to vector<289x16xf32>
    %47 = arith.maximumf %45, %46 : vector<289x16xf32>
    %cst_39 = arith.constant 0.000000e+00 : f32
    %48 = vector.broadcast %cst_39 : f32 to vector<289x16xf32>
    %49 = arith.subf %48, %45 : vector<289x16xf32>
    %cst_40 = arith.constant 0.000000e+00 : f32
    %50 = vector.broadcast %cst_40 : f32 to vector<289x16xf32>
    %51 = arith.maximumf %49, %50 : vector<289x16xf32>
    %52 = tpu.concatenate %47, %51 in 1 : vector<289x16xf32>, vector<289x16xf32> -> vector<289x32xf32>
    %c0_41 = arith.constant 0 : index
    %c0_42 = arith.constant 0 : index
    %53 = vector.load %arg18[%c0_41, %c0_42] : memref<289x32xf32, #tpu.memory_space<vmem>>, vector<289x32xf32>
    tpu.vector_store %arg18[%c0_41, %c0_42], %52 {strides = array<i32>} : memref<289x32xf32, #tpu.memory_space<vmem>>, vector<289x32xf32>,
    %c0_43 = arith.constant 0 : index
    %c0_44 = arith.constant 0 : index
    %54 = vector.load %arg4[%c0_43, %c0_44] : memref<256x289xf32, #tpu.memory_space<vmem>>, vector<256x289xf32>
    %c0_45 = arith.constant 0 : index
    %c0_46 = arith.constant 0 : index
    %55 = vector.load %arg18[%c0_45, %c0_46] : memref<289x32xf32, #tpu.memory_space<vmem>>, vector<289x32xf32>
    %cst_47 = arith.constant dense<0.000000e+00> : vector<256x32xf32>
    %56 = tpu.matmul %54, %55, %cst_47 {dimension_numbers = #tpu.dot_dimension_numbers<[1], [0], [0], [1], [0, 0, 1, 1], [], []>} : vector<256x289xf32>, vector<289x32xf32>, vector<256x32xf32> -> vector<256x32xf32>
    %c0_48 = arith.constant 0 : index
    %c0_49 = arith.constant 0 : index
    %57 = vector.load %arg5[%c0_48, %c0_49] : memref<256x289xf32, #tpu.memory_space<vmem>>, vector<256x289xf32>
    %c0_50 = arith.constant 0 : index
    %c0_51 = arith.constant 0 : index
    %58 = vector.load %arg18[%c0_50, %c0_51] : memref<289x32xf32, #tpu.memory_space<vmem>>, vector<289x32xf32>
    %cst_52 = arith.constant dense<0.000000e+00> : vector<256x32xf32>
    %59 = tpu.matmul %57, %58, %cst_52 {dimension_numbers = #tpu.dot_dimension_numbers<[1], [0], [0], [1], [0, 0, 1, 1], [], []>} : vector<256x289xf32>, vector<289x32xf32>, vector<256x32xf32> -> vector<256x32xf32>
    %60 = tpu.iota {dimensions = array<i32: 1>} : vector<256x32xi32>
    %c8_i32 = arith.constant 8 : i32
    %61 = vector.broadcast %c8_i32 : i32 to vector<256x32xi32>
    %62 = arith.andi %60, %61 : vector<256x32xi32>
    %c0_i32 = arith.constant 0 : i32
    %63 = vector.broadcast %c0_i32 : i32 to vector<256x32xi32>
    %64 = arith.cmpi eq, %62, %63 : vector<256x32xi32>
    %65 = arith.select %64, %56, %59 : vector<256x32xi1>, vector<256x32xf32>
    %66 = vector.extract_strided_slice %65 {offsets = [0, 0], sizes = [64, 32], strides = [1, 1]} : vector<256x32xf32> to vector<64x32xf32>
    %c0_53 = arith.constant 0 : index
    %c0_54 = arith.constant 0 : index
    %c0_55 = arith.constant 0 : index
    %67 = vector.load %arg11[%c0_53, %c0_54, %c0_55] : memref<4x32x32xf32, #tpu.memory_space<vmem>>, vector<1x32x32xf32>
    %68 = vector.shape_cast %67 : vector<1x32x32xf32> to vector<32x32xf32>
    %cst_56 = arith.constant dense<0.000000e+00> : vector<64x32xf32>
    %69 = tpu.matmul %66, %68, %cst_56 {dimension_numbers = #tpu.dot_dimension_numbers<[1], [0], [0], [1], [0, 0, 1, 1], [], []>} : vector<64x32xf32>, vector<32x32xf32>, vector<64x32xf32> -> vector<64x32xf32>
    %70 = vector.extract_strided_slice %65 {offsets = [64, 0], sizes = [64, 32], strides = [1, 1]} : vector<256x32xf32> to vector<64x32xf32>
    %c1_57 = arith.constant 1 : index
    %c0_58 = arith.constant 0 : index
    %c0_59 = arith.constant 0 : index
    %71 = vector.load %arg11[%c1_57, %c0_58, %c0_59] : memref<4x32x32xf32, #tpu.memory_space<vmem>>, vector<1x32x32xf32>
    %72 = vector.shape_cast %71 : vector<1x32x32xf32> to vector<32x32xf32>
    %cst_60 = arith.constant dense<0.000000e+00> : vector<64x32xf32>
    %73 = tpu.matmul %70, %72, %cst_60 {dimension_numbers = #tpu.dot_dimension_numbers<[1], [0], [0], [1], [0, 0, 1, 1], [], []>} : vector<64x32xf32>, vector<32x32xf32>, vector<64x32xf32> -> vector<64x32xf32>
    %74 = arith.addf %69, %73 : vector<64x32xf32>
    %75 = vector.extract_strided_slice %65 {offsets = [128, 0], sizes = [64, 32], strides = [1, 1]} : vector<256x32xf32> to vector<64x32xf32>
    %c2_61 = arith.constant 2 : index
    %c0_62 = arith.constant 0 : index
    %c0_63 = arith.constant 0 : index
    %76 = vector.load %arg11[%c2_61, %c0_62, %c0_63] : memref<4x32x32xf32, #tpu.memory_space<vmem>>, vector<1x32x32xf32>
    %77 = vector.shape_cast %76 : vector<1x32x32xf32> to vector<32x32xf32>
    %cst_64 = arith.constant dense<0.000000e+00> : vector<64x32xf32>
    %78 = tpu.matmul %75, %77, %cst_64 {dimension_numbers = #tpu.dot_dimension_numbers<[1], [0], [0], [1], [0, 0, 1, 1], [], []>} : vector<64x32xf32>, vector<32x32xf32>, vector<64x32xf32> -> vector<64x32xf32>
    %79 = arith.addf %74, %78 : vector<64x32xf32>
    %80 = vector.extract_strided_slice %65 {offsets = [192, 0], sizes = [64, 32], strides = [1, 1]} : vector<256x32xf32> to vector<64x32xf32>
    %c3_65 = arith.constant 3 : index
    %c0_66 = arith.constant 0 : index
    %c0_67 = arith.constant 0 : index
    %81 = vector.load %arg11[%c3_65, %c0_66, %c0_67] : memref<4x32x32xf32, #tpu.memory_space<vmem>>, vector<1x32x32xf32>
    %82 = vector.shape_cast %81 : vector<1x32x32xf32> to vector<32x32xf32>
    %cst_68 = arith.constant dense<0.000000e+00> : vector<64x32xf32>
    %83 = tpu.matmul %80, %82, %cst_68 {dimension_numbers = #tpu.dot_dimension_numbers<[1], [0], [0], [1], [0, 0, 1, 1], [], []>} : vector<64x32xf32>, vector<32x32xf32>, vector<64x32xf32> -> vector<64x32xf32>
    %84 = arith.addf %79, %83 : vector<64x32xf32>
    %c0_69 = arith.constant 0 : index
    %c0_70 = arith.constant 0 : index
    %85 = vector.load %arg12[%c0_69, %c0_70] : memref<1x32xf32, #tpu.memory_space<vmem>>, vector<1x32xf32>
    %86 = vector.broadcast %85 : vector<1x32xf32> to vector<64x32xf32>
    %87 = arith.addf %84, %86 : vector<64x32xf32>
    %cst_71 = arith.constant 0.000000e+00 : f32
    %88 = vector.broadcast %cst_71 : f32 to vector<64x32xf32>
    %89 = arith.maximumf %87, %88 : vector<64x32xf32>
    %c0_72 = arith.constant 0 : index
    %c0_73 = arith.constant 0 : index
    %c0_74 = arith.constant 0 : index
    %90 = vector.load %arg16[%c0_72, %c0_73, %c0_74] : memref<1x64x32xf32, #tpu.memory_space<vmem>>, vector<1x64x32xf32>
    %91 = vector.shape_cast %90 : vector<1x64x32xf32> to vector<64x32xf32>
    %92 = vector.shape_cast %89 : vector<64x32xf32> to vector<1x64x32xf32>
    tpu.vector_store %arg16[%c0_72, %c0_73, %c0_74], %92 {strides = array<i32>} : memref<1x64x32xf32, #tpu.memory_space<vmem>>, vector<1x64x32xf32>,
    %c0_75 = arith.constant 0 : index
    %c0_76 = arith.constant 0 : index
    %93 = vector.load %arg6[%c0_75, %c0_76] : memref<64x64xf32, #tpu.memory_space<vmem>>, vector<64x64xf32>
    %cst_77 = arith.constant dense<0.000000e+00> : vector<64x32xf32>
    %94 = tpu.matmul %93, %89, %cst_77 {dimension_numbers = #tpu.dot_dimension_numbers<[1], [0], [0], [1], [0, 0, 1, 1], [], []>} : vector<64x64xf32>, vector<64x32xf32>, vector<64x32xf32> -> vector<64x32xf32>
    %95 = vector.extract_strided_slice %94 {offsets = [0, 0], sizes = [16, 32], strides = [1, 1]} : vector<64x32xf32> to vector<16x32xf32>
    %c0_78 = arith.constant 0 : index
    %c0_79 = arith.constant 0 : index
    %c0_80 = arith.constant 0 : index
    %96 = vector.load %arg13[%c0_78, %c0_79, %c0_80] : memref<4x32x64xf32, #tpu.memory_space<vmem>>, vector<1x32x64xf32>
    %97 = vector.shape_cast %96 : vector<1x32x64xf32> to vector<32x64xf32>
    %cst_81 = arith.constant dense<0.000000e+00> : vector<16x64xf32>
    %98 = tpu.matmul %95, %97, %cst_81 {dimension_numbers = #tpu.dot_dimension_numbers<[1], [0], [0], [1], [0, 0, 1, 1], [], []>} : vector<16x32xf32>, vector<32x64xf32>, vector<16x64xf32> -> vector<16x64xf32>
    %99 = vector.extract_strided_slice %94 {offsets = [16, 0], sizes = [16, 32], strides = [1, 1]} : vector<64x32xf32> to vector<16x32xf32>
    %c1_82 = arith.constant 1 : index
    %c0_83 = arith.constant 0 : index
    %c0_84 = arith.constant 0 : index
    %100 = vector.load %arg13[%c1_82, %c0_83, %c0_84] : memref<4x32x64xf32, #tpu.memory_space<vmem>>, vector<1x32x64xf32>
    %101 = vector.shape_cast %100 : vector<1x32x64xf32> to vector<32x64xf32>
    %cst_85 = arith.constant dense<0.000000e+00> : vector<16x64xf32>
    %102 = tpu.matmul %99, %101, %cst_85 {dimension_numbers = #tpu.dot_dimension_numbers<[1], [0], [0], [1], [0, 0, 1, 1], [], []>} : vector<16x32xf32>, vector<32x64xf32>, vector<16x64xf32> -> vector<16x64xf32>
    %103 = arith.addf %98, %102 : vector<16x64xf32>
    %104 = vector.extract_strided_slice %94 {offsets = [32, 0], sizes = [16, 32], strides = [1, 1]} : vector<64x32xf32> to vector<16x32xf32>
    %c2_86 = arith.constant 2 : index
    %c0_87 = arith.constant 0 : index
    %c0_88 = arith.constant 0 : index
    %105 = vector.load %arg13[%c2_86, %c0_87, %c0_88] : memref<4x32x64xf32, #tpu.memory_space<vmem>>, vector<1x32x64xf32>
    %106 = vector.shape_cast %105 : vector<1x32x64xf32> to vector<32x64xf32>
    %cst_89 = arith.constant dense<0.000000e+00> : vector<16x64xf32>
    %107 = tpu.matmul %104, %106, %cst_89 {dimension_numbers = #tpu.dot_dimension_numbers<[1], [0], [0], [1], [0, 0, 1, 1], [], []>} : vector<16x32xf32>, vector<32x64xf32>, vector<16x64xf32> -> vector<16x64xf32>
    %108 = arith.addf %103, %107 : vector<16x64xf32>
    %109 = vector.extract_strided_slice %94 {offsets = [48, 0], sizes = [16, 32], strides = [1, 1]} : vector<64x32xf32> to vector<16x32xf32>
    %c3_90 = arith.constant 3 : index
    %c0_91 = arith.constant 0 : index
    %c0_92 = arith.constant 0 : index
    %110 = vector.load %arg13[%c3_90, %c0_91, %c0_92] : memref<4x32x64xf32, #tpu.memory_space<vmem>>, vector<1x32x64xf32>
    %111 = vector.shape_cast %110 : vector<1x32x64xf32> to vector<32x64xf32>
    %cst_93 = arith.constant dense<0.000000e+00> : vector<16x64xf32>
    %112 = tpu.matmul %109, %111, %cst_93 {dimension_numbers = #tpu.dot_dimension_numbers<[1], [0], [0], [1], [0, 0, 1, 1], [], []>} : vector<16x32xf32>, vector<32x64xf32>, vector<16x64xf32> -> vector<16x64xf32>
    %113 = arith.addf %108, %112 : vector<16x64xf32>
    %c0_94 = arith.constant 0 : index
    %c0_95 = arith.constant 0 : index
    %114 = vector.load %arg14[%c0_94, %c0_95] : memref<1x64xf32, #tpu.memory_space<vmem>>, vector<1x64xf32>
    %115 = vector.broadcast %114 : vector<1x64xf32> to vector<16x64xf32>
    %116 = arith.addf %113, %115 : vector<16x64xf32>
    %cst_96 = arith.constant 0.000000e+00 : f32
    %117 = vector.broadcast %cst_96 : f32 to vector<16x64xf32>
    %118 = arith.maximumf %116, %117 : vector<16x64xf32>
    %c0_97 = arith.constant 0 : index
    %c0_98 = arith.constant 0 : index
    %c0_99 = arith.constant 0 : index
    %119 = vector.load %arg15[%c0_97, %c0_98, %c0_99] : memref<1x16x64xf32, #tpu.memory_space<vmem>>, vector<1x16x64xf32>
    %120 = vector.shape_cast %119 : vector<1x16x64xf32> to vector<16x64xf32>
    %121 = vector.shape_cast %118 : vector<16x64xf32> to vector<1x16x64xf32>
    tpu.vector_store %arg15[%c0_97, %c0_98, %c0_99], %121 {strides = array<i32>} : memref<1x16x64xf32, #tpu.memory_space<vmem>>, vector<1x16x64xf32>,
    return
  }
  func.func @transform_0(%arg0: i32) -> (i32, i32, i32) {
    %c0_i32 = arith.constant 0 : i32
    %c0_i32_0 = arith.constant 0 : i32
    %c0_i32_1 = arith.constant 0 : i32
    return %arg0, %c0_i32, %c0_i32_0 : i32, i32, i32
  }
  func.func @transform_1(%arg0: i32) -> (i32, i32, i32) {
    %c0_i32 = arith.constant 0 : i32
    %c0_i32_0 = arith.constant 0 : i32
    %c0_i32_1 = arith.constant 0 : i32
    return %arg0, %c0_i32, %c0_i32_0 : i32, i32, i32
  }
  func.func @transform_2(%arg0: i32) -> (i32, i32) {
    %c0_i32 = arith.constant 0 : i32
    %c0_i32_0 = arith.constant 0 : i32
    %c0_i32_1 = arith.constant 0 : i32
    return %c0_i32, %c0_i32_0 : i32, i32
  }
  func.func @transform_3(%arg0: i32) -> (i32, i32) {
    %c0_i32 = arith.constant 0 : i32
    %c0_i32_0 = arith.constant 0 : i32
    %c0_i32_1 = arith.constant 0 : i32
    return %c0_i32, %c0_i32_0 : i32, i32
  }
  func.func @transform_4(%arg0: i32) -> (i32, i32) {
    %c0_i32 = arith.constant 0 : i32
    %c0_i32_0 = arith.constant 0 : i32
    %c0_i32_1 = arith.constant 0 : i32
    return %c0_i32, %c0_i32_0 : i32, i32
  }
  func.func @transform_5(%arg0: i32) -> (i32, i32) {
    %c0_i32 = arith.constant 0 : i32
    %c0_i32_0 = arith.constant 0 : i32
    %c0_i32_1 = arith.constant 0 : i32
    return %c0_i32, %c0_i32_0 : i32, i32
  }
  func.func @transform_6(%arg0: i32) -> (i32, i32) {
    %c0_i32 = arith.constant 0 : i32
    %c0_i32_0 = arith.constant 0 : i32
    %c0_i32_1 = arith.constant 0 : i32
    return %c0_i32, %c0_i32_0 : i32, i32
  }
  func.func @transform_7(%arg0: i32) -> (i32, i32) {
    %c0_i32 = arith.constant 0 : i32
    %c0_i32_0 = arith.constant 0 : i32
    %c0_i32_1 = arith.constant 0 : i32
    return %c0_i32, %c0_i32_0 : i32, i32
  }
  func.func @transform_8(%arg0: i32) -> (i32, i32, i32) {
    %c0_i32 = arith.constant 0 : i32
    %c0_i32_0 = arith.constant 0 : i32
    %c0_i32_1 = arith.constant 0 : i32
    %c0_i32_2 = arith.constant 0 : i32
    return %c0_i32, %c0_i32_0, %c0_i32_1 : i32, i32, i32
  }
  func.func @transform_9(%arg0: i32) -> (i32, i32) {
    %c0_i32 = arith.constant 0 : i32
    %c0_i32_0 = arith.constant 0 : i32
    %c0_i32_1 = arith.constant 0 : i32
    return %c0_i32, %c0_i32_0 : i32, i32
  }
  func.func @transform_10(%arg0: i32) -> (i32, i32, i32) {
    %c0_i32 = arith.constant 0 : i32
    %c0_i32_0 = arith.constant 0 : i32
    %c0_i32_1 = arith.constant 0 : i32
    %c0_i32_2 = arith.constant 0 : i32
    return %c0_i32, %c0_i32_0, %c0_i32_1 : i32, i32, i32
  }
  func.func @transform_11(%arg0: i32) -> (i32, i32) {
    %c0_i32 = arith.constant 0 : i32
    %c0_i32_0 = arith.constant 0 : i32
    %c0_i32_1 = arith.constant 0 : i32
    return %c0_i32, %c0_i32_0 : i32, i32
  }
  func.func @transform_12(%arg0: i32) -> (i32, i32, i32) {
    %c0_i32 = arith.constant 0 : i32
    %c0_i32_0 = arith.constant 0 : i32
    %c0_i32_1 = arith.constant 0 : i32
    %c0_i32_2 = arith.constant 0 : i32
    return %c0_i32, %c0_i32_0, %c0_i32_1 : i32, i32, i32
  }
  func.func @transform_13(%arg0: i32) -> (i32, i32) {
    %c0_i32 = arith.constant 0 : i32
    %c0_i32_0 = arith.constant 0 : i32
    %c0_i32_1 = arith.constant 0 : i32
    return %c0_i32, %c0_i32_0 : i32, i32
  }
  func.func @transform_14(%arg0: i32) -> (i32, i32, i32) {
    %c0_i32 = arith.constant 0 : i32
    %c0_i32_0 = arith.constant 0 : i32
    %c0_i32_1 = arith.constant 0 : i32
    return %arg0, %c0_i32, %c0_i32_0 : i32, i32, i32
  }
  func.func @transform_15(%arg0: i32) -> (i32, i32, i32) {
    %c0_i32 = arith.constant 0 : i32
    %c0_i32_0 = arith.constant 0 : i32
    %c0_i32_1 = arith.constant 0 : i32
    return %arg0, %c0_i32, %c0_i32_0 : i32, i32, i32
  }
}

</mosaic_0001>

<llo_original>
// kernel: custom-call
$region0: #{custom-call}
  %s0 = inlined_call_operand.hbm [shape: c64[2,16,16], index: 0, kind: input, shape index: {}]
  %s1 = inlined_call_operand.vmem [shape: f32[2,16,16], index: 1, kind: output, shape index: {}]
  $region1: #{custom-call} parent=0
    #allocation0 [shape = 's32[1]{0}', space=sflag, size = 0x4, scoped, tag = 'scoped memory for custom-call']
    %2 = vsyncpa [#allocation0], 0
    %s3 = sshll.u32 %s1, 4
    %s4 = int_to_ptr.vmem [resolvable:$true] %s3
    %6 = dma.hbm_to_vmem [thread:$0]  %s0, 512, %s4, [#allocation0]
    %7 = dma.done [#allocation0], 512
    %8 = vsyncpa [#allocation0], 1

// kernel: custom-call.1
$region0: #{custom-call.1}
  %s0 = inlined_call_operand.hbm [shape: c64[2,16,16], index: 0, kind: input, shape index: {}]
  %s1 = inlined_call_operand.vmem [shape: f32[2,16,16], index: 1, kind: output, shape index: {}]
  %s2 = scalar_lea.hbm %s0, 512
  $region1: #{custom-call.1} parent=0
    #allocation0 [shape = 's32[1]{0}', space=sflag, size = 0x4, scoped, tag = 'scoped memory for custom-call.1']
    %3 = vsyncpa [#allocation0], 0
    %s4 = sshll.u32 %s1, 4
    %s5 = int_to_ptr.vmem [resolvable:$true] %s4
    %7 = dma.hbm_to_vmem [thread:$0]  %s2, 512, %s5, [#allocation0]
    %8 = dma.done [#allocation0], 512
    %9 = vsyncpa [#allocation0], 1

// kernel: neg.14
$region0: #{neg.14}
  #allocation0 [shape = 's32[1]{0}', space=sflag, size = 0x4, scoped, tag = 'scoped memory for neg.14']
  %s0 = inlined_call_operand.vmem [shape: f32[8,4], index: 0, kind: input, shape index: {}]
  %s1 = inlined_call_operand.vmem [shape: f32[8,4], index: 1, kind: output, shape index: {}]
  %v2 = vld [vmem:[%s0] sm:$0xff]
  %3 = xla_tuple %v2
  %4 = xla_tuple %3
  %v5 = vxor.u32 %v2, 2147483648
  %6 = xla_tuple %v5
  %7 = vst [vmem:[%s1] sm:$0xff] %v5

// kernel: neg.17
$region0: #{neg.17}
  #allocation0 [shape = 's32[1]{0}', space=sflag, size = 0x4, scoped, tag = 'scoped memory for neg.17']
  %s0 = inlined_call_operand.vmem [shape: f32[4], index: 0, kind: input, shape index: {}]
  %s1 = inlined_call_operand.vmem [shape: f32[4], index: 1, kind: output, shape index: {}]
  %v2 = vld [vmem:[%s0] sm:$0x1]
  %3 = xla_tuple %v2
  %4 = xla_tuple %3
  %v5 = vxor.u32 %v2, 2147483648
  %6 = xla_tuple %v5
  %7 = vst [vmem:[%s1] sm:$0x1] %v5

// kernel: neg.22
$region0: #{neg.22}
  #allocation0 [shape = 's32[1]{0}', space=sflag, size = 0x4, scoped, tag = 'scoped memory for neg.22']
  %s0 = inlined_call_operand.vmem [shape: f32[16], index: 0, kind: input, shape index: {}]
  %s1 = inlined_call_operand.vmem [shape: f32[16], index: 1, kind: output, shape index: {}]
  %v2 = vld [vmem:[%s0] sm:$0x1]
  %3 = xla_tuple %v2
  %4 = xla_tuple %3
  %v5 = vxor.u32 %v2, 2147483648
  %6 = xla_tuple %v5
  %7 = vst [vmem:[%s1] sm:$0x1] %v5

// kernel: neg.27
$region0: #{neg.27}
  #allocation0 [shape = 's32[1]{0}', space=sflag, size = 0x4, scoped, tag = 'scoped memory for neg.27']
  %s0 = inlined_call_operand.vmem [shape: f32[32], index: 0, kind: input, shape index: {}]
  %s1 = inlined_call_operand.vmem [shape: f32[32], index: 1, kind: output, shape index: {}]
  %v2 = vld [vmem:[%s0] sm:$0x1]
  %3 = xla_tuple %v2
  %4 = xla_tuple %3
  %v5 = vxor.u32 %v2, 2147483648
  %6 = xla_tuple %v5
  %7 = vst [vmem:[%s1] sm:$0x1] %v5

// kernel: encoder_12k.1
$region0: #{encoder_12k.1}
  #allocation0 [shape = 'u32[]', space=smem, size = 0x4, offset = 0x4, fixed_abs, tag = 'smem constant byte address 0x4 - core index']
  #allocation1 [shape = 'u32[144,128]{1,0:T(1,128)}', space=vmem, size = 0x12000, scoped, tag = 'internal scratch']
  #allocation2 [shape = 'f32[312,16]{1,0:T(8,128)}', space=vmem, size = 0x27000, scoped, tag = 'scratch operand']
  #allocation3 [shape = 'f32[289,32]{1,0:T(8,128)}', space=vmem, size = 0x25000, scoped, tag = 'scratch operand']
  %s0 = inlined_call_operand.vmem [shape: f32[2,8,64], index: 0, kind: input, shape index: {}]
  %s1 = inlined_call_operand.vmem [shape: f32[2,312,16], index: 1, kind: input, shape index: {}]
  %s2 = inlined_call_operand.vmem [shape: f32[312,16], index: 2, kind: input, shape index: {}]
  %s3 = inlined_call_operand.vmem [shape: f32[256,289], index: 3, kind: input, shape index: {}]
  %s4 = inlined_call_operand.vmem [shape: f32[256,289], index: 4, kind: input, shape index: {}]
  %s5 = inlined_call_operand.vmem [shape: f32[64,64], index: 5, kind: input, shape index: {}]
  %s6 = inlined_call_operand.vmem [shape: f32[16,16], index: 6, kind: input, shape index: {}]
  %s7 = inlined_call_operand.vmem [shape: f32[1,16], index: 7, kind: input, shape index: {}]
  %s8 = inlined_call_operand.vmem [shape: f32[4,16,16], index: 8, kind: input, shape index: {}]
  %s9 = inlined_call_operand.vmem [shape: f32[1,16], index: 9, kind: input, shape index: {}]
  %s10 = inlined_call_operand.vmem [shape: f32[4,32,32], index: 10, kind: input, shape index: {}]
  %s11 = inlined_call_operand.vmem [shape: f32[1,32], index: 11, kind: input, shape index: {}]
  %s12 = inlined_call_operand.vmem [shape: f32[4,32,64], index: 12, kind: input, shape index: {}]
  %s13 = inlined_call_operand.vmem [shape: f32[1,64], index: 13, kind: input, shape index: {}]
  %s14 = inlined_call_operand.hbm [shape: f32[2,16,64], index: 14, kind: output, shape index: {0}]
  %s15 = inlined_call_operand.hbm [shape: f32[2,64,32], index: 15, kind: output, shape index: {1}]
  %16 = xla_tuple %s14, %s15
  %s17 = sld [smem:[#allocation0]]
  $region97: #{encoder_12k.1} parent=0
    _
  %s19 = ssub.s32 1, %s17
  %s20 = scalar_select 0, %s19, %s17
  $region1: #{encoder_12k.1} parent=0
    #allocation4 [shape = 'u8[16384]{0}', space=vmem, size = 0x4000, scoped, tag = 'output window, operand 0']
    #allocation5 [shape = 's32[2]{0}', space=sflag, size = 0x8, scoped, tag = 'scoped memory for encoder_12k.1']
    #allocation6 [shape = 'u8[65536]{0}', space=vmem, size = 0x10000, scoped, tag = 'output window, operand 1']
    #allocation7 [shape = 's32[2]{0}', space=sflag, size = 0x8, scoped, tag = 'scoped memory for encoder_12k.1']
    %21 = vsyncpa [#allocation5], 0
    %s22 = scalar_lea.sflag [#allocation5], 1
    %23 = vsyncpa %s22, 0
    %24 = vsyncpa [#allocation7], 0
    %s25 = scalar_lea.sflag [#allocation7], 1
    %26 = vsyncpa %s25, 0
    loop: start=0, step=1, limit=4
    $region2: #{encoder_12k.1} parent=1 // loop_pre_header
      _
    $region3: #{encoder_12k.1} parent=1 // loop_header
      %s28 = sphi 0, %s32
      %p29 = scmp.ge.s32.totalorder %s28, 4
      %s38 = sphi 0, %s40
      %s41 = sphi 0, %s38
      %s42 = sphi 0, %s41
      %s58 = sphi 0, %s42
      %s64 = sphi 0, %s66
      %s67 = sphi 0, %s64
      %s68 = sphi 0, %s67
      %s84 = sphi 0, %s68
      %s88 = sphi 0, %s88
      %s90 = sphi 0, %s88
      %s91 = sphi 0, %s90
      %s105 = sphi 0, %s91
      %s109 = sphi 0, %s109
      %s111 = sphi 0, %s109
      %s112 = sphi 0, %s111
      %s126 = sphi 0, %s112
      %s130 = sphi 0, %s130
      %s132 = sphi 0, %s130
      %s133 = sphi 0, %s132
      %s147 = sphi 0, %s133
      %s151 = sphi 0, %s151
      %s153 = sphi 0, %s151
      %s154 = sphi 0, %s153
      %s168 = sphi 0, %s154
      %s172 = sphi 0, %s172
      %s174 = sphi 0, %s172
      %s175 = sphi 0, %s174
      %s189 = sphi 0, %s175
      %s193 = sphi 0, %s193
      %s195 = sphi 0, %s193
      %s196 = sphi 0, %s195
      %s210 = sphi 0, %s196
      %s214 = sphi 0, %s214
      %s216 = sphi 0, %s214
      %s217 = sphi 0, %s216
      %s231 = sphi 0, %s217
      %s235 = sphi 0, %s235
      %s237 = sphi 0, %s235
      %s238 = sphi 0, %s237
      %s252 = sphi 0, %s238
      %s256 = sphi 0, %s256
      %s258 = sphi 0, %s256
      %s259 = sphi 0, %s258
      %s273 = sphi 0, %s259
      %s277 = sphi 0, %s277
      %s279 = sphi 0, %s277
      %s280 = sphi 0, %s279
      %s294 = sphi 0, %s280
      %s298 = sphi 0, %s298
      %s300 = sphi 0, %s298
      %s301 = sphi 0, %s300
      %s315 = sphi 0, %s301
      %s319 = sphi 0, %s319
      %s321 = sphi 0, %s319
      %s322 = sphi 0, %s321
      %s336 = sphi 0, %s322
      %s342 = sphi 0, %s344
      %s345 = sphi 0, %s342
      %s346 = sphi 0, %s345
      %s362 = sphi 0, %s346
      %s368 = sphi 0, %s370
      %s371 = sphi 0, %s368
      %s372 = sphi 0, %s371
      %s388 = sphi 0, %s372
    $region4: #{encoder_12k.1} parent=1 // loop_header_branch
      %31 = sbr.rel (%p29) target = $region8
    $region5: #{encoder_12k.1} parent=1 // loop_body
      %s33 = ssub.s32 %s28, 1
      %s34 = ssub.s32 %s28, 2
      %s35 = sadd.s32 %s28, 1
      %s36 = ssub.s32 %s28, %s35
      %p37 = scmp.eq.s32.totalorder %s36, 0
      %s39 = sadd.s32 %s38, 1
      %s40 = scalar_select %p37, %s38, %s39
      %p43 = pneg %p37
      %p44 = scmp.eq.s32.totalorder %s28, 1
      %p45 = por %p43, %p44
      %p46 = scmp.ne.s32.totalorder %s38, %s41
      %p47 = scmp.eq.s32.totalorder %s28, 0
      %p48 = por %p46, %p47
      %p49 = scmp.ne.s32.totalorder %s38, %s41
      %p50 = scmp.eq.s32.totalorder %s33, 1
      %p51 = por %p49, %p50
      %p52 = scmp.ne.s32.totalorder %s41, %s42
      %p53 = scmp.eq.s32.totalorder %s33, 0
      %p54 = por %p52, %p53
      %p55 = scmp.ne.s32.totalorder %s41, %s42
      %p56 = scmp.eq.s32.totalorder %s34, 1
      %p57 = por %p55, %p56
      %p59 = scmp.ne.s32.totalorder %s42, %s58
      %p60 = scmp.eq.s32.totalorder %s34, 0
      %p61 = por %p59, %p60
      %s62 = ssub.s32 %s28, %s35
      %p63 = scmp.eq.s32.totalorder %s62, 0
      %s65 = sadd.s32 %s64, 1
      %s66 = scalar_select %p63, %s64, %s65
      %p69 = pneg %p63
      %p70 = scmp.eq.s32.totalorder %s28, 1
      %p71 = por %p69, %p70
      %p72 = scmp.ne.s32.totalorder %s64, %s67
      %p73 = scmp.eq.s32.totalorder %s28, 0
      %p74 = por %p72, %p73
      %p75 = scmp.ne.s32.totalorder %s64, %s67
      %p76 = scmp.eq.s32.totalorder %s33, 1
      %p77 = por %p75, %p76
      %p78 = scmp.ne.s32.totalorder %s67, %s68
      %p79 = scmp.eq.s32.totalorder %s33, 0
      %p80 = por %p78, %p79
      %p81 = scmp.ne.s32.totalorder %s67, %s68
      %p82 = scmp.eq.s32.totalorder %s34, 1
      %p83 = por %p81, %p82
      %p85 = scmp.ne.s32.totalorder %s68, %s84
      %p86 = scmp.eq.s32.totalorder %s34, 0
      %p87 = por %p85, %p86
      %s89 = sadd.s32 %s88, 1
      %p92 = scmp.eq.s32.totalorder %s28, 1
      %p93 = scmp.ne.s32.totalorder %s88, %s90
      %p94 = scmp.eq.s32.totalorder %s28, 0
      %p95 = por %p93, %p94
      %p96 = scmp.ne.s32.totalorder %s88, %s90
      %p97 = scmp.eq.s32.totalorder %s33, 1
      %p98 = por %p96, %p97
      %p99 = scmp.ne.s32.totalorder %s90, %s91
      %p100 = scmp.eq.s32.totalorder %s33, 0
      %p101 = por %p99, %p100
      %p102 = scmp.ne.s32.totalorder %s90, %s91
      %p103 = scmp.eq.s32.totalorder %s34, 1
      %p104 = por %p102, %p103
      %p106 = scmp.ne.s32.totalorder %s91, %s105
      %p107 = scmp.eq.s32.totalorder %s34, 0
      %p108 = por %p106, %p107
      %s110 = sadd.s32 %s109, 1
      %p113 = scmp.eq.s32.totalorder %s28, 1
      %p114 = scmp.ne.s32.totalorder %s109, %s111
      %p115 = scmp.eq.s32.totalorder %s28, 0
      %p116 = por %p114, %p115
      %p117 = scmp.ne.s32.totalorder %s109, %s111
      %p118 = scmp.eq.s32.totalorder %s33, 1
      %p119 = por %p117, %p118
      %p120 = scmp.ne.s32.totalorder %s111, %s112
      %p121 = scmp.eq.s32.totalorder %s33, 0
      %p122 = por %p120, %p121
      %p123 = scmp.ne.s32.totalorder %s111, %s112
      %p124 = scmp.eq.s32.totalorder %s34, 1
      %p125 = por %p123, %p124
      %p127 = scmp.ne.s32.totalorder %s112, %s126
      %p128 = scmp.eq.s32.totalorder %s34, 0
      %p129 = por %p127, %p128
      %s131 = sadd.s32 %s130, 1
      %p134 = scmp.eq.s32.totalorder %s28, 1
      %p135 = scmp.ne.s32.totalorder %s130, %s132
      %p136 = scmp.eq.s32.totalorder %s28, 0
      %p137 = por %p135, %p136
      %p138 = scmp.ne.s32.totalorder %s130, %s132
      %p139 = scmp.eq.s32.totalorder %s33, 1
      %p140 = por %p138, %p139
      %p141 = scmp.ne.s32.totalorder %s132, %s133
      %p142 = scmp.eq.s32.totalorder %s33, 0
      %p143 = por %p141, %p142
      %p144 = scmp.ne.s32.totalorder %s132, %s133
      %p145 = scmp.eq.s32.totalorder %s34, 1
      %p146 = por %p144, %p145
      %p148 = scmp.ne.s32.totalorder %s133, %s147
      %p149 = scmp.eq.s32.totalorder %s34, 0
      %p150 = por %p148, %p149
      %s152 = sadd.s32 %s151, 1
      %p155 = scmp.eq.s32.totalorder %s28, 1
      %p156 = scmp.ne.s32.totalorder %s151, %s153
      %p157 = scmp.eq.s32.totalorder %s28, 0
      %p158 = por %p156, %p157
      %p159 = scmp.ne.s32.totalorder %s151, %s153
      %p160 = scmp.eq.s32.totalorder %s33, 1
      %p161 = por %p159, %p160
      %p162 = scmp.ne.s32.totalorder %s153, %s154
      %p163 = scmp.eq.s32.totalorder %s33, 0
      %p164 = por %p162, %p163
      %p165 = scmp.ne.s32.totalorder %s153, %s154
      %p166 = scmp.eq.s32.totalorder %s34, 1
      %p167 = por %p165, %p166
      %p169 = scmp.ne.s32.totalorder %s154, %s168
      %p170 = scmp.eq.s32.totalorder %s34, 0
      %p171 = por %p169, %p170
      %s173 = sadd.s32 %s172, 1
      %p176 = scmp.eq.s32.totalorder %s28, 1
      %p177 = scmp.ne.s32.totalorder %s172, %s174
      %p178 = scmp.eq.s32.totalorder %s28, 0
      %p179 = por %p177, %p178
      %p180 = scmp.ne.s32.totalorder %s172, %s174
      %p181 = scmp.eq.s32.totalorder %s33, 1
      %p182 = por %p180, %p181
      %p183 = scmp.ne.s32.totalorder %s174, %s175
      %p184 = scmp.eq.s32.totalorder %s33, 0
      %p185 = por %p183, %p184
      %p186 = scmp.ne.s32.totalorder %s174, %s175
      %p187 = scmp.eq.s32.totalorder %s34, 1
      %p188 = por %p186, %p187
      %p190 = scmp.ne.s32.totalorder %s175, %s189
      %p191 = scmp.eq.s32.totalorder %s34, 0
      %p192 = por %p190, %p191
      %s194 = sadd.s32 %s193, 1
      %p197 = scmp.eq.s32.totalorder %s28, 1
      %p198 = scmp.ne.s32.totalorder %s193, %s195
      %p199 = scmp.eq.s32.totalorder %s28, 0
      %p200 = por %p198, %p199
      %p201 = scmp.ne.s32.totalorder %s193, %s195
      %p202 = scmp.eq.s32.totalorder %s33, 1
      %p203 = por %p201, %p202
      %p204 = scmp.ne.s32.totalorder %s195, %s196
      %p205 = scmp.eq.s32.totalorder %s33, 0
      %p206 = por %p204, %p205
      %p207 = scmp.ne.s32.totalorder %s195, %s196
      %p208 = scmp.eq.s32.totalorder %s34, 1
      %p209 = por %p207, %p208
      %p211 = scmp.ne.s32.totalorder %s196, %s210
      %p212 = scmp.eq.s32.totalorder %s34, 0
      %p213 = por %p211, %p212
      %s215 = sadd.s32 %s214, 1
      %p218 = scmp.eq.s32.totalorder %s28, 1
      %p219 = scmp.ne.s32.totalorder %s214, %s216
      %p220 = scmp.eq.s32.totalorder %s28, 0
      %p221 = por %p219, %p220
      %p222 = scmp.ne.s32.totalorder %s214, %s216
      %p223 = scmp.eq.s32.totalorder %s33, 1
      %p224 = por %p222, %p223
      %p225 = scmp.ne.s32.totalorder %s216, %s217
      %p226 = scmp.eq.s32.totalorder %s33, 0
      %p227 = por %p225, %p226
      %p228 = scmp.ne.s32.totalorder %s216, %s217
      %p229 = scmp.eq.s32.totalorder %s34, 1
      %p230 = por %p228, %p229
      %p232 = scmp.ne.s32.totalorder %s217, %s231
      %p233 = scmp.eq.s32.totalorder %s34, 0
      %p234 = por %p232, %p233
      %s236 = sadd.s32 %s235, 1
      %p239 = scmp.eq.s32.totalorder %s28, 1
      %p240 = scmp.ne.s32.totalorder %s235, %s237
      %p241 = scmp.eq.s32.totalorder %s28, 0
      %p242 = por %p240, %p241
      %p243 = scmp.ne.s32.totalorder %s235, %s237
      %p244 = scmp.eq.s32.totalorder %s33, 1
      %p245 = por %p243, %p244
      %p246 = scmp.ne.s32.totalorder %s237, %s238
      %p247 = scmp.eq.s32.totalorder %s33, 0
      %p248 = por %p246, %p247
      %p249 = scmp.ne.s32.totalorder %s237, %s238
      %p250 = scmp.eq.s32.totalorder %s34, 1
      %p251 = por %p249, %p250
      %p253 = scmp.ne.s32.totalorder %s238, %s252
      %p254 = scmp.eq.s32.totalorder %s34, 0
      %p255 = por %p253, %p254
      %s257 = sadd.s32 %s256, 1
      %p260 = scmp.eq.s32.totalorder %s28, 1
      %p261 = scmp.ne.s32.totalorder %s256, %s258
      %p262 = scmp.eq.s32.totalorder %s28, 0
      %p263 = por %p261, %p262
      %p264 = scmp.ne.s32.totalorder %s256, %s258
      %p265 = scmp.eq.s32.totalorder %s33, 1
      %p266 = por %p264, %p265
      %p267 = scmp.ne.s32.totalorder %s258, %s259
      %p268 = scmp.eq.s32.totalorder %s33, 0
      %p269 = por %p267, %p268
      %p270 = scmp.ne.s32.totalorder %s258, %s259
      %p271 = scmp.eq.s32.totalorder %s34, 1
      %p272 = por %p270, %p271
      %p274 = scmp.ne.s32.totalorder %s259, %s273
      %p275 = scmp.eq.s32.totalorder %s34, 0
      %p276 = por %p274, %p275
      %s278 = sadd.s32 %s277, 1
      %p281 = scmp.eq.s32.totalorder %s28, 1
      %p282 = scmp.ne.s32.totalorder %s277, %s279
      %p283 = scmp.eq.s32.totalorder %s28, 0
      %p284 = por %p282, %p283
      %p285 = scmp.ne.s32.totalorder %s277, %s279
      %p286 = scmp.eq.s32.totalorder %s33, 1
      %p287 = por %p285, %p286
      %p288 = scmp.ne.s32.totalorder %s279, %s280
      %p289 = scmp.eq.s32.totalorder %s33, 0
      %p290 = por %p288, %p289
      %p291 = scmp.ne.s32.totalorder %s279, %s280
      %p292 = scmp.eq.s32.totalorder %s34, 1
      %p293 = por %p291, %p292
      %p295 = scmp.ne.s32.totalorder %s280, %s294
      %p296 = scmp.eq.s32.totalorder %s34, 0
      %p297 = por %p295, %p296
      %s299 = sadd.s32 %s298, 1
      %p302 = scmp.eq.s32.totalorder %s28, 1
      %p303 = scmp.ne.s32.totalorder %s298, %s300
      %p304 = scmp.eq.s32.totalorder %s28, 0
      %p305 = por %p303, %p304
      %p306 = scmp.ne.s32.totalorder %s298, %s300
      %p307 = scmp.eq.s32.totalorder %s33, 1
      %p308 = por %p306, %p307
      %p309 = scmp.ne.s32.totalorder %s300, %s301
      %p310 = scmp.eq.s32.totalorder %s33, 0
      %p311 = por %p309, %p310
      %p312 = scmp.ne.s32.totalorder %s300, %s301
      %p313 = scmp.eq.s32.totalorder %s34, 1
      %p314 = por %p312, %p313
      %p316 = scmp.ne.s32.totalorder %s301, %s315
      %p317 = scmp.eq.s32.totalorder %s34, 0
      %p318 = por %p316, %p317
      %s320 = sadd.s32 %s319, 1
      %p323 = scmp.eq.s32.totalorder %s28, 1
      %p324 = scmp.ne.s32.totalorder %s319, %s321
      %p325 = scmp.eq.s32.totalorder %s28, 0
      %p326 = por %p324, %p325
      %p327 = scmp.ne.s32.totalorder %s319, %s321
      %p328 = scmp.eq.s32.totalorder %s33, 1
      %p329 = por %p327, %p328
      %p330 = scmp.ne.s32.totalorder %s321, %s322
      %p331 = scmp.eq.s32.totalorder %s33, 0
      %p332 = por %p330, %p331
      %p333 = scmp.ne.s32.totalorder %s321, %s322
      %p334 = scmp.eq.s32.totalorder %s34, 1
      %p335 = por %p333, %p334
      %p337 = scmp.ne.s32.totalorder %s322, %s336
      %p338 = scmp.eq.s32.totalorder %s34, 0
      %p339 = por %p337, %p338
      %s340 = ssub.s32 %s28, %s35
      %p341 = scmp.eq.s32.totalorder %s340, 0
      %s343 = sadd.s32 %s342, 1
      %s344 = scalar_select %p341, %s342, %s343
      %p347 = pneg %p341
      %p348 = scmp.eq.s32.totalorder %s28, 1
      %p349 = por %p347, %p348
      %p350 = scmp.ne.s32.totalorder %s342, %s345
      %p351 = scmp.eq.s32.totalorder %s28, 0
      %p352 = por %p350, %p351
      %p353 = scmp.ne.s32.totalorder %s342, %s345
      %p354 = scmp.eq.s32.totalorder %s33, 1
      %p355 = por %p353, %p354
      %p356 = scmp.ne.s32.totalorder %s345, %s346
      %p357 = scmp.eq.s32.totalorder %s33, 0
      %p358 = por %p356, %p357
      %p359 = scmp.ne.s32.totalorder %s345, %s346
      %p360 = scmp.eq.s32.totalorder %s34, 1
      %p361 = por %p359, %p360
      %p363 = scmp.ne.s32.totalorder %s346, %s362
      %p364 = scmp.eq.s32.totalorder %s34, 0
      %p365 = por %p363, %p364
      %s366 = ssub.s32 %s28, %s35
      %p367 = scmp.eq.s32.totalorder %s366, 0
      %s369 = sadd.s32 %s368, 1
      %s370 = scalar_select %p367, %s368, %s369
      %p373 = pneg %p367
      %p374 = scmp.eq.s32.totalorder %s28, 1
      %p375 = por %p373, %p374
      %p376 = scmp.ne.s32.totalorder %s368, %s371
      %p377 = scmp.eq.s32.totalorder %s28, 0
      %p378 = por %p376, %p377
      %p379 = scmp.ne.s32.totalorder %s368, %s371
      %p380 = scmp.eq.s32.totalorder %s33, 1
      %p381 = por %p379, %p380
      %p382 = scmp.ne.s32.totalorder %s371, %s372
      %p383 = scmp.eq.s32.totalorder %s33, 0
      %p384 = por %p382, %p383
      %p385 = scmp.ne.s32.totalorder %s371, %s372
      %p386 = scmp.eq.s32.totalorder %s34, 1
      %p387 = por %p385, %p386
      %p389 = scmp.ne.s32.totalorder %s372, %s388
      %p390 = scmp.eq.s32.totalorder %s34, 0
      %p391 = por %p389, %p390
      %p392 = scmp.le.s32.totalorder 1, %s28
      %p393 = scmp.lt.s32.totalorder %s28, 3
      %p394 = pnand %p392, %p393
      %p395 = pneg %p394
      // Predicated region
      $region9: #{encoder_12k.1} parent=5 // pred_check
        _
      $region10: #{encoder_12k.1} parent=5 // pred_check_branch
        %397 = sbr.rel (%p394) target = $region12
      $region11: #{encoder_12k.1} parent=5 // pred_region
        %s398 = ssub.s32 %s28, 1
        // Predicated region
        $region13: #{encoder_12k.1} parent=11 // pred_check
          %p399 = pneg %p101
        $region14: #{encoder_12k.1} parent=11 // pred_check_branch
          %401 = sbr.rel (%p399) target = $region16
        $region15: #{encoder_12k.1} parent=11 // pred_region
          _
        $region16: #{encoder_12k.1} parent=11 // pred_fallthru
          _
        // Predicated region
        $region17: #{encoder_12k.1} parent=11 // pred_check
          %p402 = pneg %p122
        $region18: #{encoder_12k.1} parent=11 // pred_check_branch
          %404 = sbr.rel (%p402) target = $region20
        $region19: #{encoder_12k.1} parent=11 // pred_region
          _
        $region20: #{encoder_12k.1} parent=11 // pred_fallthru
          _
        // Predicated region
        $region21: #{encoder_12k.1} parent=11 // pred_check
          %p405 = pneg %p143
        $region22: #{encoder_12k.1} parent=11 // pred_check_branch
          %407 = sbr.rel (%p405) target = $region24
        $region23: #{encoder_12k.1} parent=11 // pred_region
          _
        $region24: #{encoder_12k.1} parent=11 // pred_fallthru
          _
        // Predicated region
        $region25: #{encoder_12k.1} parent=11 // pred_check
          %p408 = pneg %p164
        $region26: #{encoder_12k.1} parent=11 // pred_check_branch
          %410 = sbr.rel (%p408) target = $region28
        $region27: #{encoder_12k.1} parent=11 // pred_region
          _
        $region28: #{encoder_12k.1} parent=11 // pred_fallthru
          _
        // Predicated region
        $region29: #{encoder_12k.1} parent=11 // pred_check
          %p411 = pneg %p185
        $region30: #{encoder_12k.1} parent=11 // pred_check_branch
          %413 = sbr.rel (%p411) target = $region32
        $region31: #{encoder_12k.1} parent=11 // pred_region
          _
        $region32: #{encoder_12k.1} parent=11 // pred_fallthru
          _
        // Predicated region
        $region33: #{encoder_12k.1} parent=11 // pred_check
          %p414 = pneg %p206
        $region34: #{encoder_12k.1} parent=11 // pred_check_branch
          %416 = sbr.rel (%p414) target = $region36
        $region35: #{encoder_12k.1} parent=11 // pred_region
          _
        $region36: #{encoder_12k.1} parent=11 // pred_fallthru
          _
        // Predicated region
        $region37: #{encoder_12k.1} parent=11 // pred_check
          %p417 = pneg %p227
        $region38: #{encoder_12k.1} parent=11 // pred_check_branch
          %419 = sbr.rel (%p417) target = $region40
        $region39: #{encoder_12k.1} parent=11 // pred_region
          _
        $region40: #{encoder_12k.1} parent=11 // pred_fallthru
          _
        // Predicated region
        $region41: #{encoder_12k.1} parent=11 // pred_check
          %p420 = pneg %p248
        $region42: #{encoder_12k.1} parent=11 // pred_check_branch
          %422 = sbr.rel (%p420) target = $region44
        $region43: #{encoder_12k.1} parent=11 // pred_region
          _
        $region44: #{encoder_12k.1} parent=11 // pred_fallthru
          _
        // Predicated region
        $region45: #{encoder_12k.1} parent=11 // pred_check
          %p423 = pneg %p269
        $region46: #{encoder_12k.1} parent=11 // pred_check_branch
          %425 = sbr.rel (%p423) target = $region48
        $region47: #{encoder_12k.1} parent=11 // pred_region
          _
        $region48: #{encoder_12k.1} parent=11 // pred_fallthru
          _
        // Predicated region
        $region49: #{encoder_12k.1} parent=11 // pred_check
          %p426 = pneg %p290
        $region50: #{encoder_12k.1} parent=11 // pred_check_branch
          %428 = sbr.rel (%p426) target = $region52
        $region51: #{encoder_12k.1} parent=11 // pred_region
          _
        $region52: #{encoder_12k.1} parent=11 // pred_fallthru
          _
        // Predicated region
        $region53: #{encoder_12k.1} parent=11 // pred_check
          %p429 = pneg %p311
        $region54: #{encoder_12k.1} parent=11 // pred_check_branch
          %431 = sbr.rel (%p429) target = $region56
        $region55: #{encoder_12k.1} parent=11 // pred_region
          _
        $region56: #{encoder_12k.1} parent=11 // pred_fallthru
          _
        // Predicated region
        $region57: #{encoder_12k.1} parent=11 // pred_check
          %p432 = pneg %p332
        $region58: #{encoder_12k.1} parent=11 // pred_check_branch
          %434 = sbr.rel (%p432) target = $region60
        $region59: #{encoder_12k.1} parent=11 // pred_region
          _
        $region60: #{encoder_12k.1} parent=11 // pred_fallthru
          _
      $region12: #{encoder_12k.1} parent=5 // pred_fallthru
        _
      %p435 = scmp.lt.s32.totalorder %s28, 2
      // Predicated region
      $region61: #{encoder_12k.1} parent=5 // pred_check
        %p436 = pneg %p435
      $region62: #{encoder_12k.1} parent=5 // pred_check_branch
        %438 = sbr.rel (%p436) target = $region64
      $region63: #{encoder_12k.1} parent=5 // pred_region
        // Predicated region
        $region65: #{encoder_12k.1} parent=63 // pred_check
          %p439 = pneg %p48
        $region66: #{encoder_12k.1} parent=63 // pred_check_branch
          %441 = sbr.rel (%p439) target = $region68
        $region67: #{encoder_12k.1} parent=63 // pred_region
          %p442 = scmp.lt.s32.totalorder %s28, 1
          %s443 = scalar_select %p442, %s28, 1
          %s444 = smul.addr %s443, 8
          %s445 = scalar_lea.vmem %s0, %s444
        $region68: #{encoder_12k.1} parent=63 // pred_fallthru
          _
        // Predicated region
        $region69: #{encoder_12k.1} parent=63 // pred_check
          %p446 = pneg %p74
        $region70: #{encoder_12k.1} parent=63 // pred_check_branch
          %448 = sbr.rel (%p446) target = $region72
        $region71: #{encoder_12k.1} parent=63 // pred_region
          %p449 = scmp.lt.s32.totalorder %s28, 1
          %s450 = scalar_select %p449, %s28, 1
          %s451 = smul.addr %s450, 39
          %s452 = smul.addr %s451, 8
          %s453 = scalar_lea.vmem %s1, %s452
        $region72: #{encoder_12k.1} parent=63 // pred_fallthru
          _
      $region64: #{encoder_12k.1} parent=5 // pred_fallthru
        _
      %p454 = scmp.le.s32.totalorder 1, %s28
      %p455 = scmp.lt.s32.totalorder %s28, 3
      %p456 = pnand %p454, %p455
      %p457 = pneg %p456
      // Predicated region
      $region73: #{encoder_12k.1} parent=5 // pred_check
        _
      $region74: #{encoder_12k.1} parent=5 // pred_check_branch
        %459 = sbr.rel (%p456) target = $region76
      $region75: #{encoder_12k.1} parent=5 // pred_region
        %s460 = ssub.s32 %s28, 1
        %p461 = scmp.lt.s32.totalorder %s33, 1
        %s462 = scalar_select %p461, %s33, 1
        %s463 = smul.addr %s462, 8
        %s464 = scalar_lea.vmem %s0, %s463
        %p465 = pneg %p54
        %p466 = pneg %p51
        %p467 = scmp.lt.s32.totalorder %s33, 1
        %s468 = scalar_select %p467, %s33, 1
        %s469 = smul.addr %s468, 39
        %s470 = smul.addr %s469, 8
        %s471 = scalar_lea.vmem %s1, %s470
        %p472 = pneg %p80
        %p473 = pneg %p77
        %p474 = pneg %p101
        %p475 = pneg %p98
        %p476 = pneg %p122
        %p477 = pneg %p119
        %p478 = pneg %p143
        %p479 = pneg %p140
        %p480 = pneg %p164
        %p481 = pneg %p161
        %p482 = pneg %p185
        %p483 = pneg %p182
        %p484 = pneg %p206
        %p485 = pneg %p203
        %p486 = pneg %p227
        %p487 = pneg %p224
        %p488 = pneg %p248
        %p489 = pneg %p245
        %p490 = pneg %p269
        %p491 = pneg %p266
        %p492 = pneg %p290
        %p493 = pneg %p287
        %p494 = pneg %p311
        %p495 = pneg %p308
        %p496 = pneg %p332
        %p497 = pneg %p329
        %p498 = pneg %p358
        %p499 = pneg %p355
        %s500 = sand.u32 %s345, 1
        %s501 = scalar_lea.sflag [#allocation5], %s500
        %s502 = sand.u32 %s345, 1
        %s503 = smul.addr %s502, 16
        %s504 = scalar_lea.vmem [#allocation4], %s503
        %p505 = pneg %p384
        %p506 = pneg %p381
        %s507 = sand.u32 %s371, 1
        %s508 = scalar_lea.sflag [#allocation7], %s507
        %s509 = sand.u32 %s371, 1
        %s510 = smul.addr %s509, 64
        %s511 = scalar_lea.vmem [#allocation6], %s510
        %p512 = scmp.lt.s32.totalorder %s33, 1
        %s513 = scalar_select %p512, %s33, 1
        %s514 = smul.addr %s513, 8
        %s515 = scalar_lea.vmem %s0, %s514
        %p516 = scmp.lt.s32.totalorder %s33, 1
        %s517 = scalar_select %p516, %s33, 1
        %s518 = smul.addr %s517, 39
        %s519 = smul.addr %s518, 8
        %s520 = scalar_lea.vmem %s1, %s519
        %v521 = vld [vmem:[%s515] sm:$0xff]
        %v522 = vmul.f32 %v521, %v521
        %vm523 = vcmask 523264
        %v524 = vsel %vm523, %v522, 0.0
        %525 = vadd.xlane.f32.xlu0 %v524
        %v526 = vpop.xlane.xlu0 %525
        %v527 = vrot.slane %v526, 4
        %v528 = vadd.f32 %v526, %v527
        %v529 = vrot.slane %v528, 2
        %v530 = vadd.f32 %v528, %v529
        %v531 = vrot.slane %v530, 1
        %v532 = vadd.f32 %v530, %v531
        %s533 = vtos %v532
        %v534 = vstv %s533
        %v535 = vrsqrt.pop %v534
        %v536 = vmul.f32 %v534, %v535
        %vm537 = vcmp.eq.f32.partialorder %v534, inf
        %v538 = vsel %vm537, %v534, %v536
        %vm539 = vcmp.eq.f32.partialorder %v534, 0.0
        %v540 = vand.u32 %v534, 2147483648
        %v541 = vsel %vm539, %v540, %v538
        %s542 = vtos %v541
        %s543 = smax.f32 %s542, 1e-12
        %v544 = vstv %s543
        %v545 = vrcp.pop %v544
        %s546 = vtos %v545
        %v547 = vld [vmem:[%s520] sm:$0xff]
        %v548 = vld [vmem:[%s520 + $0x8] sm:$0xff]
        %v549 = vld [vmem:[%s520 + $0x10] sm:$0xff]
        %v550 = vld [vmem:[%s520 + $0x18] sm:$0xff]
        %v551 = vld [vmem:[%s520 + $0x20] sm:$0xff]
        %v552 = vld [vmem:[%s520 + $0x28] sm:$0xff]
        %v553 = vld [vmem:[%s520 + $0x30] sm:$0xff]
        %v554 = vld [vmem:[%s520 + $0x38] sm:$0xff]
        %v555 = vld [vmem:[%s520 + $0x40] sm:$0xff]
        %v556 = vld [vmem:[%s520 + $0x48] sm:$0xff]
        %v557 = vld [vmem:[%s520 + $0x50] sm:$0xff]
        %v558 = vld [vmem:[%s520 + $0x58] sm:$0xff]
        %v559 = vld [vmem:[%s520 + $0x60] sm:$0xff]
        %v560 = vld [vmem:[%s520 + $0x68] sm:$0xff]
        %v561 = vld [vmem:[%s520 + $0x70] sm:$0xff]
        %v562 = vld [vmem:[%s520 + $0x78] sm:$0xff]
        %v563 = vld [vmem:[%s520 + $0x80] sm:$0xff]
        %v564 = vld [vmem:[%s520 + $0x88] sm:$0xff]
        %v565 = vld [vmem:[%s520 + $0x90] sm:$0xff]
        %v566 = vld [vmem:[%s520 + $0x98] sm:$0xff]
        %v567 = vld [vmem:[%s520 + $0xa0] sm:$0xff]
        %v568 = vld [vmem:[%s520 + $0xa8] sm:$0xff]
        %v569 = vld [vmem:[%s520 + $0xb0] sm:$0xff]
        %v570 = vld [vmem:[%s520 + $0xb8] sm:$0xff]
        %v571 = vld [vmem:[%s520 + $0xc0] sm:$0xff]
        %v572 = vld [vmem:[%s520 + $0xc8] sm:$0xff]
        %v573 = vld [vmem:[%s520 + $0xd0] sm:$0xff]
        %v574 = vld [vmem:[%s520 + $0xd8] sm:$0xff]
        %v575 = vld [vmem:[%s520 + $0xe0] sm:$0xff]
        %v576 = vld [vmem:[%s520 + $0xe8] sm:$0xff]
        %v577 = vld [vmem:[%s520 + $0xf0] sm:$0xff]
        %v578 = vld [vmem:[%s520 + $0xf8] sm:$0xff]
        %v579 = vld [vmem:[%s520 + $0x100] sm:$0xff]
        %v580 = vld [vmem:[%s520 + $0x108] sm:$0xff]
        %v581 = vld [vmem:[%s520 + $0x110] sm:$0xff]
        %v582 = vld [vmem:[%s520 + $0x118] sm:$0xff]
        %v583 = vld [vmem:[%s520 + $0x120] sm:$0xff]
        %v584 = vld [vmem:[%s520 + $0x128] sm:$0xff]
        %v585 = vld [vmem:[%s520 + $0x130] sm:$0xff]
        %v586 = vld [vmem:[%s6] sm:$0xff]
        %v587 = vld [vmem:[%s6 + $0x8] sm:$0xff]
        %vm588 = vcmask 130048
        %v590 = vsel %vm588, %v547, 0
        %v593 = vsel %vm588, %v548, 0
        %v596 = vsel %vm588, %v549, 0
        %v599 = vsel %vm588, %v550, 0
        %v602 = vsel %vm588, %v551, 0
        %v605 = vsel %vm588, %v552, 0
        %v608 = vsel %vm588, %v553, 0
        %v611 = vsel %vm588, %v554, 0
        %v614 = vsel %vm588, %v555, 0
        %v617 = vsel %vm588, %v556, 0
        %v620 = vsel %vm588, %v557, 0
        %v623 = vsel %vm588, %v558, 0
        %v626 = vsel %vm588, %v559, 0
        %v629 = vsel %vm588, %v560, 0
        %v632 = vsel %vm588, %v561, 0
        %v635 = vsel %vm588, %v562, 0
        %v638 = vsel %vm588, %v563, 0
        %v641 = vsel %vm588, %v564, 0
        %v644 = vsel %vm588, %v565, 0
        %v647 = vsel %vm588, %v566, 0
        %v650 = vsel %vm588, %v567, 0
        %v653 = vsel %vm588, %v568, 0
        %v656 = vsel %vm588, %v569, 0
        %v659 = vsel %vm588, %v570, 0
        %v662 = vsel %vm588, %v571, 0
        %v665 = vsel %vm588, %v572, 0
        %v668 = vsel %vm588, %v573, 0
        %v671 = vsel %vm588, %v574, 0
        %v674 = vsel %vm588, %v575, 0
        %v677 = vsel %vm588, %v576, 0
        %v680 = vsel %vm588, %v577, 0
        %v683 = vsel %vm588, %v578, 0
        %v686 = vsel %vm588, %v579, 0
        %v689 = vsel %vm588, %v580, 0
        %v692 = vsel %vm588, %v581, 0
        %v695 = vsel %vm588, %v582, 0
        %v698 = vsel %vm588, %v583, 0
        %v701 = vsel %vm588, %v584, 0
        %v704 = vsel %vm588, %v585, 0
        %706 = vmatprep.subr.mxu0 0.0
        %707 = vmatpush1.msra.mxu0 0.0
        %708 = vmatprep.subr.mxu0 0.0
        %709 = vmatpush1.msra.mxu0 0.0
        %710 = vmatprep.subr.mxu0 0.0
        %711 = vmatpush1.msra.mxu0 0.0
        %712 = vmatprep.subr.mxu0 0.0
        %713 = vmatpush1.msra.mxu0 0.0
        %714 = vmatprep.subr.mxu0 0.0
        %715 = vmatpush1.msra.mxu0 0.0
        %716 = vmatprep.subr.mxu0 0.0
        %717 = vmatpush1.msra.mxu0 0.0
        %718 = vmatprep.subr.mxu0 0.0
        %719 = vmatpush1.msra.mxu0 0.0
        %720 = vmatprep.subr.mxu0 0.0
        %721 = vmatpush1.msra.mxu0 0.0
        %722 = vmatprep.subr.mxu0 0.0
        %723 = vmatpush1.msra.mxu0 0.0
        %724 = vmatprep.subr.mxu0 0.0
        %725 = vmatpush1.msra.mxu0 0.0
        %726 = vmatprep.subr.mxu0 0.0
        %727 = vmatpush1.msra.mxu0 0.0
        %728 = vmatprep.subr.mxu0 0.0
        %729 = vmatpush1.msra.mxu0 0.0
        %730 = vmatprep.subr.mxu0 0.0
        %731 = vmatpush1.msra.mxu0 0.0
        %732 = vmatprep.subr.mxu0 0.0
        %733 = vmatpush1.msra.mxu0 0.0
        %734 = vmatprep.subr.mxu0 0.0
        %735 = vmatpush1.msra.mxu0 %v587
        %736 = vmatprep.subr.mxu0 0.0
        %737 = vmatpush1.msra.mxu0 %v586
        %738 = vmatprep.subr.mxu0 0.0
        %739 = vmatpush2.msra.mxu0 0.0
        %740 = vmatprep.subr.mxu0 0.0
        %741 = vmatpush2.msra.mxu0 0.0
        %742 = vmatprep.subr.mxu0 0.0
        %743 = vmatpush2.msra.mxu0 0.0
        %744 = vmatprep.subr.mxu0 0.0
        %745 = vmatpush2.msra.mxu0 0.0
        %746 = vmatprep.subr.mxu0 0.0
        %747 = vmatpush2.msra.mxu0 0.0
        %748 = vmatprep.subr.mxu0 0.0
        %749 = vmatpush2.msra.mxu0 0.0
        %750 = vmatprep.subr.mxu0 0.0
        %751 = vmatpush2.msra.mxu0 0.0
        %752 = vmatprep.subr.mxu0 0.0
        %753 = vmatpush2.msra.mxu0 0.0
        %754 = vmatprep.subr.mxu0 0.0
        %755 = vmatpush2.msra.mxu0 0.0
        %756 = vmatprep.subr.mxu0 0.0
        %757 = vmatpush2.msra.mxu0 0.0
        %758 = vmatprep.subr.mxu0 0.0
        %759 = vmatpush2.msra.mxu0 0.0
        %760 = vmatprep.subr.mxu0 0.0
        %761 = vmatpush2.msra.mxu0 0.0
        %762 = vmatprep.subr.mxu0 0.0
        %763 = vmatpush2.msra.mxu0 0.0
        %764 = vmatprep.subr.mxu0 0.0
        %765 = vmatpush2.msra.mxu0 0.0
        %766 = vmatprep.subr.mxu0 0.0
        %767 = vmatpush2.msra.mxu0 0.0
        %768 = vmatprep.subr.mxu0 0.0
        %769 = vmatpush2.msra.mxu0 0.0
        %770 = vmatprep.mubr.f32.mxu0 0.0
        %771 = vmatmul.mubr.f32.gmra.mxu0 %v590
        %v772 = vpop.f32.mrf.mxu0
        %v773 = vadd.f32 0.0, %v772
        %v774 = vpop.f32.mrf.mxu0
        %775 = vmatprep.mubr.f32.mxu0 0.0
        %776 = vmatmul.mubr.f32.gmra.mxu0 %v593
        %v777 = vpop.f32.mrf.mxu0
        %v778 = vadd.f32 0.0, %v777
        %v779 = vpop.f32.mrf.mxu0
        %780 = vmatprep.mubr.f32.mxu0 0.0
        %781 = vmatmul.mubr.f32.gmra.mxu0 %v596
        %v782 = vpop.f32.mrf.mxu0
        %v783 = vadd.f32 0.0, %v782
        %v784 = vpop.f32.mrf.mxu0
        %785 = vmatprep.mubr.f32.mxu0 0.0
        %786 = vmatmul.mubr.f32.gmra.mxu0 %v599
        %v787 = vpop.f32.mrf.mxu0
        %v788 = vadd.f32 0.0, %v787
        %v789 = vpop.f32.mrf.mxu0
        %790 = vmatprep.mubr.f32.mxu0 0.0
        %791 = vmatmul.mubr.f32.gmra.mxu0 %v602
        %v792 = vpop.f32.mrf.mxu0
        %v793 = vadd.f32 0.0, %v792
        %v794 = vpop.f32.mrf.mxu0
        %795 = vmatprep.mubr.f32.mxu0 0.0
        %796 = vmatmul.mubr.f32.gmra.mxu0 %v605
        %v797 = vpop.f32.mrf.mxu0
        %v798 = vadd.f32 0.0, %v797
        %v799 = vpop.f32.mrf.mxu0
        %800 = vmatprep.mubr.f32.mxu0 0.0
        %801 = vmatmul.mubr.f32.gmra.mxu0 %v608
        %v802 = vpop.f32.mrf.mxu0
        %v803 = vadd.f32 0.0, %v802
        %v804 = vpop.f32.mrf.mxu0
        %805 = vmatprep.mubr.f32.mxu0 0.0
        %806 = vmatmul.mubr.f32.gmra.mxu0 %v611
        %v807 = vpop.f32.mrf.mxu0
        %v808 = vadd.f32 0.0, %v807
        %v809 = vpop.f32.mrf.mxu0
        %810 = vmatprep.mubr.f32.mxu0 0.0
        %811 = vmatmul.mubr.f32.gmra.mxu0 %v614
        %v812 = vpop.f32.mrf.mxu0
        %v813 = vadd.f32 0.0, %v812
        %v814 = vpop.f32.mrf.mxu0
        %815 = vmatprep.mubr.f32.mxu0 0.0
        %816 = vmatmul.mubr.f32.gmra.mxu0 %v617
        %v817 = vpop.f32.mrf.mxu0
        %v818 = vadd.f32 0.0, %v817
        %v819 = vpop.f32.mrf.mxu0
        %820 = vmatprep.mubr.f32.mxu0 0.0
        %821 = vmatmul.mubr.f32.gmra.mxu0 %v620
        %v822 = vpop.f32.mrf.mxu0
        %v823 = vadd.f32 0.0, %v822
        %v824 = vpop.f32.mrf.mxu0
        %825 = vmatprep.mubr.f32.mxu0 0.0
        %826 = vmatmul.mubr.f32.gmra.mxu0 %v623
        %v827 = vpop.f32.mrf.mxu0
        %v828 = vadd.f32 0.0, %v827
        %v829 = vpop.f32.mrf.mxu0
        %830 = vmatprep.mubr.f32.mxu0 0.0
        %831 = vmatmul.mubr.f32.gmra.mxu0 %v626
        %v832 = vpop.f32.mrf.mxu0
        %v833 = vadd.f32 0.0, %v832
        %v834 = vpop.f32.mrf.mxu0
        %835 = vmatprep.mubr.f32.mxu0 0.0
        %836 = vmatmul.mubr.f32.gmra.mxu0 %v629
        %v837 = vpop.f32.mrf.mxu0
        %v838 = vadd.f32 0.0, %v837
        %v839 = vpop.f32.mrf.mxu0
        %840 = vmatprep.mubr.f32.mxu0 0.0
        %841 = vmatmul.mubr.f32.gmra.mxu0 %v632
        %v842 = vpop.f32.mrf.mxu0
        %v843 = vadd.f32 0.0, %v842
        %v844 = vpop.f32.mrf.mxu0
        %845 = vmatprep.mubr.f32.mxu0 0.0
        %846 = vmatmul.mubr.f32.gmra.mxu0 %v635
        %v847 = vpop.f32.mrf.mxu0
        %v848 = vadd.f32 0.0, %v847
        %v849 = vpop.f32.mrf.mxu0
        %850 = vmatprep.mubr.f32.mxu0 0.0
        %851 = vmatmul.mubr.f32.gmra.mxu0 %v638
        %v852 = vpop.f32.mrf.mxu0
        %v853 = vadd.f32 0.0, %v852
        %v854 = vpop.f32.mrf.mxu0
        %855 = vmatprep.mubr.f32.mxu0 0.0
        %856 = vmatmul.mubr.f32.gmra.mxu0 %v641
        %v857 = vpop.f32.mrf.mxu0
        %v858 = vadd.f32 0.0, %v857
        %v859 = vpop.f32.mrf.mxu0
        %860 = vmatprep.mubr.f32.mxu0 0.0
        %861 = vmatmul.mubr.f32.gmra.mxu0 %v644
        %v862 = vpop.f32.mrf.mxu0
        %v863 = vadd.f32 0.0, %v862
        %v864 = vpop.f32.mrf.mxu0
        %865 = vmatprep.mubr.f32.mxu0 0.0
        %866 = vmatmul.mubr.f32.gmra.mxu0 %v647
        %v867 = vpop.f32.mrf.mxu0
        %v868 = vadd.f32 0.0, %v867
        %v869 = vpop.f32.mrf.mxu0
        %870 = vmatprep.mubr.f32.mxu0 0.0
        %871 = vmatmul.mubr.f32.gmra.mxu0 %v650
        %v872 = vpop.f32.mrf.mxu0
        %v873 = vadd.f32 0.0, %v872
        %v874 = vpop.f32.mrf.mxu0
        %875 = vmatprep.mubr.f32.mxu0 0.0
        %876 = vmatmul.mubr.f32.gmra.mxu0 %v653
        %v877 = vpop.f32.mrf.mxu0
        %v878 = vadd.f32 0.0, %v877
        %v879 = vpop.f32.mrf.mxu0
        %880 = vmatprep.mubr.f32.mxu0 0.0
        %881 = vmatmul.mubr.f32.gmra.mxu0 %v656
        %v882 = vpop.f32.mrf.mxu0
        %v883 = vadd.f32 0.0, %v882
        %v884 = vpop.f32.mrf.mxu0
        %885 = vmatprep.mubr.f32.mxu0 0.0
        %886 = vmatmul.mubr.f32.gmra.mxu0 %v659
        %v887 = vpop.f32.mrf.mxu0
        %v888 = vadd.f32 0.0, %v887
        %v889 = vpop.f32.mrf.mxu0
        %890 = vmatprep.mubr.f32.mxu0 0.0
        %891 = vmatmul.mubr.f32.gmra.mxu0 %v662
        %v892 = vpop.f32.mrf.mxu0
        %v893 = vadd.f32 0.0, %v892
        %v894 = vpop.f32.mrf.mxu0
        %895 = vmatprep.mubr.f32.mxu0 0.0
        %896 = vmatmul.mubr.f32.gmra.mxu0 %v665
        %v897 = vpop.f32.mrf.mxu0
        %v898 = vadd.f32 0.0, %v897
        %v899 = vpop.f32.mrf.mxu0
        %900 = vmatprep.mubr.f32.mxu0 0.0
        %901 = vmatmul.mubr.f32.gmra.mxu0 %v668
        %v902 = vpop.f32.mrf.mxu0
        %v903 = vadd.f32 0.0, %v902
        %v904 = vpop.f32.mrf.mxu0
        %905 = vmatprep.mubr.f32.mxu0 0.0
        %906 = vmatmul.mubr.f32.gmra.mxu0 %v671
        %v907 = vpop.f32.mrf.mxu0
        %v908 = vadd.f32 0.0, %v907
        %v909 = vpop.f32.mrf.mxu0
        %910 = vmatprep.mubr.f32.mxu0 0.0
        %911 = vmatmul.mubr.f32.gmra.mxu0 %v674
        %v912 = vpop.f32.mrf.mxu0
        %v913 = vadd.f32 0.0, %v912
        %v914 = vpop.f32.mrf.mxu0
        %915 = vmatprep.mubr.f32.mxu0 0.0
        %916 = vmatmul.mubr.f32.gmra.mxu0 %v677
        %v917 = vpop.f32.mrf.mxu0
        %v918 = vadd.f32 0.0, %v917
        %v919 = vpop.f32.mrf.mxu0
        %920 = vmatprep.mubr.f32.mxu0 0.0
        %921 = vmatmul.mubr.f32.gmra.mxu0 %v680
        %v922 = vpop.f32.mrf.mxu0
        %v923 = vadd.f32 0.0, %v922
        %v924 = vpop.f32.mrf.mxu0
        %925 = vmatprep.mubr.f32.mxu0 0.0
        %926 = vmatmul.mubr.f32.gmra.mxu0 %v683
        %v927 = vpop.f32.mrf.mxu0
        %v928 = vadd.f32 0.0, %v927
        %v929 = vpop.f32.mrf.mxu0
        %930 = vmatprep.mubr.f32.mxu0 0.0
        %931 = vmatmul.mubr.f32.gmra.mxu0 %v686
        %v932 = vpop.f32.mrf.mxu0
        %v933 = vadd.f32 0.0, %v932
        %v934 = vpop.f32.mrf.mxu0
        %935 = vmatprep.mubr.f32.mxu0 0.0
        %936 = vmatmul.mubr.f32.gmra.mxu0 %v689
        %v937 = vpop.f32.mrf.mxu0
        %v938 = vadd.f32 0.0, %v937
        %v939 = vpop.f32.mrf.mxu0
        %940 = vmatprep.mubr.f32.mxu0 0.0
        %941 = vmatmul.mubr.f32.gmra.mxu0 %v692
        %v942 = vpop.f32.mrf.mxu0
        %v943 = vadd.f32 0.0, %v942
        %v944 = vpop.f32.mrf.mxu0
        %945 = vmatprep.mubr.f32.mxu0 0.0
        %946 = vmatmul.mubr.f32.gmra.mxu0 %v695
        %v947 = vpop.f32.mrf.mxu0
        %v948 = vadd.f32 0.0, %v947
        %v949 = vpop.f32.mrf.mxu0
        %950 = vmatprep.mubr.f32.mxu0 0.0
        %951 = vmatmul.mubr.f32.gmra.mxu0 %v698
        %v952 = vpop.f32.mrf.mxu0
        %v953 = vadd.f32 0.0, %v952
        %v954 = vpop.f32.mrf.mxu0
        %955 = vmatprep.mubr.f32.mxu0 0.0
        %956 = vmatmul.mubr.f32.gmra.mxu0 %v701
        %v957 = vpop.f32.mrf.mxu0
        %v958 = vadd.f32 0.0, %v957
        %v959 = vpop.f32.mrf.mxu0
        %960 = vmatprep.mubr.f32.mxu0 0.0
        %961 = vmatmul.mubr.f32.gmra.mxu0 %v704
        %v962 = vpop.f32.mrf.mxu0
        %v963 = vadd.f32 0.0, %v962
        %v964 = vpop.f32.mrf.mxu0
        %965 = vdwg.mxu0
        %v966 = vstv %s546
        %v967 = vmul.f32 %v773, %v966
        %v968 = vmul.f32 %v778, %v966
        %v969 = vmul.f32 %v783, %v966
        %v970 = vmul.f32 %v788, %v966
        %v971 = vmul.f32 %v793, %v966
        %v972 = vmul.f32 %v798, %v966
        %v973 = vmul.f32 %v803, %v966
        %v974 = vmul.f32 %v808, %v966
        %v975 = vmul.f32 %v813, %v966
        %v976 = vmul.f32 %v818, %v966
        %v977 = vmul.f32 %v823, %v966
        %v978 = vmul.f32 %v828, %v966
        %v979 = vmul.f32 %v833, %v966
        %v980 = vmul.f32 %v838, %v966
        %v981 = vmul.f32 %v843, %v966
        %v982 = vmul.f32 %v848, %v966
        %v983 = vmul.f32 %v853, %v966
        %v984 = vmul.f32 %v858, %v966
        %v985 = vmul.f32 %v863, %v966
        %v986 = vmul.f32 %v868, %v966
        %v987 = vmul.f32 %v873, %v966
        %v988 = vmul.f32 %v878, %v966
        %v989 = vmul.f32 %v883, %v966
        %v990 = vmul.f32 %v888, %v966
        %v991 = vmul.f32 %v893, %v966
        %v992 = vmul.f32 %v898, %v966
        %v993 = vmul.f32 %v903, %v966
        %v994 = vmul.f32 %v908, %v966
        %v995 = vmul.f32 %v913, %v966
        %v996 = vmul.f32 %v918, %v966
        %v997 = vmul.f32 %v923, %v966
        %v998 = vmul.f32 %v928, %v966
        %v999 = vmul.f32 %v933, %v966
        %v1000 = vmul.f32 %v938, %v966
        %v1001 = vmul.f32 %v943, %v966
        %v1002 = vmul.f32 %v948, %v966
        %v1003 = vmul.f32 %v953, %v966
        %v1004 = vmul.f32 %v958, %v966
        %v1005 = vmul.f32 %v963, %v966
        %v1006 = vld [vmem:[%s7] sm:$0x1]
        %v1008 = vlaneseq
        %v1009 = vshrl.u32 %v1008, 7
        %v1010 = vsub.s32 0, %v1009
        %v1011 = vrot.slane %v1006, %v1010
        %v1013 = vadd.f32 %v967, %v1011
        %v1014 = vadd.f32 %v968, %v1011
        %v1015 = vadd.f32 %v969, %v1011
        %v1016 = vadd.f32 %v970, %v1011
        %v1017 = vadd.f32 %v971, %v1011
        %v1018 = vadd.f32 %v972, %v1011
        %v1019 = vadd.f32 %v973, %v1011
        %v1020 = vadd.f32 %v974, %v1011
        %v1021 = vadd.f32 %v975, %v1011
        %v1022 = vadd.f32 %v976, %v1011
        %v1023 = vadd.f32 %v977, %v1011
        %v1024 = vadd.f32 %v978, %v1011
        %v1025 = vadd.f32 %v979, %v1011
        %v1026 = vadd.f32 %v980, %v1011
        %v1027 = vadd.f32 %v981, %v1011
        %v1028 = vadd.f32 %v982, %v1011
        %v1029 = vadd.f32 %v983, %v1011
        %v1030 = vadd.f32 %v984, %v1011
        %v1031 = vadd.f32 %v985, %v1011
        %v1032 = vadd.f32 %v986, %v1011
        %v1033 = vadd.f32 %v987, %v1011
        %v1034 = vadd.f32 %v988, %v1011
        %v1035 = vadd.f32 %v989, %v1011
        %v1036 = vadd.f32 %v990, %v1011
        %v1037 = vadd.f32 %v991, %v1011
        %v1038 = vadd.f32 %v992, %v1011
        %v1039 = vadd.f32 %v993, %v1011
        %v1040 = vadd.f32 %v994, %v1011
        %v1041 = vadd.f32 %v995, %v1011
        %v1042 = vadd.f32 %v996, %v1011
        %v1043 = vadd.f32 %v997, %v1011
        %v1044 = vadd.f32 %v998, %v1011
        %v1045 = vadd.f32 %v999, %v1011
        %v1046 = vadd.f32 %v1000, %v1011
        %v1047 = vadd.f32 %v1001, %v1011
        %v1048 = vadd.f32 %v1002, %v1011
        %v1049 = vadd.f32 %v1003, %v1011
        %v1050 = vadd.f32 %v1004, %v1011
        %v1051 = vadd.f32 %v1005, %v1011
        %v1052 = vmax.f32 %v1013, 0.0
        %v1053 = vmax.f32 %v1014, 0.0
        %v1054 = vmax.f32 %v1015, 0.0
        %v1055 = vmax.f32 %v1016, 0.0
        %v1056 = vmax.f32 %v1017, 0.0
        %v1057 = vmax.f32 %v1018, 0.0
        %v1058 = vmax.f32 %v1019, 0.0
        %v1059 = vmax.f32 %v1020, 0.0
        %v1060 = vmax.f32 %v1021, 0.0
        %v1061 = vmax.f32 %v1022, 0.0
        %v1062 = vmax.f32 %v1023, 0.0
        %v1063 = vmax.f32 %v1024, 0.0
        %v1064 = vmax.f32 %v1025, 0.0
        %v1065 = vmax.f32 %v1026, 0.0
        %v1066 = vmax.f32 %v1027, 0.0
        %v1067 = vmax.f32 %v1028, 0.0
        %v1068 = vmax.f32 %v1029, 0.0
        %v1069 = vmax.f32 %v1030, 0.0
        %v1070 = vmax.f32 %v1031, 0.0
        %v1071 = vmax.f32 %v1032, 0.0
        %v1072 = vmax.f32 %v1033, 0.0
        %v1073 = vmax.f32 %v1034, 0.0
        %v1074 = vmax.f32 %v1035, 0.0
        %v1075 = vmax.f32 %v1036, 0.0
        %v1076 = vmax.f32 %v1037, 0.0
        %v1077 = vmax.f32 %v1038, 0.0
        %v1078 = vmax.f32 %v1039, 0.0
        %v1079 = vmax.f32 %v1040, 0.0
        %v1080 = vmax.f32 %v1041, 0.0
        %v1081 = vmax.f32 %v1042, 0.0
        %v1082 = vmax.f32 %v1043, 0.0
        %v1083 = vmax.f32 %v1044, 0.0
        %v1084 = vmax.f32 %v1045, 0.0
        %v1085 = vmax.f32 %v1046, 0.0
        %v1086 = vmax.f32 %v1047, 0.0
        %v1087 = vmax.f32 %v1048, 0.0
        %v1088 = vmax.f32 %v1049, 0.0
        %v1089 = vmax.f32 %v1050, 0.0
        %v1090 = vmax.f32 %v1051, 0.0
        %v1091 = vld [vmem:[%s2] sm:$0xff]
        %v1092 = vld [vmem:[%s2 + $0x8] sm:$0xff]
        %v1093 = vld [vmem:[%s2 + $0x10] sm:$0xff]
        %v1094 = vld [vmem:[%s2 + $0x18] sm:$0xff]
        %v1095 = vld [vmem:[%s2 + $0x20] sm:$0xff]
        %v1096 = vld [vmem:[%s2 + $0x28] sm:$0xff]
        %v1097 = vld [vmem:[%s2 + $0x30] sm:$0xff]
        %v1098 = vld [vmem:[%s2 + $0x38] sm:$0xff]
        %v1099 = vld [vmem:[%s2 + $0x40] sm:$0xff]
        %v1100 = vld [vmem:[%s2 + $0x48] sm:$0xff]
        %v1101 = vld [vmem:[%s2 + $0x50] sm:$0xff]
        %v1102 = vld [vmem:[%s2 + $0x58] sm:$0xff]
        %v1103 = vld [vmem:[%s2 + $0x60] sm:$0xff]
        %v1104 = vld [vmem:[%s2 + $0x68] sm:$0xff]
        %v1105 = vld [vmem:[%s2 + $0x70] sm:$0xff]
        %v1106 = vld [vmem:[%s2 + $0x78] sm:$0xff]
        %v1107 = vld [vmem:[%s2 + $0x80] sm:$0xff]
        %v1108 = vld [vmem:[%s2 + $0x88] sm:$0xff]
        %v1109 = vld [vmem:[%s2 + $0x90] sm:$0xff]
        %v1110 = vld [vmem:[%s2 + $0x98] sm:$0xff]
        %v1111 = vld [vmem:[%s2 + $0xa0] sm:$0xff]
        %v1112 = vld [vmem:[%s2 + $0xa8] sm:$0xff]
        %v1113 = vld [vmem:[%s2 + $0xb0] sm:$0xff]
        %v1114 = vld [vmem:[%s2 + $0xb8] sm:$0xff]
        %v1115 = vld [vmem:[%s2 + $0xc0] sm:$0xff]
        %v1116 = vld [vmem:[%s2 + $0xc8] sm:$0xff]
        %v1117 = vld [vmem:[%s2 + $0xd0] sm:$0xff]
        %v1118 = vld [vmem:[%s2 + $0xd8] sm:$0xff]
        %v1119 = vld [vmem:[%s2 + $0xe0] sm:$0xff]
        %v1120 = vld [vmem:[%s2 + $0xe8] sm:$0xff]
        %v1121 = vld [vmem:[%s2 + $0xf0] sm:$0xff]
        %v1122 = vld [vmem:[%s2 + $0xf8] sm:$0xff]
        %v1123 = vld [vmem:[%s2 + $0x100] sm:$0xff]
        %v1124 = vld [vmem:[%s2 + $0x108] sm:$0xff]
        %v1125 = vld [vmem:[%s2 + $0x110] sm:$0xff]
        %v1126 = vld [vmem:[%s2 + $0x118] sm:$0xff]
        %v1127 = vld [vmem:[%s2 + $0x120] sm:$0xff]
        %v1128 = vld [vmem:[%s2 + $0x128] sm:$0xff]
        %v1129 = vld [vmem:[%s2 + $0x130] sm:$0xff]
        %v1130 = vmul.f32 %v1052, %v1091
        %v1131 = vmul.f32 %v1053, %v1092
        %v1132 = vmul.f32 %v1054, %v1093
        %v1133 = vmul.f32 %v1055, %v1094
        %v1134 = vmul.f32 %v1056, %v1095
        %v1135 = vmul.f32 %v1057, %v1096
        %v1136 = vmul.f32 %v1058, %v1097
        %v1137 = vmul.f32 %v1059, %v1098
        %v1138 = vmul.f32 %v1060, %v1099
        %v1139 = vmul.f32 %v1061, %v1100
        %v1140 = vmul.f32 %v1062, %v1101
        %v1141 = vmul.f32 %v1063, %v1102
        %v1142 = vmul.f32 %v1064, %v1103
        %v1143 = vmul.f32 %v1065, %v1104
        %v1144 = vmul.f32 %v1066, %v1105
        %v1145 = vmul.f32 %v1067, %v1106
        %v1146 = vmul.f32 %v1068, %v1107
        %v1147 = vmul.f32 %v1069, %v1108
        %v1148 = vmul.f32 %v1070, %v1109
        %v1149 = vmul.f32 %v1071, %v1110
        %v1150 = vmul.f32 %v1072, %v1111
        %v1151 = vmul.f32 %v1073, %v1112
        %v1152 = vmul.f32 %v1074, %v1113
        %v1153 = vmul.f32 %v1075, %v1114
        %v1154 = vmul.f32 %v1076, %v1115
        %v1155 = vmul.f32 %v1077, %v1116
        %v1156 = vmul.f32 %v1078, %v1117
        %v1157 = vmul.f32 %v1079, %v1118
        %v1158 = vmul.f32 %v1080, %v1119
        %v1159 = vmul.f32 %v1081, %v1120
        %v1160 = vmul.f32 %v1082, %v1121
        %v1161 = vmul.f32 %v1083, %v1122
        %v1162 = vmul.f32 %v1084, %v1123
        %v1163 = vmul.f32 %v1085, %v1124
        %v1164 = vmul.f32 %v1086, %v1125
        %v1165 = vmul.f32 %v1087, %v1126
        %v1166 = vmul.f32 %v1088, %v1127
        %v1167 = vmul.f32 %v1089, %v1128
        %v1168 = vmul.f32 %v1090, %v1129
        %1169 = vst.msk [vmem:[#allocation2] sm:$0xff] %vm588, %v1130
        %1170 = vst.msk [vmem:[#allocation2 + $0x8] sm:$0xff] %vm588, %v1131
        %1171 = vst.msk [vmem:[#allocation2 + $0x10] sm:$0xff] %vm588, %v1132
        %1172 = vst.msk [vmem:[#allocation2 + $0x18] sm:$0xff] %vm588, %v1133
        %1173 = vst.msk [vmem:[#allocation2 + $0x20] sm:$0xff] %vm588, %v1134
        %1174 = vst.msk [vmem:[#allocation2 + $0x28] sm:$0xff] %vm588, %v1135
        %1175 = vst.msk [vmem:[#allocation2 + $0x30] sm:$0xff] %vm588, %v1136
        %1176 = vst.msk [vmem:[#allocation2 + $0x38] sm:$0xff] %vm588, %v1137
        %1177 = vst.msk [vmem:[#allocation2 + $0x40] sm:$0xff] %vm588, %v1138
        %1178 = vst.msk [vmem:[#allocation2 + $0x48] sm:$0xff] %vm588, %v1139
        %1179 = vst.msk [vmem:[#allocation2 + $0x50] sm:$0xff] %vm588, %v1140
        %1180 = vst.msk [vmem:[#allocation2 + $0x58] sm:$0xff] %vm588, %v1141
        %1181 = vst.msk [vmem:[#allocation2 + $0x60] sm:$0xff] %vm588, %v1142
        %1182 = vst.msk [vmem:[#allocation2 + $0x68] sm:$0xff] %vm588, %v1143
        %1183 = vst.msk [vmem:[#allocation2 + $0x70] sm:$0xff] %vm588, %v1144
        %1184 = vst.msk [vmem:[#allocation2 + $0x78] sm:$0xff] %vm588, %v1145
        %1185 = vst.msk [vmem:[#allocation2 + $0x80] sm:$0xff] %vm588, %v1146
        %1186 = vst.msk [vmem:[#allocation2 + $0x88] sm:$0xff] %vm588, %v1147
        %1187 = vst.msk [vmem:[#allocation2 + $0x90] sm:$0xff] %vm588, %v1148
        %1188 = vst.msk [vmem:[#allocation2 + $0x98] sm:$0xff] %vm588, %v1149
        %1189 = vst.msk [vmem:[#allocation2 + $0xa0] sm:$0xff] %vm588, %v1150
        %1190 = vst.msk [vmem:[#allocation2 + $0xa8] sm:$0xff] %vm588, %v1151
        %1191 = vst.msk [vmem:[#allocation2 + $0xb0] sm:$0xff] %vm588, %v1152
        %1192 = vst.msk [vmem:[#allocation2 + $0xb8] sm:$0xff] %vm588, %v1153
        %1193 = vst.msk [vmem:[#allocation2 + $0xc0] sm:$0xff] %vm588, %v1154
        %1194 = vst.msk [vmem:[#allocation2 + $0xc8] sm:$0xff] %vm588, %v1155
        %1195 = vst.msk [vmem:[#allocation2 + $0xd0] sm:$0xff] %vm588, %v1156
        %1196 = vst.msk [vmem:[#allocation2 + $0xd8] sm:$0xff] %vm588, %v1157
        %1197 = vst.msk [vmem:[#allocation2 + $0xe0] sm:$0xff] %vm588, %v1158
        %1198 = vst.msk [vmem:[#allocation2 + $0xe8] sm:$0xff] %vm588, %v1159
        %1199 = vst.msk [vmem:[#allocation2 + $0xf0] sm:$0xff] %vm588, %v1160
        %1200 = vst.msk [vmem:[#allocation2 + $0xf8] sm:$0xff] %vm588, %v1161
        %1201 = vst.msk [vmem:[#allocation2 + $0x100] sm:$0xff] %vm588, %v1162
        %1202 = vst.msk [vmem:[#allocation2 + $0x108] sm:$0xff] %vm588, %v1163
        %1203 = vst.msk [vmem:[#allocation2 + $0x110] sm:$0xff] %vm588, %v1164
        %1204 = vst.msk [vmem:[#allocation2 + $0x118] sm:$0xff] %vm588, %v1165
        %1205 = vst.msk [vmem:[#allocation2 + $0x120] sm:$0xff] %vm588, %v1166
        %1206 = vst.msk [vmem:[#allocation2 + $0x128] sm:$0xff] %vm588, %v1167
        %1207 = vst.msk [vmem:[#allocation2 + $0x130] sm:$0xff] %vm588, %v1168
        %v1208 = vld [vmem:[#allocation2] sm:$0xff]
        %v1209 = vld [vmem:[#allocation2 + $0x8] sm:$0xff]
        %v1210 = vld [vmem:[#allocation2 + $0x10] sm:$0xff]
        %v1211 = vld [vmem:[#allocation2 + $0x18] sm:$0xff]
        %v1212 = vld [vmem:[#allocation2 + $0x20] sm:$0xff]
        %v1213 = vld [vmem:[#allocation2 + $0x28] sm:$0xff]
        %v1214 = vld [vmem:[#allocation2 + $0x30] sm:$0xff]
        %v1215 = vld [vmem:[#allocation2 + $0x38] sm:$0xff]
        %v1216 = vld [vmem:[#allocation2 + $0x40] sm:$0xff]
        %v1217 = vld [vmem:[#allocation2 + $0x48] sm:$0xff]
        %v1218 = vld [vmem:[#allocation2 + $0x50] sm:$0xff]
        %v1219 = vld [vmem:[#allocation2 + $0x58] sm:$0xff]
        %v1220 = vld [vmem:[#allocation2 + $0x60] sm:$0xff]
        %v1221 = vld [vmem:[#allocation2 + $0x68] sm:$0xff]
        %v1222 = vld [vmem:[#allocation2 + $0x70] sm:$0xff]
        %v1223 = vld [vmem:[#allocation2 + $0x78] sm:$0xff]
        %v1224 = vld [vmem:[#allocation2 + $0x80] sm:$0xff]
        %v1225 = vld [vmem:[#allocation2 + $0x88] sm:$0xff]
        %v1226 = vld [vmem:[#allocation2 + $0x90] sm:$0xff]
        %v1227 = vld [vmem:[#allocation2 + $0x98] sm:$0xff]
        %v1228 = vld [vmem:[#allocation2 + $0xa0] sm:$0xff]
        %v1229 = vld [vmem:[#allocation2 + $0xa8] sm:$0xff]
        %v1230 = vld [vmem:[#allocation2 + $0xb0] sm:$0xff]
        %v1231 = vld [vmem:[#allocation2 + $0xb8] sm:$0xff]
        %v1232 = vld [vmem:[#allocation2 + $0xc0] sm:$0xff]
        %v1233 = vld [vmem:[#allocation2 + $0xc8] sm:$0xff]
        %v1234 = vld [vmem:[#allocation2 + $0xd0] sm:$0xff]
        %v1235 = vld [vmem:[#allocation2 + $0xd8] sm:$0xff]
        %v1236 = vld [vmem:[#allocation2 + $0xe0] sm:$0xff]
        %v1237 = vld [vmem:[#allocation2 + $0xe8] sm:$0xff]
        %v1238 = vld [vmem:[#allocation2 + $0xf0] sm:$0xff]
        %v1239 = vld [vmem:[#allocation2 + $0xf8] sm:$0xff]
        %v1240 = vld [vmem:[#allocation2 + $0x100] sm:$0xff]
        %v1241 = vld [vmem:[#allocation2 + $0x108] sm:$0xff]
        %v1242 = vld [vmem:[#allocation2 + $0x110] sm:$0xff]
        %v1243 = vld [vmem:[#allocation2 + $0x118] sm:$0xff]
        %v1244 = vld [vmem:[#allocation2 + $0x120] sm:$0x1]
        %v1245 = vld [vmem:[%s8] sm:$0xff]
        %v1246 = vld [vmem:[%s8 + $0x8] sm:$0xff]
        %v1247 = vld [vmem:[#allocation2 + $0x1] sm:$0xff]
        %v1248 = vld [vmem:[#allocation2 + $0x9] sm:$0xff]
        %v1249 = vld [vmem:[#allocation2 + $0x11] sm:$0xff]
        %v1250 = vld [vmem:[#allocation2 + $0x19] sm:$0xff]
        %v1251 = vld [vmem:[#allocation2 + $0x21] sm:$0xff]
        %v1252 = vld [vmem:[#allocation2 + $0x29] sm:$0xff]
        %v1253 = vld [vmem:[#allocation2 + $0x31] sm:$0xff]
        %v1254 = vld [vmem:[#allocation2 + $0x39] sm:$0xff]
        %v1255 = vld [vmem:[#allocation2 + $0x41] sm:$0xff]
        %v1256 = vld [vmem:[#allocation2 + $0x49] sm:$0xff]
        %v1257 = vld [vmem:[#allocation2 + $0x51] sm:$0xff]
        %v1258 = vld [vmem:[#allocation2 + $0x59] sm:$0xff]
        %v1259 = vld [vmem:[#allocation2 + $0x61] sm:$0xff]
        %v1260 = vld [vmem:[#allocation2 + $0x69] sm:$0xff]
        %v1261 = vld [vmem:[#allocation2 + $0x71] sm:$0xff]
        %v1262 = vld [vmem:[#allocation2 + $0x79] sm:$0xff]
        %v1263 = vld [vmem:[#allocation2 + $0x81] sm:$0xff]
        %v1264 = vld [vmem:[#allocation2 + $0x89] sm:$0xff]
        %v1265 = vld [vmem:[#allocation2 + $0x91] sm:$0xff]
        %v1266 = vld [vmem:[#allocation2 + $0x99] sm:$0xff]
        %v1267 = vld [vmem:[#allocation2 + $0xa1] sm:$0xff]
        %v1268 = vld [vmem:[#allocation2 + $0xa9] sm:$0xff]
        %v1269 = vld [vmem:[#allocation2 + $0xb1] sm:$0xff]
        %v1270 = vld [vmem:[#allocation2 + $0xb9] sm:$0xff]
        %v1271 = vld [vmem:[#allocation2 + $0xc1] sm:$0xff]
        %v1272 = vld [vmem:[#allocation2 + $0xc9] sm:$0xff]
        %v1273 = vld [vmem:[#allocation2 + $0xd1] sm:$0xff]
        %v1274 = vld [vmem:[#allocation2 + $0xd9] sm:$0xff]
        %v1275 = vld [vmem:[#allocation2 + $0xe1] sm:$0xff]
        %v1276 = vld [vmem:[#allocation2 + $0xe9] sm:$0xff]
        %v1277 = vld [vmem:[#allocation2 + $0xf1] sm:$0xff]
        %v1278 = vld [vmem:[#allocation2 + $0xf9] sm:$0xff]
        %v1279 = vld [vmem:[#allocation2 + $0x101] sm:$0xff]
        %v1280 = vld [vmem:[#allocation2 + $0x109] sm:$0xff]
        %v1281 = vld [vmem:[#allocation2 + $0x111] sm:$0xff]
        %v1282 = vld [vmem:[#allocation2 + $0x119] sm:$0xff]
        %v1283 = vld [vmem:[#allocation2 + $0x121] sm:$0x1]
        %s1284 = scalar_lea.vmem %s8, 16
        %v1285 = vld [vmem:[%s1284] sm:$0xff]
        %v1286 = vld [vmem:[%s1284 + $0x8] sm:$0xff]
        %v1288 = vsel %vm588, %v1247, 0
        %v1291 = vsel %vm588, %v1248, 0
        %v1294 = vsel %vm588, %v1249, 0
        %v1297 = vsel %vm588, %v1250, 0
        %v1300 = vsel %vm588, %v1251, 0
        %v1303 = vsel %vm588, %v1252, 0
        %v1306 = vsel %vm588, %v1253, 0
        %v1309 = vsel %vm588, %v1254, 0
        %v1312 = vsel %vm588, %v1255, 0
        %v1315 = vsel %vm588, %v1256, 0
        %v1318 = vsel %vm588, %v1257, 0
        %v1321 = vsel %vm588, %v1258, 0
        %v1324 = vsel %vm588, %v1259, 0
        %v1327 = vsel %vm588, %v1260, 0
        %v1330 = vsel %vm588, %v1261, 0
        %v1333 = vsel %vm588, %v1262, 0
        %v1336 = vsel %vm588, %v1263, 0
        %v1339 = vsel %vm588, %v1264, 0
        %v1342 = vsel %vm588, %v1265, 0
        %v1345 = vsel %vm588, %v1266, 0
        %v1348 = vsel %vm588, %v1267, 0
        %v1351 = vsel %vm588, %v1268, 0
        %v1354 = vsel %vm588, %v1269, 0
        %v1357 = vsel %vm588, %v1270, 0
        %v1360 = vsel %vm588, %v1271, 0
        %v1363 = vsel %vm588, %v1272, 0
        %v1366 = vsel %vm588, %v1273, 0
        %v1369 = vsel %vm588, %v1274, 0
        %v1372 = vsel %vm588, %v1275, 0
        %v1375 = vsel %vm588, %v1276, 0
        %v1378 = vsel %vm588, %v1277, 0
        %v1381 = vsel %vm588, %v1278, 0
        %v1384 = vsel %vm588, %v1279, 0
        %v1387 = vsel %vm588, %v1280, 0
        %v1390 = vsel %vm588, %v1281, 0
        %v1393 = vsel %vm588, %v1282, 0
        %v1396 = vsel %vm588, %v1283, 0
        %1398 = vmatprep.subr.mxu0 0.0
        %1399 = vmatpush1.msra.mxu0 0.0
        %1400 = vmatprep.subr.mxu0 0.0
        %1401 = vmatpush1.msra.mxu0 0.0
        %1402 = vmatprep.subr.mxu0 0.0
        %1403 = vmatpush1.msra.mxu0 0.0
        %1404 = vmatprep.subr.mxu0 0.0
        %1405 = vmatpush1.msra.mxu0 0.0
        %1406 = vmatprep.subr.mxu0 0.0
        %1407 = vmatpush1.msra.mxu0 0.0
        %1408 = vmatprep.subr.mxu0 0.0
        %1409 = vmatpush1.msra.mxu0 0.0
        %1410 = vmatprep.subr.mxu0 0.0
        %1411 = vmatpush1.msra.mxu0 0.0
        %1412 = vmatprep.subr.mxu0 0.0
        %1413 = vmatpush1.msra.mxu0 0.0
        %1414 = vmatprep.subr.mxu0 0.0
        %1415 = vmatpush1.msra.mxu0 0.0
        %1416 = vmatprep.subr.mxu0 0.0
        %1417 = vmatpush1.msra.mxu0 0.0
        %1418 = vmatprep.subr.mxu0 0.0
        %1419 = vmatpush1.msra.mxu0 0.0
        %1420 = vmatprep.subr.mxu0 0.0
        %1421 = vmatpush1.msra.mxu0 0.0
        %1422 = vmatprep.subr.mxu0 0.0
        %1423 = vmatpush1.msra.mxu0 0.0
        %1424 = vmatprep.subr.mxu0 0.0
        %1425 = vmatpush1.msra.mxu0 0.0
        %1426 = vmatprep.subr.mxu0 0.0
        %1427 = vmatpush1.msra.mxu0 %v1286
        %1428 = vmatprep.subr.mxu0 0.0
        %1429 = vmatpush1.msra.mxu0 %v1285
        %1430 = vmatprep.subr.mxu0 0.0
        %1431 = vmatpush2.msra.mxu0 0.0
        %1432 = vmatprep.subr.mxu0 0.0
        %1433 = vmatpush2.msra.mxu0 0.0
        %1434 = vmatprep.subr.mxu0 0.0
        %1435 = vmatpush2.msra.mxu0 0.0
        %1436 = vmatprep.subr.mxu0 0.0
        %1437 = vmatpush2.msra.mxu0 0.0
        %1438 = vmatprep.subr.mxu0 0.0
        %1439 = vmatpush2.msra.mxu0 0.0
        %1440 = vmatprep.subr.mxu0 0.0
        %1441 = vmatpush2.msra.mxu0 0.0
        %1442 = vmatprep.subr.mxu0 0.0
        %1443 = vmatpush2.msra.mxu0 0.0
        %1444 = vmatprep.subr.mxu0 0.0
        %1445 = vmatpush2.msra.mxu0 0.0
        %1446 = vmatprep.subr.mxu0 0.0
        %1447 = vmatpush2.msra.mxu0 0.0
        %1448 = vmatprep.subr.mxu0 0.0
        %1449 = vmatpush2.msra.mxu0 0.0
        %1450 = vmatprep.subr.mxu0 0.0
        %1451 = vmatpush2.msra.mxu0 0.0
        %1452 = vmatprep.subr.mxu0 0.0
        %1453 = vmatpush2.msra.mxu0 0.0
        %1454 = vmatprep.subr.mxu0 0.0
        %1455 = vmatpush2.msra.mxu0 0.0
        %1456 = vmatprep.subr.mxu0 0.0
        %1457 = vmatpush2.msra.mxu0 0.0
        %1458 = vmatprep.subr.mxu0 0.0
        %1459 = vmatpush2.msra.mxu0 0.0
        %1460 = vmatprep.subr.mxu0 0.0
        %1461 = vmatpush2.msra.mxu0 0.0
        %1462 = vmatprep.mubr.f32.mxu0 0.0
        %1463 = vmatmul.mubr.f32.gmra.mxu0 %v1288
        %v1464 = vpop.f32.mrf.mxu0
        %v1465 = vadd.f32 0.0, %v1464
        %v1466 = vpop.f32.mrf.mxu0
        %1467 = vmatprep.mubr.f32.mxu0 0.0
        %1468 = vmatmul.mubr.f32.gmra.mxu0 %v1291
        %v1469 = vpop.f32.mrf.mxu0
        %v1470 = vadd.f32 0.0, %v1469
        %v1471 = vpop.f32.mrf.mxu0
        %1472 = vmatprep.mubr.f32.mxu0 0.0
        %1473 = vmatmul.mubr.f32.gmra.mxu0 %v1294
        %v1474 = vpop.f32.mrf.mxu0
        %v1475 = vadd.f32 0.0, %v1474
        %v1476 = vpop.f32.mrf.mxu0
        %1477 = vmatprep.mubr.f32.mxu0 0.0
        %1478 = vmatmul.mubr.f32.gmra.mxu0 %v1297
        %v1479 = vpop.f32.mrf.mxu0
        %v1480 = vadd.f32 0.0, %v1479
        %v1481 = vpop.f32.mrf.mxu0
        %1482 = vmatprep.mubr.f32.mxu0 0.0
        %1483 = vmatmul.mubr.f32.gmra.mxu0 %v1300
        %v1484 = vpop.f32.mrf.mxu0
        %v1485 = vadd.f32 0.0, %v1484
        %v1486 = vpop.f32.mrf.mxu0
        %1487 = vmatprep.mubr.f32.mxu0 0.0
        %1488 = vmatmul.mubr.f32.gmra.mxu0 %v1303
        %v1489 = vpop.f32.mrf.mxu0
        %v1490 = vadd.f32 0.0, %v1489
        %v1491 = vpop.f32.mrf.mxu0
        %1492 = vmatprep.mubr.f32.mxu0 0.0
        %1493 = vmatmul.mubr.f32.gmra.mxu0 %v1306
        %v1494 = vpop.f32.mrf.mxu0
        %v1495 = vadd.f32 0.0, %v1494
        %v1496 = vpop.f32.mrf.mxu0
        %1497 = vmatprep.mubr.f32.mxu0 0.0
        %1498 = vmatmul.mubr.f32.gmra.mxu0 %v1309
        %v1499 = vpop.f32.mrf.mxu0
        %v1500 = vadd.f32 0.0, %v1499
        %v1501 = vpop.f32.mrf.mxu0
        %1502 = vmatprep.mubr.f32.mxu0 0.0
        %1503 = vmatmul.mubr.f32.gmra.mxu0 %v1312
        %v1504 = vpop.f32.mrf.mxu0
        %v1505 = vadd.f32 0.0, %v1504
        %v1506 = vpop.f32.mrf.mxu0
        %1507 = vmatprep.mubr.f32.mxu0 0.0
        %1508 = vmatmul.mubr.f32.gmra.mxu0 %v1315
        %v1509 = vpop.f32.mrf.mxu0
        %v1510 = vadd.f32 0.0, %v1509
        %v1511 = vpop.f32.mrf.mxu0
        %1512 = vmatprep.mubr.f32.mxu0 0.0
        %1513 = vmatmul.mubr.f32.gmra.mxu0 %v1318
        %v1514 = vpop.f32.mrf.mxu0
        %v1515 = vadd.f32 0.0, %v1514
        %v1516 = vpop.f32.mrf.mxu0
        %1517 = vmatprep.mubr.f32.mxu0 0.0
        %1518 = vmatmul.mubr.f32.gmra.mxu0 %v1321
        %v1519 = vpop.f32.mrf.mxu0
        %v1520 = vadd.f32 0.0, %v1519
        %v1521 = vpop.f32.mrf.mxu0
        %1522 = vmatprep.mubr.f32.mxu0 0.0
        %1523 = vmatmul.mubr.f32.gmra.mxu0 %v1324
        %v1524 = vpop.f32.mrf.mxu0
        %v1525 = vadd.f32 0.0, %v1524
        %v1526 = vpop.f32.mrf.mxu0
        %1527 = vmatprep.mubr.f32.mxu0 0.0
        %1528 = vmatmul.mubr.f32.gmra.mxu0 %v1327
        %v1529 = vpop.f32.mrf.mxu0
        %v1530 = vadd.f32 0.0, %v1529
        %v1531 = vpop.f32.mrf.mxu0
        %1532 = vmatprep.mubr.f32.mxu0 0.0
        %1533 = vmatmul.mubr.f32.gmra.mxu0 %v1330
        %v1534 = vpop.f32.mrf.mxu0
        %v1535 = vadd.f32 0.0, %v1534
        %v1536 = vpop.f32.mrf.mxu0
        %1537 = vmatprep.mubr.f32.mxu0 0.0
        %1538 = vmatmul.mubr.f32.gmra.mxu0 %v1333
        %v1539 = vpop.f32.mrf.mxu0
        %v1540 = vadd.f32 0.0, %v1539
        %v1541 = vpop.f32.mrf.mxu0
        %1542 = vmatprep.mubr.f32.mxu0 0.0
        %1543 = vmatmul.mubr.f32.gmra.mxu0 %v1336
        %v1544 = vpop.f32.mrf.mxu0
        %v1545 = vadd.f32 0.0, %v1544
        %v1546 = vpop.f32.mrf.mxu0
        %1547 = vmatprep.mubr.f32.mxu0 0.0
        %1548 = vmatmul.mubr.f32.gmra.mxu0 %v1339
        %v1549 = vpop.f32.mrf.mxu0
        %v1550 = vadd.f32 0.0, %v1549
        %v1551 = vpop.f32.mrf.mxu0
        %1552 = vmatprep.mubr.f32.mxu0 0.0
        %1553 = vmatmul.mubr.f32.gmra.mxu0 %v1342
        %v1554 = vpop.f32.mrf.mxu0
        %v1555 = vadd.f32 0.0, %v1554
        %v1556 = vpop.f32.mrf.mxu0
        %1557 = vmatprep.mubr.f32.mxu0 0.0
        %1558 = vmatmul.mubr.f32.gmra.mxu0 %v1345
        %v1559 = vpop.f32.mrf.mxu0
        %v1560 = vadd.f32 0.0, %v1559
        %v1561 = vpop.f32.mrf.mxu0
        %1562 = vmatprep.mubr.f32.mxu0 0.0
        %1563 = vmatmul.mubr.f32.gmra.mxu0 %v1348
        %v1564 = vpop.f32.mrf.mxu0
        %v1565 = vadd.f32 0.0, %v1564
        %v1566 = vpop.f32.mrf.mxu0
        %1567 = vmatprep.mubr.f32.mxu0 0.0
        %1568 = vmatmul.mubr.f32.gmra.mxu0 %v1351
        %v1569 = vpop.f32.mrf.mxu0
        %v1570 = vadd.f32 0.0, %v1569
        %v1571 = vpop.f32.mrf.mxu0
        %1572 = vmatprep.mubr.f32.mxu0 0.0
        %1573 = vmatmul.mubr.f32.gmra.mxu0 %v1354
        %v1574 = vpop.f32.mrf.mxu0
        %v1575 = vadd.f32 0.0, %v1574
        %v1576 = vpop.f32.mrf.mxu0
        %1577 = vmatprep.mubr.f32.mxu0 0.0
        %1578 = vmatmul.mubr.f32.gmra.mxu0 %v1357
        %v1579 = vpop.f32.mrf.mxu0
        %v1580 = vadd.f32 0.0, %v1579
        %v1581 = vpop.f32.mrf.mxu0
        %1582 = vmatprep.mubr.f32.mxu0 0.0
        %1583 = vmatmul.mubr.f32.gmra.mxu0 %v1360
        %v1584 = vpop.f32.mrf.mxu0
        %v1585 = vadd.f32 0.0, %v1584
        %v1586 = vpop.f32.mrf.mxu0
        %1587 = vmatprep.mubr.f32.mxu0 0.0
        %1588 = vmatmul.mubr.f32.gmra.mxu0 %v1363
        %v1589 = vpop.f32.mrf.mxu0
        %v1590 = vadd.f32 0.0, %v1589
        %v1591 = vpop.f32.mrf.mxu0
        %1592 = vmatprep.mubr.f32.mxu0 0.0
        %1593 = vmatmul.mubr.f32.gmra.mxu0 %v1366
        %v1594 = vpop.f32.mrf.mxu0
        %v1595 = vadd.f32 0.0, %v1594
        %v1596 = vpop.f32.mrf.mxu0
        %1597 = vmatprep.mubr.f32.mxu0 0.0
        %1598 = vmatmul.mubr.f32.gmra.mxu0 %v1369
        %v1599 = vpop.f32.mrf.mxu0
        %v1600 = vadd.f32 0.0, %v1599
        %v1601 = vpop.f32.mrf.mxu0
        %1602 = vmatprep.mubr.f32.mxu0 0.0
        %1603 = vmatmul.mubr.f32.gmra.mxu0 %v1372
        %v1604 = vpop.f32.mrf.mxu0
        %v1605 = vadd.f32 0.0, %v1604
        %v1606 = vpop.f32.mrf.mxu0
        %1607 = vmatprep.mubr.f32.mxu0 0.0
        %1608 = vmatmul.mubr.f32.gmra.mxu0 %v1375
        %v1609 = vpop.f32.mrf.mxu0
        %v1610 = vadd.f32 0.0, %v1609
        %v1611 = vpop.f32.mrf.mxu0
        %1612 = vmatprep.mubr.f32.mxu0 0.0
        %1613 = vmatmul.mubr.f32.gmra.mxu0 %v1378
        %v1614 = vpop.f32.mrf.mxu0
        %v1615 = vadd.f32 0.0, %v1614
        %v1616 = vpop.f32.mrf.mxu0
        %1617 = vmatprep.mubr.f32.mxu0 0.0
        %1618 = vmatmul.mubr.f32.gmra.mxu0 %v1381
        %v1619 = vpop.f32.mrf.mxu0
        %v1620 = vadd.f32 0.0, %v1619
        %v1621 = vpop.f32.mrf.mxu0
        %1622 = vmatprep.mubr.f32.mxu0 0.0
        %1623 = vmatmul.mubr.f32.gmra.mxu0 %v1384
        %v1624 = vpop.f32.mrf.mxu0
        %v1625 = vadd.f32 0.0, %v1624
        %v1626 = vpop.f32.mrf.mxu0
        %1627 = vmatprep.mubr.f32.mxu0 0.0
        %1628 = vmatmul.mubr.f32.gmra.mxu0 %v1387
        %v1629 = vpop.f32.mrf.mxu0
        %v1630 = vadd.f32 0.0, %v1629
        %v1631 = vpop.f32.mrf.mxu0
        %1632 = vmatprep.mubr.f32.mxu0 0.0
        %1633 = vmatmul.mubr.f32.gmra.mxu0 %v1390
        %v1634 = vpop.f32.mrf.mxu0
        %v1635 = vadd.f32 0.0, %v1634
        %v1636 = vpop.f32.mrf.mxu0
        %1637 = vmatprep.mubr.f32.mxu0 0.0
        %1638 = vmatmul.mubr.f32.gmra.mxu0 %v1393
        %v1639 = vpop.f32.mrf.mxu0
        %v1640 = vadd.f32 0.0, %v1639
        %v1641 = vpop.f32.mrf.mxu0
        %1642 = vmatprep.mubr.f32.mxu0 0.0
        %1643 = vmatmul.mubr.f32.gmra.mxu0 %v1396
        %v1644 = vpop.f32.mrf.mxu0
        %v1645 = vadd.f32 0.0, %v1644
        %v1646 = vpop.f32.mrf.mxu0
        %1647 = vdwg.mxu0
        %v1649 = vsel %vm588, %v1208, 0
        %v1652 = vsel %vm588, %v1209, 0
        %v1655 = vsel %vm588, %v1210, 0
        %v1658 = vsel %vm588, %v1211, 0
        %v1661 = vsel %vm588, %v1212, 0
        %v1664 = vsel %vm588, %v1213, 0
        %v1667 = vsel %vm588, %v1214, 0
        %v1670 = vsel %vm588, %v1215, 0
        %v1673 = vsel %vm588, %v1216, 0
        %v1676 = vsel %vm588, %v1217, 0
        %v1679 = vsel %vm588, %v1218, 0
        %v1682 = vsel %vm588, %v1219, 0
        %v1685 = vsel %vm588, %v1220, 0
        %v1688 = vsel %vm588, %v1221, 0
        %v1691 = vsel %vm588, %v1222, 0
        %v1694 = vsel %vm588, %v1223, 0
        %v1697 = vsel %vm588, %v1224, 0
        %v1700 = vsel %vm588, %v1225, 0
        %v1703 = vsel %vm588, %v1226, 0
        %v1706 = vsel %vm588, %v1227, 0
        %v1709 = vsel %vm588, %v1228, 0
        %v1712 = vsel %vm588, %v1229, 0
        %v1715 = vsel %vm588, %v1230, 0
        %v1718 = vsel %vm588, %v1231, 0
        %v1721 = vsel %vm588, %v1232, 0
        %v1724 = vsel %vm588, %v1233, 0
        %v1727 = vsel %vm588, %v1234, 0
        %v1730 = vsel %vm588, %v1235, 0
        %v1733 = vsel %vm588, %v1236, 0
        %v1736 = vsel %vm588, %v1237, 0
        %v1739 = vsel %vm588, %v1238, 0
        %v1742 = vsel %vm588, %v1239, 0
        %v1745 = vsel %vm588, %v1240, 0
        %v1748 = vsel %vm588, %v1241, 0
        %v1751 = vsel %vm588, %v1242, 0
        %v1754 = vsel %vm588, %v1243, 0
        %v1757 = vsel %vm588, %v1244, 0
        %1759 = vmatprep.subr.mxu0 0.0
        %1760 = vmatpush1.msra.mxu0 0.0
        %1761 = vmatprep.subr.mxu0 0.0
        %1762 = vmatpush1.msra.mxu0 0.0
        %1763 = vmatprep.subr.mxu0 0.0
        %1764 = vmatpush1.msra.mxu0 0.0
        %1765 = vmatprep.subr.mxu0 0.0
        %1766 = vmatpush1.msra.mxu0 0.0
        %1767 = vmatprep.subr.mxu0 0.0
        %1768 = vmatpush1.msra.mxu0 0.0
        %1769 = vmatprep.subr.mxu0 0.0
        %1770 = vmatpush1.msra.mxu0 0.0
        %1771 = vmatprep.subr.mxu0 0.0
        %1772 = vmatpush1.msra.mxu0 0.0
        %1773 = vmatprep.subr.mxu0 0.0
        %1774 = vmatpush1.msra.mxu0 0.0
        %1775 = vmatprep.subr.mxu0 0.0
        %1776 = vmatpush1.msra.mxu0 0.0
        %1777 = vmatprep.subr.mxu0 0.0
        %1778 = vmatpush1.msra.mxu0 0.0
        %1779 = vmatprep.subr.mxu0 0.0
        %1780 = vmatpush1.msra.mxu0 0.0
        %1781 = vmatprep.subr.mxu0 0.0
        %1782 = vmatpush1.msra.mxu0 0.0
        %1783 = vmatprep.subr.mxu0 0.0
        %1784 = vmatpush1.msra.mxu0 0.0
        %1785 = vmatprep.subr.mxu0 0.0
        %1786 = vmatpush1.msra.mxu0 0.0
        %1787 = vmatprep.subr.mxu0 0.0
        %1788 = vmatpush1.msra.mxu0 %v1246
        %1789 = vmatprep.subr.mxu0 0.0
        %1790 = vmatpush1.msra.mxu0 %v1245
        %1791 = vmatprep.subr.mxu0 0.0
        %1792 = vmatpush2.msra.mxu0 0.0
        %1793 = vmatprep.subr.mxu0 0.0
        %1794 = vmatpush2.msra.mxu0 0.0
        %1795 = vmatprep.subr.mxu0 0.0
        %1796 = vmatpush2.msra.mxu0 0.0
        %1797 = vmatprep.subr.mxu0 0.0
        %1798 = vmatpush2.msra.mxu0 0.0
        %1799 = vmatprep.subr.mxu0 0.0
        %1800 = vmatpush2.msra.mxu0 0.0
        %1801 = vmatprep.subr.mxu0 0.0
        %1802 = vmatpush2.msra.mxu0 0.0
        %1803 = vmatprep.subr.mxu0 0.0
        %1804 = vmatpush2.msra.mxu0 0.0
        %1805 = vmatprep.subr.mxu0 0.0
        %1806 = vmatpush2.msra.mxu0 0.0
        %1807 = vmatprep.subr.mxu0 0.0
        %1808 = vmatpush2.msra.mxu0 0.0
        %1809 = vmatprep.subr.mxu0 0.0
        %1810 = vmatpush2.msra.mxu0 0.0
        %1811 = vmatprep.subr.mxu0 0.0
        %1812 = vmatpush2.msra.mxu0 0.0
        %1813 = vmatprep.subr.mxu0 0.0
        %1814 = vmatpush2.msra.mxu0 0.0
        %1815 = vmatprep.subr.mxu0 0.0
        %1816 = vmatpush2.msra.mxu0 0.0
        %1817 = vmatprep.subr.mxu0 0.0
        %1818 = vmatpush2.msra.mxu0 0.0
        %1819 = vmatprep.subr.mxu0 0.0
        %1820 = vmatpush2.msra.mxu0 0.0
        %1821 = vmatprep.subr.mxu0 0.0
        %1822 = vmatpush2.msra.mxu0 0.0
        %1823 = vmatprep.mubr.f32.mxu0 0.0
        %1824 = vmatmul.mubr.f32.gmra.mxu0 %v1649
        %v1825 = vpop.f32.mrf.mxu0
        %v1826 = vadd.f32 %v1465, %v1825
        %v1827 = vpop.f32.mrf.mxu0
        %1828 = vmatprep.mubr.f32.mxu0 0.0
        %1829 = vmatmul.mubr.f32.gmra.mxu0 %v1652
        %v1830 = vpop.f32.mrf.mxu0
        %v1831 = vadd.f32 %v1470, %v1830
        %v1832 = vpop.f32.mrf.mxu0
        %1833 = vmatprep.mubr.f32.mxu0 0.0
        %1834 = vmatmul.mubr.f32.gmra.mxu0 %v1655
        %v1835 = vpop.f32.mrf.mxu0
        %v1836 = vadd.f32 %v1475, %v1835
        %v1837 = vpop.f32.mrf.mxu0
        %1838 = vmatprep.mubr.f32.mxu0 0.0
        %1839 = vmatmul.mubr.f32.gmra.mxu0 %v1658
        %v1840 = vpop.f32.mrf.mxu0
        %v1841 = vadd.f32 %v1480, %v1840
        %v1842 = vpop.f32.mrf.mxu0
        %1843 = vmatprep.mubr.f32.mxu0 0.0
        %1844 = vmatmul.mubr.f32.gmra.mxu0 %v1661
        %v1845 = vpop.f32.mrf.mxu0
        %v1846 = vadd.f32 %v1485, %v1845
        %v1847 = vpop.f32.mrf.mxu0
        %1848 = vmatprep.mubr.f32.mxu0 0.0
        %1849 = vmatmul.mubr.f32.gmra.mxu0 %v1664
        %v1850 = vpop.f32.mrf.mxu0
        %v1851 = vadd.f32 %v1490, %v1850
        %v1852 = vpop.f32.mrf.mxu0
        %1853 = vmatprep.mubr.f32.mxu0 0.0
        %1854 = vmatmul.mubr.f32.gmra.mxu0 %v1667
        %v1855 = vpop.f32.mrf.mxu0
        %v1856 = vadd.f32 %v1495, %v1855
        %v1857 = vpop.f32.mrf.mxu0
        %1858 = vmatprep.mubr.f32.mxu0 0.0
        %1859 = vmatmul.mubr.f32.gmra.mxu0 %v1670
        %v1860 = vpop.f32.mrf.mxu0
        %v1861 = vadd.f32 %v1500, %v1860
        %v1862 = vpop.f32.mrf.mxu0
        %1863 = vmatprep.mubr.f32.mxu0 0.0
        %1864 = vmatmul.mubr.f32.gmra.mxu0 %v1673
        %v1865 = vpop.f32.mrf.mxu0
        %v1866 = vadd.f32 %v1505, %v1865
        %v1867 = vpop.f32.mrf.mxu0
        %1868 = vmatprep.mubr.f32.mxu0 0.0
        %1869 = vmatmul.mubr.f32.gmra.mxu0 %v1676
        %v1870 = vpop.f32.mrf.mxu0
        %v1871 = vadd.f32 %v1510, %v1870
        %v1872 = vpop.f32.mrf.mxu0
        %1873 = vmatprep.mubr.f32.mxu0 0.0
        %1874 = vmatmul.mubr.f32.gmra.mxu0 %v1679
        %v1875 = vpop.f32.mrf.mxu0
        %v1876 = vadd.f32 %v1515, %v1875
        %v1877 = vpop.f32.mrf.mxu0
        %1878 = vmatprep.mubr.f32.mxu0 0.0
        %1879 = vmatmul.mubr.f32.gmra.mxu0 %v1682
        %v1880 = vpop.f32.mrf.mxu0
        %v1881 = vadd.f32 %v1520, %v1880
        %v1882 = vpop.f32.mrf.mxu0
        %1883 = vmatprep.mubr.f32.mxu0 0.0
        %1884 = vmatmul.mubr.f32.gmra.mxu0 %v1685
        %v1885 = vpop.f32.mrf.mxu0
        %v1886 = vadd.f32 %v1525, %v1885
        %v1887 = vpop.f32.mrf.mxu0
        %1888 = vmatprep.mubr.f32.mxu0 0.0
        %1889 = vmatmul.mubr.f32.gmra.mxu0 %v1688
        %v1890 = vpop.f32.mrf.mxu0
        %v1891 = vadd.f32 %v1530, %v1890
        %v1892 = vpop.f32.mrf.mxu0
        %1893 = vmatprep.mubr.f32.mxu0 0.0
        %1894 = vmatmul.mubr.f32.gmra.mxu0 %v1691
        %v1895 = vpop.f32.mrf.mxu0
        %v1896 = vadd.f32 %v1535, %v1895
        %v1897 = vpop.f32.mrf.mxu0
        %1898 = vmatprep.mubr.f32.mxu0 0.0
        %1899 = vmatmul.mubr.f32.gmra.mxu0 %v1694
        %v1900 = vpop.f32.mrf.mxu0
        %v1901 = vadd.f32 %v1540, %v1900
        %v1902 = vpop.f32.mrf.mxu0
        %1903 = vmatprep.mubr.f32.mxu0 0.0
        %1904 = vmatmul.mubr.f32.gmra.mxu0 %v1697
        %v1905 = vpop.f32.mrf.mxu0
        %v1906 = vadd.f32 %v1545, %v1905
        %v1907 = vpop.f32.mrf.mxu0
        %1908 = vmatprep.mubr.f32.mxu0 0.0
        %1909 = vmatmul.mubr.f32.gmra.mxu0 %v1700
        %v1910 = vpop.f32.mrf.mxu0
        %v1911 = vadd.f32 %v1550, %v1910
        %v1912 = vpop.f32.mrf.mxu0
        %1913 = vmatprep.mubr.f32.mxu0 0.0
        %1914 = vmatmul.mubr.f32.gmra.mxu0 %v1703
        %v1915 = vpop.f32.mrf.mxu0
        %v1916 = vadd.f32 %v1555, %v1915
        %v1917 = vpop.f32.mrf.mxu0
        %1918 = vmatprep.mubr.f32.mxu0 0.0
        %1919 = vmatmul.mubr.f32.gmra.mxu0 %v1706
        %v1920 = vpop.f32.mrf.mxu0
        %v1921 = vadd.f32 %v1560, %v1920
        %v1922 = vpop.f32.mrf.mxu0
        %1923 = vmatprep.mubr.f32.mxu0 0.0
        %1924 = vmatmul.mubr.f32.gmra.mxu0 %v1709
        %v1925 = vpop.f32.mrf.mxu0
        %v1926 = vadd.f32 %v1565, %v1925
        %v1927 = vpop.f32.mrf.mxu0
        %1928 = vmatprep.mubr.f32.mxu0 0.0
        %1929 = vmatmul.mubr.f32.gmra.mxu0 %v1712
        %v1930 = vpop.f32.mrf.mxu0
        %v1931 = vadd.f32 %v1570, %v1930
        %v1932 = vpop.f32.mrf.mxu0
        %1933 = vmatprep.mubr.f32.mxu0 0.0
        %1934 = vmatmul.mubr.f32.gmra.mxu0 %v1715
        %v1935 = vpop.f32.mrf.mxu0
        %v1936 = vadd.f32 %v1575, %v1935
        %v1937 = vpop.f32.mrf.mxu0
        %1938 = vmatprep.mubr.f32.mxu0 0.0
        %1939 = vmatmul.mubr.f32.gmra.mxu0 %v1718
        %v1940 = vpop.f32.mrf.mxu0
        %v1941 = vadd.f32 %v1580, %v1940
        %v1942 = vpop.f32.mrf.mxu0
        %1943 = vmatprep.mubr.f32.mxu0 0.0
        %1944 = vmatmul.mubr.f32.gmra.mxu0 %v1721
        %v1945 = vpop.f32.mrf.mxu0
        %v1946 = vadd.f32 %v1585, %v1945
        %v1947 = vpop.f32.mrf.mxu0
        %1948 = vmatprep.mubr.f32.mxu0 0.0
        %1949 = vmatmul.mubr.f32.gmra.mxu0 %v1724
        %v1950 = vpop.f32.mrf.mxu0
        %v1951 = vadd.f32 %v1590, %v1950
        %v1952 = vpop.f32.mrf.mxu0
        %1953 = vmatprep.mubr.f32.mxu0 0.0
        %1954 = vmatmul.mubr.f32.gmra.mxu0 %v1727
        %v1955 = vpop.f32.mrf.mxu0
        %v1956 = vadd.f32 %v1595, %v1955
        %v1957 = vpop.f32.mrf.mxu0
        %1958 = vmatprep.mubr.f32.mxu0 0.0
        %1959 = vmatmul.mubr.f32.gmra.mxu0 %v1730
        %v1960 = vpop.f32.mrf.mxu0
        %v1961 = vadd.f32 %v1600, %v1960
        %v1962 = vpop.f32.mrf.mxu0
        %1963 = vmatprep.mubr.f32.mxu0 0.0
        %1964 = vmatmul.mubr.f32.gmra.mxu0 %v1733
        %v1965 = vpop.f32.mrf.mxu0
        %v1966 = vadd.f32 %v1605, %v1965
        %v1967 = vpop.f32.mrf.mxu0
        %1968 = vmatprep.mubr.f32.mxu0 0.0
        %1969 = vmatmul.mubr.f32.gmra.mxu0 %v1736
        %v1970 = vpop.f32.mrf.mxu0
        %v1971 = vadd.f32 %v1610, %v1970
        %v1972 = vpop.f32.mrf.mxu0
        %1973 = vmatprep.mubr.f32.mxu0 0.0
        %1974 = vmatmul.mubr.f32.gmra.mxu0 %v1739
        %v1975 = vpop.f32.mrf.mxu0
        %v1976 = vadd.f32 %v1615, %v1975
        %v1977 = vpop.f32.mrf.mxu0
        %1978 = vmatprep.mubr.f32.mxu0 0.0
        %1979 = vmatmul.mubr.f32.gmra.mxu0 %v1742
        %v1980 = vpop.f32.mrf.mxu0
        %v1981 = vadd.f32 %v1620, %v1980
        %v1982 = vpop.f32.mrf.mxu0
        %1983 = vmatprep.mubr.f32.mxu0 0.0
        %1984 = vmatmul.mubr.f32.gmra.mxu0 %v1745
        %v1985 = vpop.f32.mrf.mxu0
        %v1986 = vadd.f32 %v1625, %v1985
        %v1987 = vpop.f32.mrf.mxu0
        %1988 = vmatprep.mubr.f32.mxu0 0.0
        %1989 = vmatmul.mubr.f32.gmra.mxu0 %v1748
        %v1990 = vpop.f32.mrf.mxu0
        %v1991 = vadd.f32 %v1630, %v1990
        %v1992 = vpop.f32.mrf.mxu0
        %1993 = vmatprep.mubr.f32.mxu0 0.0
        %1994 = vmatmul.mubr.f32.gmra.mxu0 %v1751
        %v1995 = vpop.f32.mrf.mxu0
        %v1996 = vadd.f32 %v1635, %v1995
        %v1997 = vpop.f32.mrf.mxu0
        %1998 = vmatprep.mubr.f32.mxu0 0.0
        %1999 = vmatmul.mubr.f32.gmra.mxu0 %v1754
        %v2000 = vpop.f32.mrf.mxu0
        %v2001 = vadd.f32 %v1640, %v2000
        %v2002 = vpop.f32.mrf.mxu0
        %2003 = vmatprep.mubr.f32.mxu0 0.0
        %2004 = vmatmul.mubr.f32.gmra.mxu0 %v1757
        %v2005 = vpop.f32.mrf.mxu0
        %v2006 = vadd.f32 %v1645, %v2005
        %v2007 = vpop.f32.mrf.mxu0
        %2008 = vdwg.mxu0
        %v2009 = vld [vmem:[#allocation2 + $0x11] sm:$0xff]
        %v2010 = vld [vmem:[#allocation2 + $0x19] sm:$0xff]
        %v2011 = vld [vmem:[#allocation2 + $0x21] sm:$0xff]
        %v2012 = vld [vmem:[#allocation2 + $0x29] sm:$0xff]
        %v2013 = vld [vmem:[#allocation2 + $0x31] sm:$0xff]
        %v2014 = vld [vmem:[#allocation2 + $0x39] sm:$0xff]
        %v2015 = vld [vmem:[#allocation2 + $0x41] sm:$0xff]
        %v2016 = vld [vmem:[#allocation2 + $0x49] sm:$0xff]
        %v2017 = vld [vmem:[#allocation2 + $0x51] sm:$0xff]
        %v2018 = vld [vmem:[#allocation2 + $0x59] sm:$0xff]
        %v2019 = vld [vmem:[#allocation2 + $0x61] sm:$0xff]
        %v2020 = vld [vmem:[#allocation2 + $0x69] sm:$0xff]
        %v2021 = vld [vmem:[#allocation2 + $0x71] sm:$0xff]
        %v2022 = vld [vmem:[#allocation2 + $0x79] sm:$0xff]
        %v2023 = vld [vmem:[#allocation2 + $0x81] sm:$0xff]
        %v2024 = vld [vmem:[#allocation2 + $0x89] sm:$0xff]
        %v2025 = vld [vmem:[#allocation2 + $0x91] sm:$0xff]
        %v2026 = vld [vmem:[#allocation2 + $0x99] sm:$0xff]
        %v2027 = vld [vmem:[#allocation2 + $0xa1] sm:$0xff]
        %v2028 = vld [vmem:[#allocation2 + $0xa9] sm:$0xff]
        %v2029 = vld [vmem:[#allocation2 + $0xb1] sm:$0xff]
        %v2030 = vld [vmem:[#allocation2 + $0xb9] sm:$0xff]
        %v2031 = vld [vmem:[#allocation2 + $0xc1] sm:$0xff]
        %v2032 = vld [vmem:[#allocation2 + $0xc9] sm:$0xff]
        %v2033 = vld [vmem:[#allocation2 + $0xd1] sm:$0xff]
        %v2034 = vld [vmem:[#allocation2 + $0xd9] sm:$0xff]
        %v2035 = vld [vmem:[#allocation2 + $0xe1] sm:$0xff]
        %v2036 = vld [vmem:[#allocation2 + $0xe9] sm:$0xff]
        %v2037 = vld [vmem:[#allocation2 + $0xf1] sm:$0xff]
        %v2038 = vld [vmem:[#allocation2 + $0xf9] sm:$0xff]
        %v2039 = vld [vmem:[#allocation2 + $0x101] sm:$0xff]
        %v2040 = vld [vmem:[#allocation2 + $0x109] sm:$0xff]
        %v2041 = vld [vmem:[#allocation2 + $0x111] sm:$0xff]
        %v2042 = vld [vmem:[#allocation2 + $0x119] sm:$0xff]
        %v2043 = vld [vmem:[#allocation2 + $0x121] sm:$0xff]
        %v2044 = vld [vmem:[#allocation2 + $0x129] sm:$0xff]
        %v2045 = vld [vmem:[#allocation2 + $0x131] sm:$0x1]
        %s2046 = scalar_lea.vmem %s8, 32
        %v2047 = vld [vmem:[%s2046] sm:$0xff]
        %v2048 = vld [vmem:[%s2046 + $0x8] sm:$0xff]
        %v2050 = vsel %vm588, %v2009, 0
        %v2053 = vsel %vm588, %v2010, 0
        %v2056 = vsel %vm588, %v2011, 0
        %v2059 = vsel %vm588, %v2012, 0
        %v2062 = vsel %vm588, %v2013, 0
        %v2065 = vsel %vm588, %v2014, 0
        %v2068 = vsel %vm588, %v2015, 0
        %v2071 = vsel %vm588, %v2016, 0
        %v2074 = vsel %vm588, %v2017, 0
        %v2077 = vsel %vm588, %v2018, 0
        %v2080 = vsel %vm588, %v2019, 0
        %v2083 = vsel %vm588, %v2020, 0
        %v2086 = vsel %vm588, %v2021, 0
        %v2089 = vsel %vm588, %v2022, 0
        %v2092 = vsel %vm588, %v2023, 0
        %v2095 = vsel %vm588, %v2024, 0
        %v2098 = vsel %vm588, %v2025, 0
        %v2101 = vsel %vm588, %v2026, 0
        %v2104 = vsel %vm588, %v2027, 0
        %v2107 = vsel %vm588, %v2028, 0
        %v2110 = vsel %vm588, %v2029, 0
        %v2113 = vsel %vm588, %v2030, 0
        %v2116 = vsel %vm588, %v2031, 0
        %v2119 = vsel %vm588, %v2032, 0
        %v2122 = vsel %vm588, %v2033, 0
        %v2125 = vsel %vm588, %v2034, 0
        %v2128 = vsel %vm588, %v2035, 0
        %v2131 = vsel %vm588, %v2036, 0
        %v2134 = vsel %vm588, %v2037, 0
        %v2137 = vsel %vm588, %v2038, 0
        %v2140 = vsel %vm588, %v2039, 0
        %v2143 = vsel %vm588, %v2040, 0
        %v2146 = vsel %vm588, %v2041, 0
        %v2149 = vsel %vm588, %v2042, 0
        %v2152 = vsel %vm588, %v2043, 0
        %v2155 = vsel %vm588, %v2044, 0
        %v2158 = vsel %vm588, %v2045, 0
        %2160 = vmatprep.subr.mxu0 0.0
        %2161 = vmatpush1.msra.mxu0 0.0
        %2162 = vmatprep.subr.mxu0 0.0
        %2163 = vmatpush1.msra.mxu0 0.0
        %2164 = vmatprep.subr.mxu0 0.0
        %2165 = vmatpush1.msra.mxu0 0.0
        %2166 = vmatprep.subr.mxu0 0.0
        %2167 = vmatpush1.msra.mxu0 0.0
        %2168 = vmatprep.subr.mxu0 0.0
        %2169 = vmatpush1.msra.mxu0 0.0
        %2170 = vmatprep.subr.mxu0 0.0
        %2171 = vmatpush1.msra.mxu0 0.0
        %2172 = vmatprep.subr.mxu0 0.0
        %2173 = vmatpush1.msra.mxu0 0.0
        %2174 = vmatprep.subr.mxu0 0.0
        %2175 = vmatpush1.msra.mxu0 0.0
        %2176 = vmatprep.subr.mxu0 0.0
        %2177 = vmatpush1.msra.mxu0 0.0
        %2178 = vmatprep.subr.mxu0 0.0
        %2179 = vmatpush1.msra.mxu0 0.0
        %2180 = vmatprep.subr.mxu0 0.0
        %2181 = vmatpush1.msra.mxu0 0.0
        %2182 = vmatprep.subr.mxu0 0.0
        %2183 = vmatpush1.msra.mxu0 0.0
        %2184 = vmatprep.subr.mxu0 0.0
        %2185 = vmatpush1.msra.mxu0 0.0
        %2186 = vmatprep.subr.mxu0 0.0
        %2187 = vmatpush1.msra.mxu0 0.0
        %2188 = vmatprep.subr.mxu0 0.0
        %2189 = vmatpush1.msra.mxu0 %v2048
        %2190 = vmatprep.subr.mxu0 0.0
        %2191 = vmatpush1.msra.mxu0 %v2047
        %2192 = vmatprep.subr.mxu0 0.0
        %2193 = vmatpush2.msra.mxu0 0.0
        %2194 = vmatprep.subr.mxu0 0.0
        %2195 = vmatpush2.msra.mxu0 0.0
        %2196 = vmatprep.subr.mxu0 0.0
        %2197 = vmatpush2.msra.mxu0 0.0
        %2198 = vmatprep.subr.mxu0 0.0
        %2199 = vmatpush2.msra.mxu0 0.0
        %2200 = vmatprep.subr.mxu0 0.0
        %2201 = vmatpush2.msra.mxu0 0.0
        %2202 = vmatprep.subr.mxu0 0.0
        %2203 = vmatpush2.msra.mxu0 0.0
        %2204 = vmatprep.subr.mxu0 0.0
        %2205 = vmatpush2.msra.mxu0 0.0
        %2206 = vmatprep.subr.mxu0 0.0
        %2207 = vmatpush2.msra.mxu0 0.0
        %2208 = vmatprep.subr.mxu0 0.0
        %2209 = vmatpush2.msra.mxu0 0.0
        %2210 = vmatprep.subr.mxu0 0.0
        %2211 = vmatpush2.msra.mxu0 0.0
        %2212 = vmatprep.subr.mxu0 0.0
        %2213 = vmatpush2.msra.mxu0 0.0
        %2214 = vmatprep.subr.mxu0 0.0
        %2215 = vmatpush2.msra.mxu0 0.0
        %2216 = vmatprep.subr.mxu0 0.0
        %2217 = vmatpush2.msra.mxu0 0.0
        %2218 = vmatprep.subr.mxu0 0.0
        %2219 = vmatpush2.msra.mxu0 0.0
        %2220 = vmatprep.subr.mxu0 0.0
        %2221 = vmatpush2.msra.mxu0 0.0
        %2222 = vmatprep.subr.mxu0 0.0
        %2223 = vmatpush2.msra.mxu0 0.0
        %2224 = vmatprep.mubr.f32.mxu0 0.0
        %2225 = vmatmul.mubr.f32.gmra.mxu0 %v2050
        %v2226 = vpop.f32.mrf.mxu0
        %v2227 = vadd.f32 0.0, %v2226
        %v2228 = vpop.f32.mrf.mxu0
        %2229 = vmatprep.mubr.f32.mxu0 0.0
        %2230 = vmatmul.mubr.f32.gmra.mxu0 %v2053
        %v2231 = vpop.f32.mrf.mxu0
        %v2232 = vadd.f32 0.0, %v2231
        %v2233 = vpop.f32.mrf.mxu0
        %2234 = vmatprep.mubr.f32.mxu0 0.0
        %2235 = vmatmul.mubr.f32.gmra.mxu0 %v2056
        %v2236 = vpop.f32.mrf.mxu0
        %v2237 = vadd.f32 0.0, %v2236
        %v2238 = vpop.f32.mrf.mxu0
        %2239 = vmatprep.mubr.f32.mxu0 0.0
        %2240 = vmatmul.mubr.f32.gmra.mxu0 %v2059
        %v2241 = vpop.f32.mrf.mxu0
        %v2242 = vadd.f32 0.0, %v2241
        %v2243 = vpop.f32.mrf.mxu0
        %2244 = vmatprep.mubr.f32.mxu0 0.0
        %2245 = vmatmul.mubr.f32.gmra.mxu0 %v2062
        %v2246 = vpop.f32.mrf.mxu0
        %v2247 = vadd.f32 0.0, %v2246
        %v2248 = vpop.f32.mrf.mxu0
        %2249 = vmatprep.mubr.f32.mxu0 0.0
        %2250 = vmatmul.mubr.f32.gmra.mxu0 %v2065
        %v2251 = vpop.f32.mrf.mxu0
        %v2252 = vadd.f32 0.0, %v2251
        %v2253 = vpop.f32.mrf.mxu0
        %2254 = vmatprep.mubr.f32.mxu0 0.0
        %2255 = vmatmul.mubr.f32.gmra.mxu0 %v2068
        %v2256 = vpop.f32.mrf.mxu0
        %v2257 = vadd.f32 0.0, %v2256
        %v2258 = vpop.f32.mrf.mxu0
        %2259 = vmatprep.mubr.f32.mxu0 0.0
        %2260 = vmatmul.mubr.f32.gmra.mxu0 %v2071
        %v2261 = vpop.f32.mrf.mxu0
        %v2262 = vadd.f32 0.0, %v2261
        %v2263 = vpop.f32.mrf.mxu0
        %2264 = vmatprep.mubr.f32.mxu0 0.0
        %2265 = vmatmul.mubr.f32.gmra.mxu0 %v2074
        %v2266 = vpop.f32.mrf.mxu0
        %v2267 = vadd.f32 0.0, %v2266
        %v2268 = vpop.f32.mrf.mxu0
        %2269 = vmatprep.mubr.f32.mxu0 0.0
        %2270 = vmatmul.mubr.f32.gmra.mxu0 %v2077
        %v2271 = vpop.f32.mrf.mxu0
        %v2272 = vadd.f32 0.0, %v2271
        %v2273 = vpop.f32.mrf.mxu0
        %2274 = vmatprep.mubr.f32.mxu0 0.0
        %2275 = vmatmul.mubr.f32.gmra.mxu0 %v2080
        %v2276 = vpop.f32.mrf.mxu0
        %v2277 = vadd.f32 0.0, %v2276
        %v2278 = vpop.f32.mrf.mxu0
        %2279 = vmatprep.mubr.f32.mxu0 0.0
        %2280 = vmatmul.mubr.f32.gmra.mxu0 %v2083
        %v2281 = vpop.f32.mrf.mxu0
        %v2282 = vadd.f32 0.0, %v2281
        %v2283 = vpop.f32.mrf.mxu0
        %2284 = vmatprep.mubr.f32.mxu0 0.0
        %2285 = vmatmul.mubr.f32.gmra.mxu0 %v2086
        %v2286 = vpop.f32.mrf.mxu0
        %v2287 = vadd.f32 0.0, %v2286
        %v2288 = vpop.f32.mrf.mxu0
        %2289 = vmatprep.mubr.f32.mxu0 0.0
        %2290 = vmatmul.mubr.f32.gmra.mxu0 %v2089
        %v2291 = vpop.f32.mrf.mxu0
        %v2292 = vadd.f32 0.0, %v2291
        %v2293 = vpop.f32.mrf.mxu0
        %2294 = vmatprep.mubr.f32.mxu0 0.0
        %2295 = vmatmul.mubr.f32.gmra.mxu0 %v2092
        %v2296 = vpop.f32.mrf.mxu0
        %v2297 = vadd.f32 0.0, %v2296
        %v2298 = vpop.f32.mrf.mxu0
        %2299 = vmatprep.mubr.f32.mxu0 0.0
        %2300 = vmatmul.mubr.f32.gmra.mxu0 %v2095
        %v2301 = vpop.f32.mrf.mxu0
        %v2302 = vadd.f32 0.0, %v2301
        %v2303 = vpop.f32.mrf.mxu0
        %2304 = vmatprep.mubr.f32.mxu0 0.0
        %2305 = vmatmul.mubr.f32.gmra.mxu0 %v2098
        %v2306 = vpop.f32.mrf.mxu0
        %v2307 = vadd.f32 0.0, %v2306
        %v2308 = vpop.f32.mrf.mxu0
        %2309 = vmatprep.mubr.f32.mxu0 0.0
        %2310 = vmatmul.mubr.f32.gmra.mxu0 %v2101
        %v2311 = vpop.f32.mrf.mxu0
        %v2312 = vadd.f32 0.0, %v2311
        %v2313 = vpop.f32.mrf.mxu0
        %2314 = vmatprep.mubr.f32.mxu0 0.0
        %2315 = vmatmul.mubr.f32.gmra.mxu0 %v2104
        %v2316 = vpop.f32.mrf.mxu0
        %v2317 = vadd.f32 0.0, %v2316
        %v2318 = vpop.f32.mrf.mxu0
        %2319 = vmatprep.mubr.f32.mxu0 0.0
        %2320 = vmatmul.mubr.f32.gmra.mxu0 %v2107
        %v2321 = vpop.f32.mrf.mxu0
        %v2322 = vadd.f32 0.0, %v2321
        %v2323 = vpop.f32.mrf.mxu0
        %2324 = vmatprep.mubr.f32.mxu0 0.0
        %2325 = vmatmul.mubr.f32.gmra.mxu0 %v2110
        %v2326 = vpop.f32.mrf.mxu0
        %v2327 = vadd.f32 0.0, %v2326
        %v2328 = vpop.f32.mrf.mxu0
        %2329 = vmatprep.mubr.f32.mxu0 0.0
        %2330 = vmatmul.mubr.f32.gmra.mxu0 %v2113
        %v2331 = vpop.f32.mrf.mxu0
        %v2332 = vadd.f32 0.0, %v2331
        %v2333 = vpop.f32.mrf.mxu0
        %2334 = vmatprep.mubr.f32.mxu0 0.0
        %2335 = vmatmul.mubr.f32.gmra.mxu0 %v2116
        %v2336 = vpop.f32.mrf.mxu0
        %v2337 = vadd.f32 0.0, %v2336
        %v2338 = vpop.f32.mrf.mxu0
        %2339 = vmatprep.mubr.f32.mxu0 0.0
        %2340 = vmatmul.mubr.f32.gmra.mxu0 %v2119
        %v2341 = vpop.f32.mrf.mxu0
        %v2342 = vadd.f32 0.0, %v2341
        %v2343 = vpop.f32.mrf.mxu0
        %2344 = vmatprep.mubr.f32.mxu0 0.0
        %2345 = vmatmul.mubr.f32.gmra.mxu0 %v2122
        %v2346 = vpop.f32.mrf.mxu0
        %v2347 = vadd.f32 0.0, %v2346
        %v2348 = vpop.f32.mrf.mxu0
        %2349 = vmatprep.mubr.f32.mxu0 0.0
        %2350 = vmatmul.mubr.f32.gmra.mxu0 %v2125
        %v2351 = vpop.f32.mrf.mxu0
        %v2352 = vadd.f32 0.0, %v2351
        %v2353 = vpop.f32.mrf.mxu0
        %2354 = vmatprep.mubr.f32.mxu0 0.0
        %2355 = vmatmul.mubr.f32.gmra.mxu0 %v2128
        %v2356 = vpop.f32.mrf.mxu0
        %v2357 = vadd.f32 0.0, %v2356
        %v2358 = vpop.f32.mrf.mxu0
        %2359 = vmatprep.mubr.f32.mxu0 0.0
        %2360 = vmatmul.mubr.f32.gmra.mxu0 %v2131
        %v2361 = vpop.f32.mrf.mxu0
        %v2362 = vadd.f32 0.0, %v2361
        %v2363 = vpop.f32.mrf.mxu0
        %2364 = vmatprep.mubr.f32.mxu0 0.0
        %2365 = vmatmul.mubr.f32.gmra.mxu0 %v2134
        %v2366 = vpop.f32.mrf.mxu0
        %v2367 = vadd.f32 0.0, %v2366
        %v2368 = vpop.f32.mrf.mxu0
        %2369 = vmatprep.mubr.f32.mxu0 0.0
        %2370 = vmatmul.mubr.f32.gmra.mxu0 %v2137
        %v2371 = vpop.f32.mrf.mxu0
        %v2372 = vadd.f32 0.0, %v2371
        %v2373 = vpop.f32.mrf.mxu0
        %2374 = vmatprep.mubr.f32.mxu0 0.0
        %2375 = vmatmul.mubr.f32.gmra.mxu0 %v2140
        %v2376 = vpop.f32.mrf.mxu0
        %v2377 = vadd.f32 0.0, %v2376
        %v2378 = vpop.f32.mrf.mxu0
        %2379 = vmatprep.mubr.f32.mxu0 0.0
        %2380 = vmatmul.mubr.f32.gmra.mxu0 %v2143
        %v2381 = vpop.f32.mrf.mxu0
        %v2382 = vadd.f32 0.0, %v2381
        %v2383 = vpop.f32.mrf.mxu0
        %2384 = vmatprep.mubr.f32.mxu0 0.0
        %2385 = vmatmul.mubr.f32.gmra.mxu0 %v2146
        %v2386 = vpop.f32.mrf.mxu0
        %v2387 = vadd.f32 0.0, %v2386
        %v2388 = vpop.f32.mrf.mxu0
        %2389 = vmatprep.mubr.f32.mxu0 0.0
        %2390 = vmatmul.mubr.f32.gmra.mxu0 %v2149
        %v2391 = vpop.f32.mrf.mxu0
        %v2392 = vadd.f32 0.0, %v2391
        %v2393 = vpop.f32.mrf.mxu0
        %2394 = vmatprep.mubr.f32.mxu0 0.0
        %2395 = vmatmul.mubr.f32.gmra.mxu0 %v2152
        %v2396 = vpop.f32.mrf.mxu0
        %v2397 = vadd.f32 0.0, %v2396
        %v2398 = vpop.f32.mrf.mxu0
        %2399 = vmatprep.mubr.f32.mxu0 0.0
        %2400 = vmatmul.mubr.f32.gmra.mxu0 %v2155
        %v2401 = vpop.f32.mrf.mxu0
        %v2402 = vadd.f32 0.0, %v2401
        %v2403 = vpop.f32.mrf.mxu0
        %2404 = vmatprep.mubr.f32.mxu0 0.0
        %2405 = vmatmul.mubr.f32.gmra.mxu0 %v2158
        %v2406 = vpop.f32.mrf.mxu0
        %v2407 = vadd.f32 0.0, %v2406
        %v2408 = vpop.f32.mrf.mxu0
        %2409 = vdwg.mxu0
        %v2410 = vadd.f32 %v1826, %v2227
        %v2411 = vadd.f32 %v1831, %v2232
        %v2412 = vadd.f32 %v1836, %v2237
        %v2413 = vadd.f32 %v1841, %v2242
        %v2414 = vadd.f32 %v1846, %v2247
        %v2415 = vadd.f32 %v1851, %v2252
        %v2416 = vadd.f32 %v1856, %v2257
        %v2417 = vadd.f32 %v1861, %v2262
        %v2418 = vadd.f32 %v1866, %v2267
        %v2419 = vadd.f32 %v1871, %v2272
        %v2420 = vadd.f32 %v1876, %v2277
        %v2421 = vadd.f32 %v1881, %v2282
        %v2422 = vadd.f32 %v1886, %v2287
        %v2423 = vadd.f32 %v1891, %v2292
        %v2424 = vadd.f32 %v1896, %v2297
        %v2425 = vadd.f32 %v1901, %v2302
        %v2426 = vadd.f32 %v1906, %v2307
        %v2427 = vadd.f32 %v1911, %v2312
        %v2428 = vadd.f32 %v1916, %v2317
        %v2429 = vadd.f32 %v1921, %v2322
        %v2430 = vadd.f32 %v1926, %v2327
        %v2431 = vadd.f32 %v1931, %v2332
        %v2432 = vadd.f32 %v1936, %v2337
        %v2433 = vadd.f32 %v1941, %v2342
        %v2434 = vadd.f32 %v1946, %v2347
        %v2435 = vadd.f32 %v1951, %v2352
        %v2436 = vadd.f32 %v1956, %v2357
        %v2437 = vadd.f32 %v1961, %v2362
        %v2438 = vadd.f32 %v1966, %v2367
        %v2439 = vadd.f32 %v1971, %v2372
        %v2440 = vadd.f32 %v1976, %v2377
        %v2441 = vadd.f32 %v1981, %v2382
        %v2442 = vadd.f32 %v1986, %v2387
        %v2443 = vadd.f32 %v1991, %v2392
        %v2444 = vadd.f32 %v1996, %v2397
        %v2445 = vadd.f32 %v2001, %v2402
        %v2446 = vadd.f32 %v2006, %v2407
        %v2447 = vld [vmem:[#allocation2 + $0x12] sm:$0xff]
        %v2448 = vld [vmem:[#allocation2 + $0x1a] sm:$0xff]
        %v2449 = vld [vmem:[#allocation2 + $0x22] sm:$0xff]
        %v2450 = vld [vmem:[#allocation2 + $0x2a] sm:$0xff]
        %v2451 = vld [vmem:[#allocation2 + $0x32] sm:$0xff]
        %v2452 = vld [vmem:[#allocation2 + $0x3a] sm:$0xff]
        %v2453 = vld [vmem:[#allocation2 + $0x42] sm:$0xff]
        %v2454 = vld [vmem:[#allocation2 + $0x4a] sm:$0xff]
        %v2455 = vld [vmem:[#allocation2 + $0x52] sm:$0xff]
        %v2456 = vld [vmem:[#allocation2 + $0x5a] sm:$0xff]
        %v2457 = vld [vmem:[#allocation2 + $0x62] sm:$0xff]
        %v2458 = vld [vmem:[#allocation2 + $0x6a] sm:$0xff]
        %v2459 = vld [vmem:[#allocation2 + $0x72] sm:$0xff]
        %v2460 = vld [vmem:[#allocation2 + $0x7a] sm:$0xff]
        %v2461 = vld [vmem:[#allocation2 + $0x82] sm:$0xff]
        %v2462 = vld [vmem:[#allocation2 + $0x8a] sm:$0xff]
        %v2463 = vld [vmem:[#allocation2 + $0x92] sm:$0xff]
        %v2464 = vld [vmem:[#allocation2 + $0x9a] sm:$0xff]
        %v2465 = vld [vmem:[#allocation2 + $0xa2] sm:$0xff]
        %v2466 = vld [vmem:[#allocation2 + $0xaa] sm:$0xff]
        %v2467 = vld [vmem:[#allocation2 + $0xb2] sm:$0xff]
        %v2468 = vld [vmem:[#allocation2 + $0xba] sm:$0xff]
        %v2469 = vld [vmem:[#allocation2 + $0xc2] sm:$0xff]
        %v2470 = vld [vmem:[#allocation2 + $0xca] sm:$0xff]
        %v2471 = vld [vmem:[#allocation2 + $0xd2] sm:$0xff]
        %v2472 = vld [vmem:[#allocation2 + $0xda] sm:$0xff]
        %v2473 = vld [vmem:[#allocation2 + $0xe2] sm:$0xff]
        %v2474 = vld [vmem:[#allocation2 + $0xea] sm:$0xff]
        %v2475 = vld [vmem:[#allocation2 + $0xf2] sm:$0xff]
        %v2476 = vld [vmem:[#allocation2 + $0xfa] sm:$0xff]
        %v2477 = vld [vmem:[#allocation2 + $0x102] sm:$0xff]
        %v2478 = vld [vmem:[#allocation2 + $0x10a] sm:$0xff]
        %v2479 = vld [vmem:[#allocation2 + $0x112] sm:$0xff]
        %v2480 = vld [vmem:[#allocation2 + $0x11a] sm:$0xff]
        %v2481 = vld [vmem:[#allocation2 + $0x122] sm:$0xff]
        %v2482 = vld [vmem:[#allocation2 + $0x12a] sm:$0xff]
        %v2483 = vld [vmem:[#allocation2 + $0x132] sm:$0x1]
        %s2484 = scalar_lea.vmem %s8, 48
        %v2485 = vld [vmem:[%s2484] sm:$0xff]
        %v2486 = vld [vmem:[%s2484 + $0x8] sm:$0xff]
        %v2488 = vsel %vm588, %v2447, 0
        %v2491 = vsel %vm588, %v2448, 0
        %v2494 = vsel %vm588, %v2449, 0
        %v2497 = vsel %vm588, %v2450, 0
        %v2500 = vsel %vm588, %v2451, 0
        %v2503 = vsel %vm588, %v2452, 0
        %v2506 = vsel %vm588, %v2453, 0
        %v2509 = vsel %vm588, %v2454, 0
        %v2512 = vsel %vm588, %v2455, 0
        %v2515 = vsel %vm588, %v2456, 0
        %v2518 = vsel %vm588, %v2457, 0
        %v2521 = vsel %vm588, %v2458, 0
        %v2524 = vsel %vm588, %v2459, 0
        %v2527 = vsel %vm588, %v2460, 0
        %v2530 = vsel %vm588, %v2461, 0
        %v2533 = vsel %vm588, %v2462, 0
        %v2536 = vsel %vm588, %v2463, 0
        %v2539 = vsel %vm588, %v2464, 0
        %v2542 = vsel %vm588, %v2465, 0
        %v2545 = vsel %vm588, %v2466, 0
        %v2548 = vsel %vm588, %v2467, 0
        %v2551 = vsel %vm588, %v2468, 0
        %v2554 = vsel %vm588, %v2469, 0
        %v2557 = vsel %vm588, %v2470, 0
        %v2560 = vsel %vm588, %v2471, 0
        %v2563 = vsel %vm588, %v2472, 0
        %v2566 = vsel %vm588, %v2473, 0
        %v2569 = vsel %vm588, %v2474, 0
        %v2572 = vsel %vm588, %v2475, 0
        %v2575 = vsel %vm588, %v2476, 0
        %v2578 = vsel %vm588, %v2477, 0
        %v2581 = vsel %vm588, %v2478, 0
        %v2584 = vsel %vm588, %v2479, 0
        %v2587 = vsel %vm588, %v2480, 0
        %v2590 = vsel %vm588, %v2481, 0
        %v2593 = vsel %vm588, %v2482, 0
        %v2596 = vsel %vm588, %v2483, 0
        %2598 = vmatprep.subr.mxu0 0.0
        %2599 = vmatpush1.msra.mxu0 0.0
        %2600 = vmatprep.subr.mxu0 0.0
        %2601 = vmatpush1.msra.mxu0 0.0
        %2602 = vmatprep.subr.mxu0 0.0
        %2603 = vmatpush1.msra.mxu0 0.0
        %2604 = vmatprep.subr.mxu0 0.0
        %2605 = vmatpush1.msra.mxu0 0.0
        %2606 = vmatprep.subr.mxu0 0.0
        %2607 = vmatpush1.msra.mxu0 0.0
        %2608 = vmatprep.subr.mxu0 0.0
        %2609 = vmatpush1.msra.mxu0 0.0
        %2610 = vmatprep.subr.mxu0 0.0
        %2611 = vmatpush1.msra.mxu0 0.0
        %2612 = vmatprep.subr.mxu0 0.0
        %2613 = vmatpush1.msra.mxu0 0.0
        %2614 = vmatprep.subr.mxu0 0.0
        %2615 = vmatpush1.msra.mxu0 0.0
        %2616 = vmatprep.subr.mxu0 0.0
        %2617 = vmatpush1.msra.mxu0 0.0
        %2618 = vmatprep.subr.mxu0 0.0
        %2619 = vmatpush1.msra.mxu0 0.0
        %2620 = vmatprep.subr.mxu0 0.0
        %2621 = vmatpush1.msra.mxu0 0.0
        %2622 = vmatprep.subr.mxu0 0.0
        %2623 = vmatpush1.msra.mxu0 0.0
        %2624 = vmatprep.subr.mxu0 0.0
        %2625 = vmatpush1.msra.mxu0 0.0
        %2626 = vmatprep.subr.mxu0 0.0
        %2627 = vmatpush1.msra.mxu0 %v2486
        %2628 = vmatprep.subr.mxu0 0.0
        %2629 = vmatpush1.msra.mxu0 %v2485
        %2630 = vmatprep.subr.mxu0 0.0
        %2631 = vmatpush2.msra.mxu0 0.0
        %2632 = vmatprep.subr.mxu0 0.0
        %2633 = vmatpush2.msra.mxu0 0.0
        %2634 = vmatprep.subr.mxu0 0.0
        %2635 = vmatpush2.msra.mxu0 0.0
        %2636 = vmatprep.subr.mxu0 0.0
        %2637 = vmatpush2.msra.mxu0 0.0
        %2638 = vmatprep.subr.mxu0 0.0
        %2639 = vmatpush2.msra.mxu0 0.0
        %2640 = vmatprep.subr.mxu0 0.0
        %2641 = vmatpush2.msra.mxu0 0.0
        %2642 = vmatprep.subr.mxu0 0.0
        %2643 = vmatpush2.msra.mxu0 0.0
        %2644 = vmatprep.subr.mxu0 0.0
        %2645 = vmatpush2.msra.mxu0 0.0
        %2646 = vmatprep.subr.mxu0 0.0
        %2647 = vmatpush2.msra.mxu0 0.0
        %2648 = vmatprep.subr.mxu0 0.0
        %2649 = vmatpush2.msra.mxu0 0.0
        %2650 = vmatprep.subr.mxu0 0.0
        %2651 = vmatpush2.msra.mxu0 0.0
        %2652 = vmatprep.subr.mxu0 0.0
        %2653 = vmatpush2.msra.mxu0 0.0
        %2654 = vmatprep.subr.mxu0 0.0
        %2655 = vmatpush2.msra.mxu0 0.0
        %2656 = vmatprep.subr.mxu0 0.0
        %2657 = vmatpush2.msra.mxu0 0.0
        %2658 = vmatprep.subr.mxu0 0.0
        %2659 = vmatpush2.msra.mxu0 0.0
        %2660 = vmatprep.subr.mxu0 0.0
        %2661 = vmatpush2.msra.mxu0 0.0
        %2662 = vmatprep.mubr.f32.mxu0 0.0
        %2663 = vmatmul.mubr.f32.gmra.mxu0 %v2488
        %v2664 = vpop.f32.mrf.mxu0
        %v2665 = vadd.f32 0.0, %v2664
        %v2666 = vpop.f32.mrf.mxu0
        %2667 = vmatprep.mubr.f32.mxu0 0.0
        %2668 = vmatmul.mubr.f32.gmra.mxu0 %v2491
        %v2669 = vpop.f32.mrf.mxu0
        %v2670 = vadd.f32 0.0, %v2669
        %v2671 = vpop.f32.mrf.mxu0
        %2672 = vmatprep.mubr.f32.mxu0 0.0
        %2673 = vmatmul.mubr.f32.gmra.mxu0 %v2494
        %v2674 = vpop.f32.mrf.mxu0
        %v2675 = vadd.f32 0.0, %v2674
        %v2676 = vpop.f32.mrf.mxu0
        %2677 = vmatprep.mubr.f32.mxu0 0.0
        %2678 = vmatmul.mubr.f32.gmra.mxu0 %v2497
        %v2679 = vpop.f32.mrf.mxu0
        %v2680 = vadd.f32 0.0, %v2679
        %v2681 = vpop.f32.mrf.mxu0
        %2682 = vmatprep.mubr.f32.mxu0 0.0
        %2683 = vmatmul.mubr.f32.gmra.mxu0 %v2500
        %v2684 = vpop.f32.mrf.mxu0
        %v2685 = vadd.f32 0.0, %v2684
        %v2686 = vpop.f32.mrf.mxu0
        %2687 = vmatprep.mubr.f32.mxu0 0.0
        %2688 = vmatmul.mubr.f32.gmra.mxu0 %v2503
        %v2689 = vpop.f32.mrf.mxu0
        %v2690 = vadd.f32 0.0, %v2689
        %v2691 = vpop.f32.mrf.mxu0
        %2692 = vmatprep.mubr.f32.mxu0 0.0
        %2693 = vmatmul.mubr.f32.gmra.mxu0 %v2506
        %v2694 = vpop.f32.mrf.mxu0
        %v2695 = vadd.f32 0.0, %v2694
        %v2696 = vpop.f32.mrf.mxu0
        %2697 = vmatprep.mubr.f32.mxu0 0.0
        %2698 = vmatmul.mubr.f32.gmra.mxu0 %v2509
        %v2699 = vpop.f32.mrf.mxu0
        %v2700 = vadd.f32 0.0, %v2699
        %v2701 = vpop.f32.mrf.mxu0
        %2702 = vmatprep.mubr.f32.mxu0 0.0
        %2703 = vmatmul.mubr.f32.gmra.mxu0 %v2512
        %v2704 = vpop.f32.mrf.mxu0
        %v2705 = vadd.f32 0.0, %v2704
        %v2706 = vpop.f32.mrf.mxu0
        %2707 = vmatprep.mubr.f32.mxu0 0.0
        %2708 = vmatmul.mubr.f32.gmra.mxu0 %v2515
        %v2709 = vpop.f32.mrf.mxu0
        %v2710 = vadd.f32 0.0, %v2709
        %v2711 = vpop.f32.mrf.mxu0
        %2712 = vmatprep.mubr.f32.mxu0 0.0
        %2713 = vmatmul.mubr.f32.gmra.mxu0 %v2518
        %v2714 = vpop.f32.mrf.mxu0
        %v2715 = vadd.f32 0.0, %v2714
        %v2716 = vpop.f32.mrf.mxu0
        %2717 = vmatprep.mubr.f32.mxu0 0.0
        %2718 = vmatmul.mubr.f32.gmra.mxu0 %v2521
        %v2719 = vpop.f32.mrf.mxu0
        %v2720 = vadd.f32 0.0, %v2719
        %v2721 = vpop.f32.mrf.mxu0
        %2722 = vmatprep.mubr.f32.mxu0 0.0
        %2723 = vmatmul.mubr.f32.gmra.mxu0 %v2524
        %v2724 = vpop.f32.mrf.mxu0
        %v2725 = vadd.f32 0.0, %v2724
        %v2726 = vpop.f32.mrf.mxu0
        %2727 = vmatprep.mubr.f32.mxu0 0.0
        %2728 = vmatmul.mubr.f32.gmra.mxu0 %v2527
        %v2729 = vpop.f32.mrf.mxu0
        %v2730 = vadd.f32 0.0, %v2729
        %v2731 = vpop.f32.mrf.mxu0
        %2732 = vmatprep.mubr.f32.mxu0 0.0
        %2733 = vmatmul.mubr.f32.gmra.mxu0 %v2530
        %v2734 = vpop.f32.mrf.mxu0
        %v2735 = vadd.f32 0.0, %v2734
        %v2736 = vpop.f32.mrf.mxu0
        %2737 = vmatprep.mubr.f32.mxu0 0.0
        %2738 = vmatmul.mubr.f32.gmra.mxu0 %v2533
        %v2739 = vpop.f32.mrf.mxu0
        %v2740 = vadd.f32 0.0, %v2739
        %v2741 = vpop.f32.mrf.mxu0
        %2742 = vmatprep.mubr.f32.mxu0 0.0
        %2743 = vmatmul.mubr.f32.gmra.mxu0 %v2536
        %v2744 = vpop.f32.mrf.mxu0
        %v2745 = vadd.f32 0.0, %v2744
        %v2746 = vpop.f32.mrf.mxu0
        %2747 = vmatprep.mubr.f32.mxu0 0.0
        %2748 = vmatmul.mubr.f32.gmra.mxu0 %v2539
        %v2749 = vpop.f32.mrf.mxu0
        %v2750 = vadd.f32 0.0, %v2749
        %v2751 = vpop.f32.mrf.mxu0
        %2752 = vmatprep.mubr.f32.mxu0 0.0
        %2753 = vmatmul.mubr.f32.gmra.mxu0 %v2542
        %v2754 = vpop.f32.mrf.mxu0
        %v2755 = vadd.f32 0.0, %v2754
        %v2756 = vpop.f32.mrf.mxu0
        %2757 = vmatprep.mubr.f32.mxu0 0.0
        %2758 = vmatmul.mubr.f32.gmra.mxu0 %v2545
        %v2759 = vpop.f32.mrf.mxu0
        %v2760 = vadd.f32 0.0, %v2759
        %v2761 = vpop.f32.mrf.mxu0
        %2762 = vmatprep.mubr.f32.mxu0 0.0
        %2763 = vmatmul.mubr.f32.gmra.mxu0 %v2548
        %v2764 = vpop.f32.mrf.mxu0
        %v2765 = vadd.f32 0.0, %v2764
        %v2766 = vpop.f32.mrf.mxu0
        %2767 = vmatprep.mubr.f32.mxu0 0.0
        %2768 = vmatmul.mubr.f32.gmra.mxu0 %v2551
        %v2769 = vpop.f32.mrf.mxu0
        %v2770 = vadd.f32 0.0, %v2769
        %v2771 = vpop.f32.mrf.mxu0
        %2772 = vmatprep.mubr.f32.mxu0 0.0
        %2773 = vmatmul.mubr.f32.gmra.mxu0 %v2554
        %v2774 = vpop.f32.mrf.mxu0
        %v2775 = vadd.f32 0.0, %v2774
        %v2776 = vpop.f32.mrf.mxu0
        %2777 = vmatprep.mubr.f32.mxu0 0.0
        %2778 = vmatmul.mubr.f32.gmra.mxu0 %v2557
        %v2779 = vpop.f32.mrf.mxu0
        %v2780 = vadd.f32 0.0, %v2779
        %v2781 = vpop.f32.mrf.mxu0
        %2782 = vmatprep.mubr.f32.mxu0 0.0
        %2783 = vmatmul.mubr.f32.gmra.mxu0 %v2560
        %v2784 = vpop.f32.mrf.mxu0
        %v2785 = vadd.f32 0.0, %v2784
        %v2786 = vpop.f32.mrf.mxu0
        %2787 = vmatprep.mubr.f32.mxu0 0.0
        %2788 = vmatmul.mubr.f32.gmra.mxu0 %v2563
        %v2789 = vpop.f32.mrf.mxu0
        %v2790 = vadd.f32 0.0, %v2789
        %v2791 = vpop.f32.mrf.mxu0
        %2792 = vmatprep.mubr.f32.mxu0 0.0
        %2793 = vmatmul.mubr.f32.gmra.mxu0 %v2566
        %v2794 = vpop.f32.mrf.mxu0
        %v2795 = vadd.f32 0.0, %v2794
        %v2796 = vpop.f32.mrf.mxu0
        %2797 = vmatprep.mubr.f32.mxu0 0.0
        %2798 = vmatmul.mubr.f32.gmra.mxu0 %v2569
        %v2799 = vpop.f32.mrf.mxu0
        %v2800 = vadd.f32 0.0, %v2799
        %v2801 = vpop.f32.mrf.mxu0
        %2802 = vmatprep.mubr.f32.mxu0 0.0
        %2803 = vmatmul.mubr.f32.gmra.mxu0 %v2572
        %v2804 = vpop.f32.mrf.mxu0
        %v2805 = vadd.f32 0.0, %v2804
        %v2806 = vpop.f32.mrf.mxu0
        %2807 = vmatprep.mubr.f32.mxu0 0.0
        %2808 = vmatmul.mubr.f32.gmra.mxu0 %v2575
        %v2809 = vpop.f32.mrf.mxu0
        %v2810 = vadd.f32 0.0, %v2809
        %v2811 = vpop.f32.mrf.mxu0
        %2812 = vmatprep.mubr.f32.mxu0 0.0
        %2813 = vmatmul.mubr.f32.gmra.mxu0 %v2578
        %v2814 = vpop.f32.mrf.mxu0
        %v2815 = vadd.f32 0.0, %v2814
        %v2816 = vpop.f32.mrf.mxu0
        %2817 = vmatprep.mubr.f32.mxu0 0.0
        %2818 = vmatmul.mubr.f32.gmra.mxu0 %v2581
        %v2819 = vpop.f32.mrf.mxu0
        %v2820 = vadd.f32 0.0, %v2819
        %v2821 = vpop.f32.mrf.mxu0
        %2822 = vmatprep.mubr.f32.mxu0 0.0
        %2823 = vmatmul.mubr.f32.gmra.mxu0 %v2584
        %v2824 = vpop.f32.mrf.mxu0
        %v2825 = vadd.f32 0.0, %v2824
        %v2826 = vpop.f32.mrf.mxu0
        %2827 = vmatprep.mubr.f32.mxu0 0.0
        %2828 = vmatmul.mubr.f32.gmra.mxu0 %v2587
        %v2829 = vpop.f32.mrf.mxu0
        %v2830 = vadd.f32 0.0, %v2829
        %v2831 = vpop.f32.mrf.mxu0
        %2832 = vmatprep.mubr.f32.mxu0 0.0
        %2833 = vmatmul.mubr.f32.gmra.mxu0 %v2590
        %v2834 = vpop.f32.mrf.mxu0
        %v2835 = vadd.f32 0.0, %v2834
        %v2836 = vpop.f32.mrf.mxu0
        %2837 = vmatprep.mubr.f32.mxu0 0.0
        %2838 = vmatmul.mubr.f32.gmra.mxu0 %v2593
        %v2839 = vpop.f32.mrf.mxu0
        %v2840 = vadd.f32 0.0, %v2839
        %v2841 = vpop.f32.mrf.mxu0
        %2842 = vmatprep.mubr.f32.mxu0 0.0
        %2843 = vmatmul.mubr.f32.gmra.mxu0 %v2596
        %v2844 = vpop.f32.mrf.mxu0
        %v2845 = vadd.f32 0.0, %v2844
        %v2846 = vpop.f32.mrf.mxu0
        %2847 = vdwg.mxu0
        %v2848 = vadd.f32 %v2410, %v2665
        %v2849 = vadd.f32 %v2411, %v2670
        %v2850 = vadd.f32 %v2412, %v2675
        %v2851 = vadd.f32 %v2413, %v2680
        %v2852 = vadd.f32 %v2414, %v2685
        %v2853 = vadd.f32 %v2415, %v2690
        %v2854 = vadd.f32 %v2416, %v2695
        %v2855 = vadd.f32 %v2417, %v2700
        %v2856 = vadd.f32 %v2418, %v2705
        %v2857 = vadd.f32 %v2419, %v2710
        %v2858 = vadd.f32 %v2420, %v2715
        %v2859 = vadd.f32 %v2421, %v2720
        %v2860 = vadd.f32 %v2422, %v2725
        %v2861 = vadd.f32 %v2423, %v2730
        %v2862 = vadd.f32 %v2424, %v2735
        %v2863 = vadd.f32 %v2425, %v2740
        %v2864 = vadd.f32 %v2426, %v2745
        %v2865 = vadd.f32 %v2427, %v2750
        %v2866 = vadd.f32 %v2428, %v2755
        %v2867 = vadd.f32 %v2429, %v2760
        %v2868 = vadd.f32 %v2430, %v2765
        %v2869 = vadd.f32 %v2431, %v2770
        %v2870 = vadd.f32 %v2432, %v2775
        %v2871 = vadd.f32 %v2433, %v2780
        %v2872 = vadd.f32 %v2434, %v2785
        %v2873 = vadd.f32 %v2435, %v2790
        %v2874 = vadd.f32 %v2436, %v2795
        %v2875 = vadd.f32 %v2437, %v2800
        %v2876 = vadd.f32 %v2438, %v2805
        %v2877 = vadd.f32 %v2439, %v2810
        %v2878 = vadd.f32 %v2440, %v2815
        %v2879 = vadd.f32 %v2441, %v2820
        %v2880 = vadd.f32 %v2442, %v2825
        %v2881 = vadd.f32 %v2443, %v2830
        %v2882 = vadd.f32 %v2444, %v2835
        %v2883 = vadd.f32 %v2445, %v2840
        %v2884 = vadd.f32 %v2446, %v2845
        %v2885 = vld [vmem:[%s9] sm:$0x1]
        %v2887 = vlaneseq
        %v2888 = vshrl.u32 %v2887, 7
        %v2889 = vsub.s32 0, %v2888
        %v2890 = vrot.slane %v2885, %v2889
        %v2892 = vadd.f32 %v2848, %v2890
        %v2893 = vadd.f32 %v2849, %v2890
        %v2894 = vadd.f32 %v2850, %v2890
        %v2895 = vadd.f32 %v2851, %v2890
        %v2896 = vadd.f32 %v2852, %v2890
        %v2897 = vadd.f32 %v2853, %v2890
        %v2898 = vadd.f32 %v2854, %v2890
        %v2899 = vadd.f32 %v2855, %v2890
        %v2900 = vadd.f32 %v2856, %v2890
        %v2901 = vadd.f32 %v2857, %v2890
        %v2902 = vadd.f32 %v2858, %v2890
        %v2903 = vadd.f32 %v2859, %v2890
        %v2904 = vadd.f32 %v2860, %v2890
        %v2905 = vadd.f32 %v2861, %v2890
        %v2906 = vadd.f32 %v2862, %v2890
        %v2907 = vadd.f32 %v2863, %v2890
        %v2908 = vadd.f32 %v2864, %v2890
        %v2909 = vadd.f32 %v2865, %v2890
        %v2910 = vadd.f32 %v2866, %v2890
        %v2911 = vadd.f32 %v2867, %v2890
        %v2912 = vadd.f32 %v2868, %v2890
        %v2913 = vadd.f32 %v2869, %v2890
        %v2914 = vadd.f32 %v2870, %v2890
        %v2915 = vadd.f32 %v2871, %v2890
        %v2916 = vadd.f32 %v2872, %v2890
        %v2917 = vadd.f32 %v2873, %v2890
        %v2918 = vadd.f32 %v2874, %v2890
        %v2919 = vadd.f32 %v2875, %v2890
        %v2920 = vadd.f32 %v2876, %v2890
        %v2921 = vadd.f32 %v2877, %v2890
        %v2922 = vadd.f32 %v2878, %v2890
        %v2923 = vadd.f32 %v2879, %v2890
        %v2924 = vadd.f32 %v2880, %v2890
        %v2925 = vadd.f32 %v2881, %v2890
        %v2926 = vadd.f32 %v2882, %v2890
        %v2927 = vadd.f32 %v2883, %v2890
        %v2928 = vadd.f32 %v2884, %v2890
        %v2929 = vmax.f32 %v2892, 0.0
        %v2930 = vmax.f32 %v2893, 0.0
        %v2931 = vmax.f32 %v2894, 0.0
        %v2932 = vmax.f32 %v2895, 0.0
        %v2933 = vmax.f32 %v2896, 0.0
        %v2934 = vmax.f32 %v2897, 0.0
        %v2935 = vmax.f32 %v2898, 0.0
        %v2936 = vmax.f32 %v2899, 0.0
        %v2937 = vmax.f32 %v2900, 0.0
        %v2938 = vmax.f32 %v2901, 0.0
        %v2939 = vmax.f32 %v2902, 0.0
        %v2940 = vmax.f32 %v2903, 0.0
        %v2941 = vmax.f32 %v2904, 0.0
        %v2942 = vmax.f32 %v2905, 0.0
        %v2943 = vmax.f32 %v2906, 0.0
        %v2944 = vmax.f32 %v2907, 0.0
        %v2945 = vmax.f32 %v2908, 0.0
        %v2946 = vmax.f32 %v2909, 0.0
        %v2947 = vmax.f32 %v2910, 0.0
        %v2948 = vmax.f32 %v2911, 0.0
        %v2949 = vmax.f32 %v2912, 0.0
        %v2950 = vmax.f32 %v2913, 0.0
        %v2951 = vmax.f32 %v2914, 0.0
        %v2952 = vmax.f32 %v2915, 0.0
        %v2953 = vmax.f32 %v2916, 0.0
        %v2954 = vmax.f32 %v2917, 0.0
        %v2955 = vmax.f32 %v2918, 0.0
        %v2956 = vmax.f32 %v2919, 0.0
        %v2957 = vmax.f32 %v2920, 0.0
        %v2958 = vmax.f32 %v2921, 0.0
        %v2959 = vmax.f32 %v2922, 0.0
        %v2960 = vmax.f32 %v2923, 0.0
        %v2961 = vmax.f32 %v2924, 0.0
        %v2962 = vmax.f32 %v2925, 0.0
        %v2963 = vmax.f32 %v2926, 0.0
        %v2964 = vmax.f32 %v2927, 0.0
        %v2965 = vmax.f32 %v2928, 0.0
        %v2966 = vsub.f32 0.0, %v2892
        %v2967 = vsub.f32 0.0, %v2893
        %v2968 = vsub.f32 0.0, %v2894
        %v2969 = vsub.f32 0.0, %v2895
        %v2970 = vsub.f32 0.0, %v2896
        %v2971 = vsub.f32 0.0, %v2897
        %v2972 = vsub.f32 0.0, %v2898
        %v2973 = vsub.f32 0.0, %v2899
        %v2974 = vsub.f32 0.0, %v2900
        %v2975 = vsub.f32 0.0, %v2901
        %v2976 = vsub.f32 0.0, %v2902
        %v2977 = vsub.f32 0.0, %v2903
        %v2978 = vsub.f32 0.0, %v2904
        %v2979 = vsub.f32 0.0, %v2905
        %v2980 = vsub.f32 0.0, %v2906
        %v2981 = vsub.f32 0.0, %v2907
        %v2982 = vsub.f32 0.0, %v2908
        %v2983 = vsub.f32 0.0, %v2909
        %v2984 = vsub.f32 0.0, %v2910
        %v2985 = vsub.f32 0.0, %v2911
        %v2986 = vsub.f32 0.0, %v2912
        %v2987 = vsub.f32 0.0, %v2913
        %v2988 = vsub.f32 0.0, %v2914
        %v2989 = vsub.f32 0.0, %v2915
        %v2990 = vsub.f32 0.0, %v2916
        %v2991 = vsub.f32 0.0, %v2917
        %v2992 = vsub.f32 0.0, %v2918
        %v2993 = vsub.f32 0.0, %v2919
        %v2994 = vsub.f32 0.0, %v2920
        %v2995 = vsub.f32 0.0, %v2921
        %v2996 = vsub.f32 0.0, %v2922
        %v2997 = vsub.f32 0.0, %v2923
        %v2998 = vsub.f32 0.0, %v2924
        %v2999 = vsub.f32 0.0, %v2925
        %v3000 = vsub.f32 0.0, %v2926
        %v3001 = vsub.f32 0.0, %v2927
        %v3002 = vsub.f32 0.0, %v2928
        %v3003 = vmax.f32 %v2966, 0.0
        %v3004 = vmax.f32 %v2967, 0.0
        %v3005 = vmax.f32 %v2968, 0.0
        %v3006 = vmax.f32 %v2969, 0.0
        %v3007 = vmax.f32 %v2970, 0.0
        %v3008 = vmax.f32 %v2971, 0.0
        %v3009 = vmax.f32 %v2972, 0.0
        %v3010 = vmax.f32 %v2973, 0.0
        %v3011 = vmax.f32 %v2974, 0.0
        %v3012 = vmax.f32 %v2975, 0.0
        %v3013 = vmax.f32 %v2976, 0.0
        %v3014 = vmax.f32 %v2977, 0.0
        %v3015 = vmax.f32 %v2978, 0.0
        %v3016 = vmax.f32 %v2979, 0.0
        %v3017 = vmax.f32 %v2980, 0.0
        %v3018 = vmax.f32 %v2981, 0.0
        %v3019 = vmax.f32 %v2982, 0.0
        %v3020 = vmax.f32 %v2983, 0.0
        %v3021 = vmax.f32 %v2984, 0.0
        %v3022 = vmax.f32 %v2985, 0.0
        %v3023 = vmax.f32 %v2986, 0.0
        %v3024 = vmax.f32 %v2987, 0.0
        %v3025 = vmax.f32 %v2988, 0.0
        %v3026 = vmax.f32 %v2989, 0.0
        %v3027 = vmax.f32 %v2990, 0.0
        %v3028 = vmax.f32 %v2991, 0.0
        %v3029 = vmax.f32 %v2992, 0.0
        %v3030 = vmax.f32 %v2993, 0.0
        %v3031 = vmax.f32 %v2994, 0.0
        %v3032 = vmax.f32 %v2995, 0.0
        %v3033 = vmax.f32 %v2996, 0.0
        %v3034 = vmax.f32 %v2997, 0.0
        %v3035 = vmax.f32 %v2998, 0.0
        %v3036 = vmax.f32 %v2999, 0.0
        %v3037 = vmax.f32 %v3000, 0.0
        %v3038 = vmax.f32 %v3001, 0.0
        %v3039 = vmax.f32 %v3002, 0.0
        %3077 = vrot.lane.b32.xlu0 %v3003, 16
        %v3078 = vpop.permute.xlu0 %3077
        %3079 = vrot.lane.b32.xlu0 %v3004, 16
        %v3080 = vpop.permute.xlu0 %3079
        %3081 = vrot.lane.b32.xlu0 %v3005, 16
        %v3082 = vpop.permute.xlu0 %3081
        %3083 = vrot.lane.b32.xlu0 %v3006, 16
        %v3084 = vpop.permute.xlu0 %3083
        %3085 = vrot.lane.b32.xlu0 %v3007, 16
        %v3086 = vpop.permute.xlu0 %3085
        %3087 = vrot.lane.b32.xlu0 %v3008, 16
        %v3088 = vpop.permute.xlu0 %3087
        %3089 = vrot.lane.b32.xlu0 %v3009, 16
        %v3090 = vpop.permute.xlu0 %3089
        %3091 = vrot.lane.b32.xlu0 %v3010, 16
        %v3092 = vpop.permute.xlu0 %3091
        %3093 = vrot.lane.b32.xlu0 %v3011, 16
        %v3094 = vpop.permute.xlu0 %3093
        %3095 = vrot.lane.b32.xlu0 %v3012, 16
        %v3096 = vpop.permute.xlu0 %3095
        %3097 = vrot.lane.b32.xlu0 %v3013, 16
        %v3098 = vpop.permute.xlu0 %3097
        %3099 = vrot.lane.b32.xlu0 %v3014, 16
        %v3100 = vpop.permute.xlu0 %3099
        %3101 = vrot.lane.b32.xlu0 %v3015, 16
        %v3102 = vpop.permute.xlu0 %3101
        %3103 = vrot.lane.b32.xlu0 %v3016, 16
        %v3104 = vpop.permute.xlu0 %3103
        %3105 = vrot.lane.b32.xlu0 %v3017, 16
        %v3106 = vpop.permute.xlu0 %3105
        %3107 = vrot.lane.b32.xlu0 %v3018, 16
        %v3108 = vpop.permute.xlu0 %3107
        %3109 = vrot.lane.b32.xlu0 %v3019, 16
        %v3110 = vpop.permute.xlu0 %3109
        %3111 = vrot.lane.b32.xlu0 %v3020, 16
        %v3112 = vpop.permute.xlu0 %3111
        %3113 = vrot.lane.b32.xlu0 %v3021, 16
        %v3114 = vpop.permute.xlu0 %3113
        %3115 = vrot.lane.b32.xlu0 %v3022, 16
        %v3116 = vpop.permute.xlu0 %3115
        %3117 = vrot.lane.b32.xlu0 %v3023, 16
        %v3118 = vpop.permute.xlu0 %3117
        %3119 = vrot.lane.b32.xlu0 %v3024, 16
        %v3120 = vpop.permute.xlu0 %3119
        %3121 = vrot.lane.b32.xlu0 %v3025, 16
        %v3122 = vpop.permute.xlu0 %3121
        %3123 = vrot.lane.b32.xlu0 %v3026, 16
        %v3124 = vpop.permute.xlu0 %3123
        %3125 = vrot.lane.b32.xlu0 %v3027, 16
        %v3126 = vpop.permute.xlu0 %3125
        %3127 = vrot.lane.b32.xlu0 %v3028, 16
        %v3128 = vpop.permute.xlu0 %3127
        %3129 = vrot.lane.b32.xlu0 %v3029, 16
        %v3130 = vpop.permute.xlu0 %3129
        %3131 = vrot.lane.b32.xlu0 %v3030, 16
        %v3132 = vpop.permute.xlu0 %3131
        %3133 = vrot.lane.b32.xlu0 %v3031, 16
        %v3134 = vpop.permute.xlu0 %3133
        %3135 = vrot.lane.b32.xlu0 %v3032, 16
        %v3136 = vpop.permute.xlu0 %3135
        %3137 = vrot.lane.b32.xlu0 %v3033, 16
        %v3138 = vpop.permute.xlu0 %3137
        %3139 = vrot.lane.b32.xlu0 %v3034, 16
        %v3140 = vpop.permute.xlu0 %3139
        %3141 = vrot.lane.b32.xlu0 %v3035, 16
        %v3142 = vpop.permute.xlu0 %3141
        %3143 = vrot.lane.b32.xlu0 %v3036, 16
        %v3144 = vpop.permute.xlu0 %3143
        %3145 = vrot.lane.b32.xlu0 %v3037, 16
        %v3146 = vpop.permute.xlu0 %3145
        %3147 = vrot.lane.b32.xlu0 %v3038, 16
        %v3148 = vpop.permute.xlu0 %3147
        %3149 = vrot.lane.b32.xlu0 %v3039, 16
        %v3150 = vpop.permute.xlu0 %3149
        %v3188 = vsel %vm588, %v2929, %v3078
        %v3189 = vsel %vm588, %v2930, %v3080
        %v3190 = vsel %vm588, %v2931, %v3082
        %v3191 = vsel %vm588, %v2932, %v3084
        %v3192 = vsel %vm588, %v2933, %v3086
        %v3193 = vsel %vm588, %v2934, %v3088
        %v3194 = vsel %vm588, %v2935, %v3090
        %v3195 = vsel %vm588, %v2936, %v3092
        %v3196 = vsel %vm588, %v2937, %v3094
        %v3197 = vsel %vm588, %v2938, %v3096
        %v3198 = vsel %vm588, %v2939, %v3098
        %v3199 = vsel %vm588, %v2940, %v3100
        %v3200 = vsel %vm588, %v2941, %v3102
        %v3201 = vsel %vm588, %v2942, %v3104
        %v3202 = vsel %vm588, %v2943, %v3106
        %v3203 = vsel %vm588, %v2944, %v3108
        %v3204 = vsel %vm588, %v2945, %v3110
        %v3205 = vsel %vm588, %v2946, %v3112
        %v3206 = vsel %vm588, %v2947, %v3114
        %v3207 = vsel %vm588, %v2948, %v3116
        %v3208 = vsel %vm588, %v2949, %v3118
        %v3209 = vsel %vm588, %v2950, %v3120
        %v3210 = vsel %vm588, %v2951, %v3122
        %v3211 = vsel %vm588, %v2952, %v3124
        %v3212 = vsel %vm588, %v2953, %v3126
        %v3213 = vsel %vm588, %v2954, %v3128
        %v3214 = vsel %vm588, %v2955, %v3130
        %v3215 = vsel %vm588, %v2956, %v3132
        %v3216 = vsel %vm588, %v2957, %v3134
        %v3217 = vsel %vm588, %v2958, %v3136
        %v3218 = vsel %vm588, %v2959, %v3138
        %v3219 = vsel %vm588, %v2960, %v3140
        %v3220 = vsel %vm588, %v2961, %v3142
        %v3221 = vsel %vm588, %v2962, %v3144
        %v3222 = vsel %vm588, %v2963, %v3146
        %v3223 = vsel %vm588, %v2964, %v3148
        %v3224 = vsel %vm588, %v2965, %v3150
        %vm3225 = vcmask 261120
        %3226 = vst.msk [vmem:[#allocation3] sm:$0xff] %vm3225, %v3188
        %3227 = vst.msk [vmem:[#allocation3 + $0x8] sm:$0xff] %vm3225, %v3189
        %3228 = vst.msk [vmem:[#allocation3 + $0x10] sm:$0xff] %vm3225, %v3190
        %3229 = vst.msk [vmem:[#allocation3 + $0x18] sm:$0xff] %vm3225, %v3191
        %3230 = vst.msk [vmem:[#allocation3 + $0x20] sm:$0xff] %vm3225, %v3192
        %3231 = vst.msk [vmem:[#allocation3 + $0x28] sm:$0xff] %vm3225, %v3193
        %3232 = vst.msk [vmem:[#allocation3 + $0x30] sm:$0xff] %vm3225, %v3194
        %3233 = vst.msk [vmem:[#allocation3 + $0x38] sm:$0xff] %vm3225, %v3195
        %3234 = vst.msk [vmem:[#allocation3 + $0x40] sm:$0xff] %vm3225, %v3196
        %3235 = vst.msk [vmem:[#allocation3 + $0x48] sm:$0xff] %vm3225, %v3197
        %3236 = vst.msk [vmem:[#allocation3 + $0x50] sm:$0xff] %vm3225, %v3198
        %3237 = vst.msk [vmem:[#allocation3 + $0x58] sm:$0xff] %vm3225, %v3199
        %3238 = vst.msk [vmem:[#allocation3 + $0x60] sm:$0xff] %vm3225, %v3200
        %3239 = vst.msk [vmem:[#allocation3 + $0x68] sm:$0xff] %vm3225, %v3201
        %3240 = vst.msk [vmem:[#allocation3 + $0x70] sm:$0xff] %vm3225, %v3202
        %3241 = vst.msk [vmem:[#allocation3 + $0x78] sm:$0xff] %vm3225, %v3203
        %3242 = vst.msk [vmem:[#allocation3 + $0x80] sm:$0xff] %vm3225, %v3204
        %3243 = vst.msk [vmem:[#allocation3 + $0x88] sm:$0xff] %vm3225, %v3205
        %3244 = vst.msk [vmem:[#allocation3 + $0x90] sm:$0xff] %vm3225, %v3206
        %3245 = vst.msk [vmem:[#allocation3 + $0x98] sm:$0xff] %vm3225, %v3207
        %3246 = vst.msk [vmem:[#allocation3 + $0xa0] sm:$0xff] %vm3225, %v3208
        %3247 = vst.msk [vmem:[#allocation3 + $0xa8] sm:$0xff] %vm3225, %v3209
        %3248 = vst.msk [vmem:[#allocation3 + $0xb0] sm:$0xff] %vm3225, %v3210
        %3249 = vst.msk [vmem:[#allocation3 + $0xb8] sm:$0xff] %vm3225, %v3211
        %3250 = vst.msk [vmem:[#allocation3 + $0xc0] sm:$0xff] %vm3225, %v3212
        %3251 = vst.msk [vmem:[#allocation3 + $0xc8] sm:$0xff] %vm3225, %v3213
        %3252 = vst.msk [vmem:[#allocation3 + $0xd0] sm:$0xff] %vm3225, %v3214
        %3253 = vst.msk [vmem:[#allocation3 + $0xd8] sm:$0xff] %vm3225, %v3215
        %3254 = vst.msk [vmem:[#allocation3 + $0xe0] sm:$0xff] %vm3225, %v3216
        %3255 = vst.msk [vmem:[#allocation3 + $0xe8] sm:$0xff] %vm3225, %v3217
        %3256 = vst.msk [vmem:[#allocation3 + $0xf0] sm:$0xff] %vm3225, %v3218
        %3257 = vst.msk [vmem:[#allocation3 + $0xf8] sm:$0xff] %vm3225, %v3219
        %3258 = vst.msk [vmem:[#allocation3 + $0x100] sm:$0xff] %vm3225, %v3220
        %3259 = vst.msk [vmem:[#allocation3 + $0x108] sm:$0xff] %vm3225, %v3221
        %3260 = vst.msk [vmem:[#allocation3 + $0x110] sm:$0xff] %vm3225, %v3222
        %3261 = vst.msk [vmem:[#allocation3 + $0x118] sm:$0xff] %vm3225, %v3223
        %vm3262 = vcmask 253952
        %3263 = vst.msk [vmem:[#allocation3 + $0x120] sm:$0x1] %vm3262, %v3224
        %v3264 = vld [vmem:[%s3] sm:$0xff]
        %v3265 = vld [vmem:[%s3 + $0x8] sm:$0xff]
        %v3266 = vld [vmem:[%s3 + $0x10] sm:$0xff]
        %v3267 = vld [vmem:[%s3 + $0x18] sm:$0xff]
        %v3268 = vld [vmem:[%s3 + $0x20] sm:$0xff]
        %v3269 = vld [vmem:[%s3 + $0x28] sm:$0xff]
        %v3270 = vld [vmem:[%s3 + $0x30] sm:$0xff]
        %v3271 = vld [vmem:[%s3 + $0x38] sm:$0xff]
        %v3272 = vld [vmem:[%s3 + $0x40] sm:$0xff]
        %v3273 = vld [vmem:[%s3 + $0x48] sm:$0xff]
        %v3274 = vld [vmem:[%s3 + $0x50] sm:$0xff]
        %v3275 = vld [vmem:[%s3 + $0x58] sm:$0xff]
        %v3276 = vld [vmem:[%s3 + $0x60] sm:$0xff]
        %v3277 = vld [vmem:[%s3 + $0x68] sm:$0xff]
        %v3278 = vld [vmem:[%s3 + $0x70] sm:$0xff]
        %v3279 = vld [vmem:[%s3 + $0x78] sm:$0xff]
        %v3280 = vld [vmem:[%s3 + $0x80] sm:$0xff]
        %v3281 = vld [vmem:[%s3 + $0x88] sm:$0xff]
        %v3282 = vld [vmem:[%s3 + $0x90] sm:$0xff]
        %v3283 = vld [vmem:[%s3 + $0x98] sm:$0xff]
        %v3284 = vld [vmem:[%s3 + $0xa0] sm:$0xff]
        %v3285 = vld [vmem:[%s3 + $0xa8] sm:$0xff]
        %v3286 = vld [vmem:[%s3 + $0xb0] sm:$0xff]
        %v3287 = vld [vmem:[%s3 + $0xb8] sm:$0xff]
        %v3288 = vld [vmem:[%s3 + $0xc0] sm:$0xff]
        %v3289 = vld [vmem:[%s3 + $0xc8] sm:$0xff]
        %v3290 = vld [vmem:[%s3 + $0xd0] sm:$0xff]
        %v3291 = vld [vmem:[%s3 + $0xd8] sm:$0xff]
        %v3292 = vld [vmem:[%s3 + $0xe0] sm:$0xff]
        %v3293 = vld [vmem:[%s3 + $0xe8] sm:$0xff]
        %v3294 = vld [vmem:[%s3 + $0xf0] sm:$0xff]
        %v3295 = vld [vmem:[%s3 + $0xf8] sm:$0xff]
        %v3296 = vld [vmem:[%s3 + $0x100] sm:$0xff]
        %v3297 = vld [vmem:[%s3 + $0x108] sm:$0xff]
        %v3298 = vld [vmem:[%s3 + $0x110] sm:$0xff]
        %v3299 = vld [vmem:[%s3 + $0x118] sm:$0xff]
        %v3300 = vld [vmem:[%s3 + $0x120] sm:$0xff]
        %v3301 = vld [vmem:[%s3 + $0x128] sm:$0xff]
        %v3302 = vld [vmem:[%s3 + $0x130] sm:$0xff]
        %v3303 = vld [vmem:[%s3 + $0x138] sm:$0xff]
        %v3304 = vld [vmem:[%s3 + $0x140] sm:$0xff]
        %v3305 = vld [vmem:[%s3 + $0x148] sm:$0xff]
        %v3306 = vld [vmem:[%s3 + $0x150] sm:$0xff]
        %v3307 = vld [vmem:[%s3 + $0x158] sm:$0xff]
        %v3308 = vld [vmem:[%s3 + $0x160] sm:$0xff]
        %v3309 = vld [vmem:[%s3 + $0x168] sm:$0xff]
        %v3310 = vld [vmem:[%s3 + $0x170] sm:$0xff]
        %v3311 = vld [vmem:[%s3 + $0x178] sm:$0xff]
        %v3312 = vld [vmem:[%s3 + $0x180] sm:$0xff]
        %v3313 = vld [vmem:[%s3 + $0x188] sm:$0xff]
        %v3314 = vld [vmem:[%s3 + $0x190] sm:$0xff]
        %v3315 = vld [vmem:[%s3 + $0x198] sm:$0xff]
        %v3316 = vld [vmem:[%s3 + $0x1a0] sm:$0xff]
        %v3317 = vld [vmem:[%s3 + $0x1a8] sm:$0xff]
        %v3318 = vld [vmem:[%s3 + $0x1b0] sm:$0xff]
        %v3319 = vld [vmem:[%s3 + $0x1b8] sm:$0xff]
        %v3320 = vld [vmem:[%s3 + $0x1c0] sm:$0xff]
        %v3321 = vld [vmem:[%s3 + $0x1c8] sm:$0xff]
        %v3322 = vld [vmem:[%s3 + $0x1d0] sm:$0xff]
        %v3323 = vld [vmem:[%s3 + $0x1d8] sm:$0xff]
        %v3324 = vld [vmem:[%s3 + $0x1e0] sm:$0xff]
        %v3325 = vld [vmem:[%s3 + $0x1e8] sm:$0xff]
        %v3326 = vld [vmem:[%s3 + $0x1f0] sm:$0xff]
        %v3327 = vld [vmem:[%s3 + $0x1f8] sm:$0xff]
        %v3328 = vld [vmem:[%s3 + $0x200] sm:$0xff]
        %v3329 = vld [vmem:[%s3 + $0x208] sm:$0xff]
        %v3330 = vld [vmem:[%s3 + $0x210] sm:$0xff]
        %v3331 = vld [vmem:[%s3 + $0x218] sm:$0xff]
        %v3332 = vld [vmem:[%s3 + $0x220] sm:$0xff]
        %v3333 = vld [vmem:[%s3 + $0x228] sm:$0xff]
        %v3334 = vld [vmem:[%s3 + $0x230] sm:$0xff]
        %v3335 = vld [vmem:[%s3 + $0x238] sm:$0xff]
        %v3336 = vld [vmem:[%s3 + $0x240] sm:$0xff]
        %v3337 = vld [vmem:[%s3 + $0x248] sm:$0xff]
        %v3338 = vld [vmem:[%s3 + $0x250] sm:$0xff]
        %v3339 = vld [vmem:[%s3 + $0x258] sm:$0xff]
        %v3340 = vld [vmem:[%s3 + $0x260] sm:$0xff]
        %v3341 = vld [vmem:[%s3 + $0x268] sm:$0xff]
        %v3342 = vld [vmem:[%s3 + $0x270] sm:$0xff]
        %v3343 = vld [vmem:[%s3 + $0x278] sm:$0xff]
        %v3344 = vld [vmem:[%s3 + $0x280] sm:$0xff]
        %v3345 = vld [vmem:[%s3 + $0x288] sm:$0xff]
        %v3346 = vld [vmem:[%s3 + $0x290] sm:$0xff]
        %v3347 = vld [vmem:[%s3 + $0x298] sm:$0xff]
        %v3348 = vld [vmem:[%s3 + $0x2a0] sm:$0xff]
        %v3349 = vld [vmem:[%s3 + $0x2a8] sm:$0xff]
        %v3350 = vld [vmem:[%s3 + $0x2b0] sm:$0xff]
        %v3351 = vld [vmem:[%s3 + $0x2b8] sm:$0xff]
        %v3352 = vld [vmem:[%s3 + $0x2c0] sm:$0xff]
        %v3353 = vld [vmem:[%s3 + $0x2c8] sm:$0xff]
        %v3354 = vld [vmem:[%s3 + $0x2d0] sm:$0xff]
        %v3355 = vld [vmem:[%s3 + $0x2d8] sm:$0xff]
        %v3356 = vld [vmem:[%s3 + $0x2e0] sm:$0xff]
        %v3357 = vld [vmem:[%s3 + $0x2e8] sm:$0xff]
        %v3358 = vld [vmem:[%s3 + $0x2f0] sm:$0xff]
        %v3359 = vld [vmem:[%s3 + $0x2f8] sm:$0xff]
        %v3360 = vld [vmem:[#allocation3] sm:$0xff]
        %v3361 = vld [vmem:[#allocation3 + $0x8] sm:$0xff]
        %v3362 = vld [vmem:[#allocation3 + $0x10] sm:$0xff]
        %v3363 = vld [vmem:[#allocation3 + $0x18] sm:$0xff]
        %v3364 = vld [vmem:[#allocation3 + $0x20] sm:$0xff]
        %v3365 = vld [vmem:[#allocation3 + $0x28] sm:$0xff]
        %v3366 = vld [vmem:[#allocation3 + $0x30] sm:$0xff]
        %v3367 = vld [vmem:[#allocation3 + $0x38] sm:$0xff]
        %v3368 = vld [vmem:[#allocation3 + $0x40] sm:$0xff]
        %v3369 = vld [vmem:[#allocation3 + $0x48] sm:$0xff]
        %v3370 = vld [vmem:[#allocation3 + $0x50] sm:$0xff]
        %v3371 = vld [vmem:[#allocation3 + $0x58] sm:$0xff]
        %v3372 = vld [vmem:[#allocation3 + $0x60] sm:$0xff]
        %v3373 = vld [vmem:[#allocation3 + $0x68] sm:$0xff]
        %v3374 = vld [vmem:[#allocation3 + $0x70] sm:$0xff]
        %v3375 = vld [vmem:[#allocation3 + $0x78] sm:$0xff]
        %v3376 = vld [vmem:[#allocation3 + $0x80] sm:$0xff]
        %v3377 = vld [vmem:[#allocation3 + $0x88] sm:$0xff]
        %v3378 = vld [vmem:[#allocation3 + $0x90] sm:$0xff]
        %v3379 = vld [vmem:[#allocation3 + $0x98] sm:$0xff]
        %v3380 = vld [vmem:[#allocation3 + $0xa0] sm:$0xff]
        %v3381 = vld [vmem:[#allocation3 + $0xa8] sm:$0xff]
        %v3382 = vld [vmem:[#allocation3 + $0xb0] sm:$0xff]
        %v3383 = vld [vmem:[#allocation3 + $0xb8] sm:$0xff]
        %v3384 = vld [vmem:[#allocation3 + $0xc0] sm:$0xff]
        %v3385 = vld [vmem:[#allocation3 + $0xc8] sm:$0xff]
        %v3386 = vld [vmem:[#allocation3 + $0xd0] sm:$0xff]
        %v3387 = vld [vmem:[#allocation3 + $0xd8] sm:$0xff]
        %v3388 = vld [vmem:[#allocation3 + $0xe0] sm:$0xff]
        %v3389 = vld [vmem:[#allocation3 + $0xe8] sm:$0xff]
        %v3390 = vld [vmem:[#allocation3 + $0xf0] sm:$0xff]
        %v3391 = vld [vmem:[#allocation3 + $0xf8] sm:$0xff]
        %v3392 = vld [vmem:[#allocation3 + $0x100] sm:$0xff]
        %v3393 = vld [vmem:[#allocation3 + $0x108] sm:$0xff]
        %v3394 = vld [vmem:[#allocation3 + $0x110] sm:$0xff]
        %v3395 = vld [vmem:[#allocation3 + $0x118] sm:$0xff]
        %v3396 = vld [vmem:[#allocation3 + $0x120] sm:$0x1]
        %vm3397 = vcmask 269312
        %v3399 = vsel %vm3397, %v3266, 0
        %v3402 = vsel %vm3397, %v3269, 0
        %v3405 = vsel %vm3397, %v3272, 0
        %v3408 = vsel %vm3397, %v3275, 0
        %v3411 = vsel %vm3397, %v3278, 0
        %v3414 = vsel %vm3397, %v3281, 0
        %v3417 = vsel %vm3397, %v3284, 0
        %v3420 = vsel %vm3397, %v3287, 0
        %v3423 = vsel %vm3397, %v3290, 0
        %v3426 = vsel %vm3397, %v3293, 0
        %v3429 = vsel %vm3397, %v3296, 0
        %v3432 = vsel %vm3397, %v3299, 0
        %v3435 = vsel %vm3397, %v3302, 0
        %v3438 = vsel %vm3397, %v3305, 0
        %v3441 = vsel %vm3397, %v3308, 0
        %v3444 = vsel %vm3397, %v3311, 0
        %v3447 = vsel %vm3397, %v3314, 0
        %v3450 = vsel %vm3397, %v3317, 0
        %v3453 = vsel %vm3397, %v3320, 0
        %v3456 = vsel %vm3397, %v3323, 0
        %v3459 = vsel %vm3397, %v3326, 0
        %v3462 = vsel %vm3397, %v3329, 0
        %v3465 = vsel %vm3397, %v3332, 0
        %v3468 = vsel %vm3397, %v3335, 0
        %v3471 = vsel %vm3397, %v3338, 0
        %v3474 = vsel %vm3397, %v3341, 0
        %v3477 = vsel %vm3397, %v3344, 0
        %v3480 = vsel %vm3397, %v3347, 0
        %v3483 = vsel %vm3397, %v3350, 0
        %v3486 = vsel %vm3397, %v3353, 0
        %v3489 = vsel %vm3397, %v3356, 0
        %v3492 = vsel %vm3397, %v3359, 0
        %vm3494 = vcmask 1040384
        %v3496 = vsel %vm3494, %v3396, 0
        %3498 = vmatprep.subr.mxu0 0.0
        %3499 = vmatpush1.msra.mxu0 %v3375
        %3500 = vmatprep.subr.mxu0 0.0
        %3501 = vmatpush1.msra.mxu0 %v3374
        %3502 = vmatprep.subr.mxu0 0.0
        %3503 = vmatpush1.msra.mxu0 %v3373
        %3504 = vmatprep.subr.mxu0 0.0
        %3505 = vmatpush1.msra.mxu0 %v3372
        %3506 = vmatprep.subr.mxu0 0.0
        %3507 = vmatpush1.msra.mxu0 %v3371
        %3508 = vmatprep.subr.mxu0 0.0
        %3509 = vmatpush1.msra.mxu0 %v3370
        %3510 = vmatprep.subr.mxu0 0.0
        %3511 = vmatpush1.msra.mxu0 %v3369
        %3512 = vmatprep.subr.mxu0 0.0
        %3513 = vmatpush1.msra.mxu0 %v3368
        %3514 = vmatprep.subr.mxu0 0.0
        %3515 = vmatpush1.msra.mxu0 %v3367
        %3516 = vmatprep.subr.mxu0 0.0
        %3517 = vmatpush1.msra.mxu0 %v3366
        %3518 = vmatprep.subr.mxu0 0.0
        %3519 = vmatpush1.msra.mxu0 %v3365
        %3520 = vmatprep.subr.mxu0 0.0
        %3521 = vmatpush1.msra.mxu0 %v3364
        %3522 = vmatprep.subr.mxu0 0.0
        %3523 = vmatpush1.msra.mxu0 %v3363
        %3524 = vmatprep.subr.mxu0 0.0
        %3525 = vmatpush1.msra.mxu0 %v3362
        %3526 = vmatprep.subr.mxu0 0.0
        %3527 = vmatpush1.msra.mxu0 %v3361
        %3528 = vmatprep.subr.mxu0 0.0
        %3529 = vmatpush1.msra.mxu0 %v3360
        %3530 = vmatprep.subr.mxu0 0.0
        %3531 = vmatpush2.msra.mxu0 %v3391
        %3532 = vmatprep.subr.mxu0 0.0
        %3533 = vmatpush2.msra.mxu0 %v3390
        %3534 = vmatprep.subr.mxu0 0.0
        %3535 = vmatpush2.msra.mxu0 %v3389
        %3536 = vmatprep.subr.mxu0 0.0
        %3537 = vmatpush2.msra.mxu0 %v3388
        %3538 = vmatprep.subr.mxu0 0.0
        %3539 = vmatpush2.msra.mxu0 %v3387
        %3540 = vmatprep.subr.mxu0 0.0
        %3541 = vmatpush2.msra.mxu0 %v3386
        %3542 = vmatprep.subr.mxu0 0.0
        %3543 = vmatpush2.msra.mxu0 %v3385
        %3544 = vmatprep.subr.mxu0 0.0
        %3545 = vmatpush2.msra.mxu0 %v3384
        %3546 = vmatprep.subr.mxu0 0.0
        %3547 = vmatpush2.msra.mxu0 %v3383
        %3548 = vmatprep.subr.mxu0 0.0
        %3549 = vmatpush2.msra.mxu0 %v3382
        %3550 = vmatprep.subr.mxu0 0.0
        %3551 = vmatpush2.msra.mxu0 %v3381
        %3552 = vmatprep.subr.mxu0 0.0
        %3553 = vmatpush2.msra.mxu0 %v3380
        %3554 = vmatprep.subr.mxu0 0.0
        %3555 = vmatpush2.msra.mxu0 %v3379
        %3556 = vmatprep.subr.mxu0 0.0
        %3557 = vmatpush2.msra.mxu0 %v3378
        %3558 = vmatprep.subr.mxu0 0.0
        %3559 = vmatpush2.msra.mxu0 %v3377
        %3560 = vmatprep.subr.mxu0 0.0
        %3561 = vmatpush2.msra.mxu0 %v3376
        %3562 = vmatprep.mubr.f32.mxu0 %v3265
        %3563 = vmatmul.mubr.f32.gmra.mxu0 %v3264
        %v3564 = vpop.f32.mrf.mxu0
        %v3565 = vadd.f32 0.0, %v3564
        %v3566 = vpop.f32.mrf.mxu0
        %3567 = vmatprep.mubr.f32.mxu0 %v3268
        %3568 = vmatmul.mubr.f32.gmra.mxu0 %v3267
        %v3569 = vpop.f32.mrf.mxu0
        %v3570 = vadd.f32 0.0, %v3569
        %v3571 = vpop.f32.mrf.mxu0
        %3572 = vmatprep.mubr.f32.mxu0 %v3271
        %3573 = vmatmul.mubr.f32.gmra.mxu0 %v3270
        %v3574 = vpop.f32.mrf.mxu0
        %v3575 = vadd.f32 0.0, %v3574
        %v3576 = vpop.f32.mrf.mxu0
        %3577 = vmatprep.mubr.f32.mxu0 %v3274
        %3578 = vmatmul.mubr.f32.gmra.mxu0 %v3273
        %v3579 = vpop.f32.mrf.mxu0
        %v3580 = vadd.f32 0.0, %v3579
        %v3581 = vpop.f32.mrf.mxu0
        %3582 = vmatprep.mubr.f32.mxu0 %v3277
        %3583 = vmatmul.mubr.f32.gmra.mxu0 %v3276
        %v3584 = vpop.f32.mrf.mxu0
        %v3585 = vadd.f32 0.0, %v3584
        %v3586 = vpop.f32.mrf.mxu0
        %3587 = vmatprep.mubr.f32.mxu0 %v3280
        %3588 = vmatmul.mubr.f32.gmra.mxu0 %v3279
        %v3589 = vpop.f32.mrf.mxu0
        %v3590 = vadd.f32 0.0, %v3589
        %v3591 = vpop.f32.mrf.mxu0
        %3592 = vmatprep.mubr.f32.mxu0 %v3283
        %3593 = vmatmul.mubr.f32.gmra.mxu0 %v3282
        %v3594 = vpop.f32.mrf.mxu0
        %v3595 = vadd.f32 0.0, %v3594
        %v3596 = vpop.f32.mrf.mxu0
        %3597 = vmatprep.mubr.f32.mxu0 %v3286
        %3598 = vmatmul.mubr.f32.gmra.mxu0 %v3285
        %v3599 = vpop.f32.mrf.mxu0
        %v3600 = vadd.f32 0.0, %v3599
        %v3601 = vpop.f32.mrf.mxu0
        %3602 = vmatprep.mubr.f32.mxu0 %v3289
        %3603 = vmatmul.mubr.f32.gmra.mxu0 %v3288
        %v3604 = vpop.f32.mrf.mxu0
        %v3605 = vadd.f32 0.0, %v3604
        %v3606 = vpop.f32.mrf.mxu0
        %3607 = vmatprep.mubr.f32.mxu0 %v3292
        %3608 = vmatmul.mubr.f32.gmra.mxu0 %v3291
        %v3609 = vpop.f32.mrf.mxu0
        %v3610 = vadd.f32 0.0, %v3609
        %v3611 = vpop.f32.mrf.mxu0
        %3612 = vmatprep.mubr.f32.mxu0 %v3295
        %3613 = vmatmul.mubr.f32.gmra.mxu0 %v3294
        %v3614 = vpop.f32.mrf.mxu0
        %v3615 = vadd.f32 0.0, %v3614
        %v3616 = vpop.f32.mrf.mxu0
        %3617 = vmatprep.mubr.f32.mxu0 %v3298
        %3618 = vmatmul.mubr.f32.gmra.mxu0 %v3297
        %v3619 = vpop.f32.mrf.mxu0
        %v3620 = vadd.f32 0.0, %v3619
        %v3621 = vpop.f32.mrf.mxu0
        %3622 = vmatprep.mubr.f32.mxu0 %v3301
        %3623 = vmatmul.mubr.f32.gmra.mxu0 %v3300
        %v3624 = vpop.f32.mrf.mxu0
        %v3625 = vadd.f32 0.0, %v3624
        %v3626 = vpop.f32.mrf.mxu0
        %3627 = vmatprep.mubr.f32.mxu0 %v3304
        %3628 = vmatmul.mubr.f32.gmra.mxu0 %v3303
        %v3629 = vpop.f32.mrf.mxu0
        %v3630 = vadd.f32 0.0, %v3629
        %v3631 = vpop.f32.mrf.mxu0
        %3632 = vmatprep.mubr.f32.mxu0 %v3307
        %3633 = vmatmul.mubr.f32.gmra.mxu0 %v3306
        %v3634 = vpop.f32.mrf.mxu0
        %v3635 = vadd.f32 0.0, %v3634
        %v3636 = vpop.f32.mrf.mxu0
        %3637 = vmatprep.mubr.f32.mxu0 %v3310
        %3638 = vmatmul.mubr.f32.gmra.mxu0 %v3309
        %v3639 = vpop.f32.mrf.mxu0
        %v3640 = vadd.f32 0.0, %v3639
        %v3641 = vpop.f32.mrf.mxu0
        %3642 = vmatprep.mubr.f32.mxu0 %v3313
        %3643 = vmatmul.mubr.f32.gmra.mxu0 %v3312
        %v3644 = vpop.f32.mrf.mxu0
        %v3645 = vadd.f32 0.0, %v3644
        %v3646 = vpop.f32.mrf.mxu0
        %3647 = vmatprep.mubr.f32.mxu0 %v3316
        %3648 = vmatmul.mubr.f32.gmra.mxu0 %v3315
        %v3649 = vpop.f32.mrf.mxu0
        %v3650 = vadd.f32 0.0, %v3649
        %v3651 = vpop.f32.mrf.mxu0
        %3652 = vmatprep.mubr.f32.mxu0 %v3319
        %3653 = vmatmul.mubr.f32.gmra.mxu0 %v3318
        %v3654 = vpop.f32.mrf.mxu0
        %v3655 = vadd.f32 0.0, %v3654
        %v3656 = vpop.f32.mrf.mxu0
        %3657 = vmatprep.mubr.f32.mxu0 %v3322
        %3658 = vmatmul.mubr.f32.gmra.mxu0 %v3321
        %v3659 = vpop.f32.mrf.mxu0
        %v3660 = vadd.f32 0.0, %v3659
        %v3661 = vpop.f32.mrf.mxu0
        %3662 = vmatprep.mubr.f32.mxu0 %v3325
        %3663 = vmatmul.mubr.f32.gmra.mxu0 %v3324
        %v3664 = vpop.f32.mrf.mxu0
        %v3665 = vadd.f32 0.0, %v3664
        %v3666 = vpop.f32.mrf.mxu0
        %3667 = vmatprep.mubr.f32.mxu0 %v3328
        %3668 = vmatmul.mubr.f32.gmra.mxu0 %v3327
        %v3669 = vpop.f32.mrf.mxu0
        %v3670 = vadd.f32 0.0, %v3669
        %v3671 = vpop.f32.mrf.mxu0
        %3672 = vmatprep.mubr.f32.mxu0 %v3331
        %3673 = vmatmul.mubr.f32.gmra.mxu0 %v3330
        %v3674 = vpop.f32.mrf.mxu0
        %v3675 = vadd.f32 0.0, %v3674
        %v3676 = vpop.f32.mrf.mxu0
        %3677 = vmatprep.mubr.f32.mxu0 %v3334
        %3678 = vmatmul.mubr.f32.gmra.mxu0 %v3333
        %v3679 = vpop.f32.mrf.mxu0
        %v3680 = vadd.f32 0.0, %v3679
        %v3681 = vpop.f32.mrf.mxu0
        %3682 = vmatprep.mubr.f32.mxu0 %v3337
        %3683 = vmatmul.mubr.f32.gmra.mxu0 %v3336
        %v3684 = vpop.f32.mrf.mxu0
        %v3685 = vadd.f32 0.0, %v3684
        %v3686 = vpop.f32.mrf.mxu0
        %3687 = vmatprep.mubr.f32.mxu0 %v3340
        %3688 = vmatmul.mubr.f32.gmra.mxu0 %v3339
        %v3689 = vpop.f32.mrf.mxu0
        %v3690 = vadd.f32 0.0, %v3689
        %v3691 = vpop.f32.mrf.mxu0
        %3692 = vmatprep.mubr.f32.mxu0 %v3343
        %3693 = vmatmul.mubr.f32.gmra.mxu0 %v3342
        %v3694 = vpop.f32.mrf.mxu0
        %v3695 = vadd.f32 0.0, %v3694
        %v3696 = vpop.f32.mrf.mxu0
        %3697 = vmatprep.mubr.f32.mxu0 %v3346
        %3698 = vmatmul.mubr.f32.gmra.mxu0 %v3345
        %v3699 = vpop.f32.mrf.mxu0
        %v3700 = vadd.f32 0.0, %v3699
        %v3701 = vpop.f32.mrf.mxu0
        %3702 = vmatprep.mubr.f32.mxu0 %v3349
        %3703 = vmatmul.mubr.f32.gmra.mxu0 %v3348
        %v3704 = vpop.f32.mrf.mxu0
        %v3705 = vadd.f32 0.0, %v3704
        %v3706 = vpop.f32.mrf.mxu0
        %3707 = vmatprep.mubr.f32.mxu0 %v3352
        %3708 = vmatmul.mubr.f32.gmra.mxu0 %v3351
        %v3709 = vpop.f32.mrf.mxu0
        %v3710 = vadd.f32 0.0, %v3709
        %v3711 = vpop.f32.mrf.mxu0
        %3712 = vmatprep.mubr.f32.mxu0 %v3355
        %3713 = vmatmul.mubr.f32.gmra.mxu0 %v3354
        %v3714 = vpop.f32.mrf.mxu0
        %v3715 = vadd.f32 0.0, %v3714
        %v3716 = vpop.f32.mrf.mxu0
        %3717 = vmatprep.mubr.f32.mxu0 %v3358
        %3718 = vmatmul.mubr.f32.gmra.mxu0 %v3357
        %v3719 = vpop.f32.mrf.mxu0
        %v3720 = vadd.f32 0.0, %v3719
        %v3721 = vpop.f32.mrf.mxu0
        %3722 = vdwg.mxu0
        %3723 = vmatprep.subr.mxu0 0.0
        %3724 = vmatpush1.msra.mxu0 0.0
        %3725 = vmatprep.subr.mxu0 0.0
        %3726 = vmatpush1.msra.mxu0 0.0
        %3727 = vmatprep.subr.mxu0 0.0
        %3728 = vmatpush1.msra.mxu0 0.0
        %3729 = vmatprep.subr.mxu0 0.0
        %3730 = vmatpush1.msra.mxu0 0.0
        %3731 = vmatprep.subr.mxu0 0.0
        %3732 = vmatpush1.msra.mxu0 0.0
        %3733 = vmatprep.subr.mxu0 0.0
        %3734 = vmatpush1.msra.mxu0 0.0
        %3735 = vmatprep.subr.mxu0 0.0
        %3736 = vmatpush1.msra.mxu0 0.0
        %3737 = vmatprep.subr.mxu0 0.0
        %3738 = vmatpush1.msra.mxu0 0.0
        %3739 = vmatprep.subr.mxu0 0.0
        %3740 = vmatpush1.msra.mxu0 0.0
        %3741 = vmatprep.subr.mxu0 0.0
        %3742 = vmatpush1.msra.mxu0 0.0
        %3743 = vmatprep.subr.mxu0 0.0
        %3744 = vmatpush1.msra.mxu0 0.0
        %3745 = vmatprep.subr.mxu0 0.0
        %3746 = vmatpush1.msra.mxu0 %v3496
        %3747 = vmatprep.subr.mxu0 0.0
        %3748 = vmatpush1.msra.mxu0 %v3395
        %3749 = vmatprep.subr.mxu0 0.0
        %3750 = vmatpush1.msra.mxu0 %v3394
        %3751 = vmatprep.subr.mxu0 0.0
        %3752 = vmatpush1.msra.mxu0 %v3393
        %3753 = vmatprep.subr.mxu0 0.0
        %3754 = vmatpush1.msra.mxu0 %v3392
        %3755 = vmatprep.subr.mxu0 0.0
        %3756 = vmatpush2.msra.mxu0 0.0
        %3757 = vmatprep.subr.mxu0 0.0
        %3758 = vmatpush2.msra.mxu0 0.0
        %3759 = vmatprep.subr.mxu0 0.0
        %3760 = vmatpush2.msra.mxu0 0.0
        %3761 = vmatprep.subr.mxu0 0.0
        %3762 = vmatpush2.msra.mxu0 0.0
        %3763 = vmatprep.subr.mxu0 0.0
        %3764 = vmatpush2.msra.mxu0 0.0
        %3765 = vmatprep.subr.mxu0 0.0
        %3766 = vmatpush2.msra.mxu0 0.0
        %3767 = vmatprep.subr.mxu0 0.0
        %3768 = vmatpush2.msra.mxu0 0.0
        %3769 = vmatprep.subr.mxu0 0.0
        %3770 = vmatpush2.msra.mxu0 0.0
        %3771 = vmatprep.subr.mxu0 0.0
        %3772 = vmatpush2.msra.mxu0 0.0
        %3773 = vmatprep.subr.mxu0 0.0
        %3774 = vmatpush2.msra.mxu0 0.0
        %3775 = vmatprep.subr.mxu0 0.0
        %3776 = vmatpush2.msra.mxu0 0.0
        %3777 = vmatprep.subr.mxu0 0.0
        %3778 = vmatpush2.msra.mxu0 0.0
        %3779 = vmatprep.subr.mxu0 0.0
        %3780 = vmatpush2.msra.mxu0 0.0
        %3781 = vmatprep.subr.mxu0 0.0
        %3782 = vmatpush2.msra.mxu0 0.0
        %3783 = vmatprep.subr.mxu0 0.0
        %3784 = vmatpush2.msra.mxu0 0.0
        %3785 = vmatprep.subr.mxu0 0.0
        %3786 = vmatpush2.msra.mxu0 0.0
        %3787 = vmatprep.mubr.f32.mxu0 0.0
        %3788 = vmatmul.mubr.f32.gmra.mxu0 %v3399
        %v3789 = vpop.f32.mrf.mxu0
        %v3790 = vadd.f32 %v3565, %v3789
        %v3791 = vpop.f32.mrf.mxu0
        %3792 = vmatprep.mubr.f32.mxu0 0.0
        %3793 = vmatmul.mubr.f32.gmra.mxu0 %v3402
        %v3794 = vpop.f32.mrf.mxu0
        %v3795 = vadd.f32 %v3570, %v3794
        %v3796 = vpop.f32.mrf.mxu0
        %3797 = vmatprep.mubr.f32.mxu0 0.0
        %3798 = vmatmul.mubr.f32.gmra.mxu0 %v3405
        %v3799 = vpop.f32.mrf.mxu0
        %v3800 = vadd.f32 %v3575, %v3799
        %v3801 = vpop.f32.mrf.mxu0
        %3802 = vmatprep.mubr.f32.mxu0 0.0
        %3803 = vmatmul.mubr.f32.gmra.mxu0 %v3408
        %v3804 = vpop.f32.mrf.mxu0
        %v3805 = vadd.f32 %v3580, %v3804
        %v3806 = vpop.f32.mrf.mxu0
        %3807 = vmatprep.mubr.f32.mxu0 0.0
        %3808 = vmatmul.mubr.f32.gmra.mxu0 %v3411
        %v3809 = vpop.f32.mrf.mxu0
        %v3810 = vadd.f32 %v3585, %v3809
        %v3811 = vpop.f32.mrf.mxu0
        %3812 = vmatprep.mubr.f32.mxu0 0.0
        %3813 = vmatmul.mubr.f32.gmra.mxu0 %v3414
        %v3814 = vpop.f32.mrf.mxu0
        %v3815 = vadd.f32 %v3590, %v3814
        %v3816 = vpop.f32.mrf.mxu0
        %3817 = vmatprep.mubr.f32.mxu0 0.0
        %3818 = vmatmul.mubr.f32.gmra.mxu0 %v3417
        %v3819 = vpop.f32.mrf.mxu0
        %v3820 = vadd.f32 %v3595, %v3819
        %v3821 = vpop.f32.mrf.mxu0
        %3822 = vmatprep.mubr.f32.mxu0 0.0
        %3823 = vmatmul.mubr.f32.gmra.mxu0 %v3420
        %v3824 = vpop.f32.mrf.mxu0
        %v3825 = vadd.f32 %v3600, %v3824
        %v3826 = vpop.f32.mrf.mxu0
        %3827 = vmatprep.mubr.f32.mxu0 0.0
        %3828 = vmatmul.mubr.f32.gmra.mxu0 %v3423
        %v3829 = vpop.f32.mrf.mxu0
        %v3830 = vadd.f32 %v3605, %v3829
        %v3831 = vpop.f32.mrf.mxu0
        %3832 = vmatprep.mubr.f32.mxu0 0.0
        %3833 = vmatmul.mubr.f32.gmra.mxu0 %v3426
        %v3834 = vpop.f32.mrf.mxu0
        %v3835 = vadd.f32 %v3610, %v3834
        %v3836 = vpop.f32.mrf.mxu0
        %3837 = vmatprep.mubr.f32.mxu0 0.0
        %3838 = vmatmul.mubr.f32.gmra.mxu0 %v3429
        %v3839 = vpop.f32.mrf.mxu0
        %v3840 = vadd.f32 %v3615, %v3839
        %v3841 = vpop.f32.mrf.mxu0
        %3842 = vmatprep.mubr.f32.mxu0 0.0
        %3843 = vmatmul.mubr.f32.gmra.mxu0 %v3432
        %v3844 = vpop.f32.mrf.mxu0
        %v3845 = vadd.f32 %v3620, %v3844
        %v3846 = vpop.f32.mrf.mxu0
        %3847 = vmatprep.mubr.f32.mxu0 0.0
        %3848 = vmatmul.mubr.f32.gmra.mxu0 %v3435
        %v3849 = vpop.f32.mrf.mxu0
        %v3850 = vadd.f32 %v3625, %v3849
        %v3851 = vpop.f32.mrf.mxu0
        %3852 = vmatprep.mubr.f32.mxu0 0.0
        %3853 = vmatmul.mubr.f32.gmra.mxu0 %v3438
        %v3854 = vpop.f32.mrf.mxu0
        %v3855 = vadd.f32 %v3630, %v3854
        %v3856 = vpop.f32.mrf.mxu0
        %3857 = vmatprep.mubr.f32.mxu0 0.0
        %3858 = vmatmul.mubr.f32.gmra.mxu0 %v3441
        %v3859 = vpop.f32.mrf.mxu0
        %v3860 = vadd.f32 %v3635, %v3859
        %v3861 = vpop.f32.mrf.mxu0
        %3862 = vmatprep.mubr.f32.mxu0 0.0
        %3863 = vmatmul.mubr.f32.gmra.mxu0 %v3444
        %v3864 = vpop.f32.mrf.mxu0
        %v3865 = vadd.f32 %v3640, %v3864
        %v3866 = vpop.f32.mrf.mxu0
        %3867 = vmatprep.mubr.f32.mxu0 0.0
        %3868 = vmatmul.mubr.f32.gmra.mxu0 %v3447
        %v3869 = vpop.f32.mrf.mxu0
        %v3870 = vadd.f32 %v3645, %v3869
        %v3871 = vpop.f32.mrf.mxu0
        %3872 = vmatprep.mubr.f32.mxu0 0.0
        %3873 = vmatmul.mubr.f32.gmra.mxu0 %v3450
        %v3874 = vpop.f32.mrf.mxu0
        %v3875 = vadd.f32 %v3650, %v3874
        %v3876 = vpop.f32.mrf.mxu0
        %3877 = vmatprep.mubr.f32.mxu0 0.0
        %3878 = vmatmul.mubr.f32.gmra.mxu0 %v3453
        %v3879 = vpop.f32.mrf.mxu0
        %v3880 = vadd.f32 %v3655, %v3879
        %v3881 = vpop.f32.mrf.mxu0
        %3882 = vmatprep.mubr.f32.mxu0 0.0
        %3883 = vmatmul.mubr.f32.gmra.mxu0 %v3456
        %v3884 = vpop.f32.mrf.mxu0
        %v3885 = vadd.f32 %v3660, %v3884
        %v3886 = vpop.f32.mrf.mxu0
        %3887 = vmatprep.mubr.f32.mxu0 0.0
        %3888 = vmatmul.mubr.f32.gmra.mxu0 %v3459
        %v3889 = vpop.f32.mrf.mxu0
        %v3890 = vadd.f32 %v3665, %v3889
        %v3891 = vpop.f32.mrf.mxu0
        %3892 = vmatprep.mubr.f32.mxu0 0.0
        %3893 = vmatmul.mubr.f32.gmra.mxu0 %v3462
        %v3894 = vpop.f32.mrf.mxu0
        %v3895 = vadd.f32 %v3670, %v3894
        %v3896 = vpop.f32.mrf.mxu0
        %3897 = vmatprep.mubr.f32.mxu0 0.0
        %3898 = vmatmul.mubr.f32.gmra.mxu0 %v3465
        %v3899 = vpop.f32.mrf.mxu0
        %v3900 = vadd.f32 %v3675, %v3899
        %v3901 = vpop.f32.mrf.mxu0
        %3902 = vmatprep.mubr.f32.mxu0 0.0
        %3903 = vmatmul.mubr.f32.gmra.mxu0 %v3468
        %v3904 = vpop.f32.mrf.mxu0
        %v3905 = vadd.f32 %v3680, %v3904
        %v3906 = vpop.f32.mrf.mxu0
        %3907 = vmatprep.mubr.f32.mxu0 0.0
        %3908 = vmatmul.mubr.f32.gmra.mxu0 %v3471
        %v3909 = vpop.f32.mrf.mxu0
        %v3910 = vadd.f32 %v3685, %v3909
        %v3911 = vpop.f32.mrf.mxu0
        %3912 = vmatprep.mubr.f32.mxu0 0.0
        %3913 = vmatmul.mubr.f32.gmra.mxu0 %v3474
        %v3914 = vpop.f32.mrf.mxu0
        %v3915 = vadd.f32 %v3690, %v3914
        %v3916 = vpop.f32.mrf.mxu0
        %3917 = vmatprep.mubr.f32.mxu0 0.0
        %3918 = vmatmul.mubr.f32.gmra.mxu0 %v3477
        %v3919 = vpop.f32.mrf.mxu0
        %v3920 = vadd.f32 %v3695, %v3919
        %v3921 = vpop.f32.mrf.mxu0
        %3922 = vmatprep.mubr.f32.mxu0 0.0
        %3923 = vmatmul.mubr.f32.gmra.mxu0 %v3480
        %v3924 = vpop.f32.mrf.mxu0
        %v3925 = vadd.f32 %v3700, %v3924
        %v3926 = vpop.f32.mrf.mxu0
        %3927 = vmatprep.mubr.f32.mxu0 0.0
        %3928 = vmatmul.mubr.f32.gmra.mxu0 %v3483
        %v3929 = vpop.f32.mrf.mxu0
        %v3930 = vadd.f32 %v3705, %v3929
        %v3931 = vpop.f32.mrf.mxu0
        %3932 = vmatprep.mubr.f32.mxu0 0.0
        %3933 = vmatmul.mubr.f32.gmra.mxu0 %v3486
        %v3934 = vpop.f32.mrf.mxu0
        %v3935 = vadd.f32 %v3710, %v3934
        %v3936 = vpop.f32.mrf.mxu0
        %3937 = vmatprep.mubr.f32.mxu0 0.0
        %3938 = vmatmul.mubr.f32.gmra.mxu0 %v3489
        %v3939 = vpop.f32.mrf.mxu0
        %v3940 = vadd.f32 %v3715, %v3939
        %v3941 = vpop.f32.mrf.mxu0
        %3942 = vmatprep.mubr.f32.mxu0 0.0
        %3943 = vmatmul.mubr.f32.gmra.mxu0 %v3492
        %v3944 = vpop.f32.mrf.mxu0
        %v3945 = vadd.f32 %v3720, %v3944
        %v3946 = vpop.f32.mrf.mxu0
        %3947 = vdwg.mxu0
        %v3948 = vld [vmem:[%s4] sm:$0xff]
        %v3949 = vld [vmem:[%s4 + $0x8] sm:$0xff]
        %v3950 = vld [vmem:[%s4 + $0x10] sm:$0xff]
        %v3951 = vld [vmem:[%s4 + $0x18] sm:$0xff]
        %v3952 = vld [vmem:[%s4 + $0x20] sm:$0xff]
        %v3953 = vld [vmem:[%s4 + $0x28] sm:$0xff]
        %v3954 = vld [vmem:[%s4 + $0x30] sm:$0xff]
        %v3955 = vld [vmem:[%s4 + $0x38] sm:$0xff]
        %v3956 = vld [vmem:[%s4 + $0x40] sm:$0xff]
        %v3957 = vld [vmem:[%s4 + $0x48] sm:$0xff]
        %v3958 = vld [vmem:[%s4 + $0x50] sm:$0xff]
        %v3959 = vld [vmem:[%s4 + $0x58] sm:$0xff]
        %v3960 = vld [vmem:[%s4 + $0x60] sm:$0xff]
        %v3961 = vld [vmem:[%s4 + $0x68] sm:$0xff]
        %v3962 = vld [vmem:[%s4 + $0x70] sm:$0xff]
        %v3963 = vld [vmem:[%s4 + $0x78] sm:$0xff]
        %v3964 = vld [vmem:[%s4 + $0x80] sm:$0xff]
        %v3965 = vld [vmem:[%s4 + $0x88] sm:$0xff]
        %v3966 = vld [vmem:[%s4 + $0x90] sm:$0xff]
        %v3967 = vld [vmem:[%s4 + $0x98] sm:$0xff]
        %v3968 = vld [vmem:[%s4 + $0xa0] sm:$0xff]
        %v3969 = vld [vmem:[%s4 + $0xa8] sm:$0xff]
        %v3970 = vld [vmem:[%s4 + $0xb0] sm:$0xff]
        %v3971 = vld [vmem:[%s4 + $0xb8] sm:$0xff]
        %v3972 = vld [vmem:[%s4 + $0xc0] sm:$0xff]
        %v3973 = vld [vmem:[%s4 + $0xc8] sm:$0xff]
        %v3974 = vld [vmem:[%s4 + $0xd0] sm:$0xff]
        %v3975 = vld [vmem:[%s4 + $0xd8] sm:$0xff]
        %v3976 = vld [vmem:[%s4 + $0xe0] sm:$0xff]
        %v3977 = vld [vmem:[%s4 + $0xe8] sm:$0xff]
        %v3978 = vld [vmem:[%s4 + $0xf0] sm:$0xff]
        %v3979 = vld [vmem:[%s4 + $0xf8] sm:$0xff]
        %v3980 = vld [vmem:[%s4 + $0x100] sm:$0xff]
        %v3981 = vld [vmem:[%s4 + $0x108] sm:$0xff]
        %v3982 = vld [vmem:[%s4 + $0x110] sm:$0xff]
        %v3983 = vld [vmem:[%s4 + $0x118] sm:$0xff]
        %v3984 = vld [vmem:[%s4 + $0x120] sm:$0xff]
        %v3985 = vld [vmem:[%s4 + $0x128] sm:$0xff]
        %v3986 = vld [vmem:[%s4 + $0x130] sm:$0xff]
        %v3987 = vld [vmem:[%s4 + $0x138] sm:$0xff]
        %v3988 = vld [vmem:[%s4 + $0x140] sm:$0xff]
        %v3989 = vld [vmem:[%s4 + $0x148] sm:$0xff]
        %v3990 = vld [vmem:[%s4 + $0x150] sm:$0xff]
        %v3991 = vld [vmem:[%s4 + $0x158] sm:$0xff]
        %v3992 = vld [vmem:[%s4 + $0x160] sm:$0xff]
        %v3993 = vld [vmem:[%s4 + $0x168] sm:$0xff]
        %v3994 = vld [vmem:[%s4 + $0x170] sm:$0xff]
        %v3995 = vld [vmem:[%s4 + $0x178] sm:$0xff]
        %v3996 = vld [vmem:[%s4 + $0x180] sm:$0xff]
        %v3997 = vld [vmem:[%s4 + $0x188] sm:$0xff]
        %v3998 = vld [vmem:[%s4 + $0x190] sm:$0xff]
        %v3999 = vld [vmem:[%s4 + $0x198] sm:$0xff]
        %v4000 = vld [vmem:[%s4 + $0x1a0] sm:$0xff]
        %v4001 = vld [vmem:[%s4 + $0x1a8] sm:$0xff]
        %v4002 = vld [vmem:[%s4 + $0x1b0] sm:$0xff]
        %v4003 = vld [vmem:[%s4 + $0x1b8] sm:$0xff]
        %v4004 = vld [vmem:[%s4 + $0x1c0] sm:$0xff]
        %v4005 = vld [vmem:[%s4 + $0x1c8] sm:$0xff]
        %v4006 = vld [vmem:[%s4 + $0x1d0] sm:$0xff]
        %v4007 = vld [vmem:[%s4 + $0x1d8] sm:$0xff]
        %v4008 = vld [vmem:[%s4 + $0x1e0] sm:$0xff]
        %v4009 = vld [vmem:[%s4 + $0x1e8] sm:$0xff]
        %v4010 = vld [vmem:[%s4 + $0x1f0] sm:$0xff]
        %v4011 = vld [vmem:[%s4 + $0x1f8] sm:$0xff]
        %v4012 = vld [vmem:[%s4 + $0x200] sm:$0xff]
        %v4013 = vld [vmem:[%s4 + $0x208] sm:$0xff]
        %v4014 = vld [vmem:[%s4 + $0x210] sm:$0xff]
        %v4015 = vld [vmem:[%s4 + $0x218] sm:$0xff]
        %v4016 = vld [vmem:[%s4 + $0x220] sm:$0xff]
        %v4017 = vld [vmem:[%s4 + $0x228] sm:$0xff]
        %v4018 = vld [vmem:[%s4 + $0x230] sm:$0xff]
        %v4019 = vld [vmem:[%s4 + $0x238] sm:$0xff]
        %v4020 = vld [vmem:[%s4 + $0x240] sm:$0xff]
        %v4021 = vld [vmem:[%s4 + $0x248] sm:$0xff]
        %v4022 = vld [vmem:[%s4 + $0x250] sm:$0xff]
        %v4023 = vld [vmem:[%s4 + $0x258] sm:$0xff]
        %v4024 = vld [vmem:[%s4 + $0x260] sm:$0xff]
        %v4025 = vld [vmem:[%s4 + $0x268] sm:$0xff]
        %v4026 = vld [vmem:[%s4 + $0x270] sm:$0xff]
        %v4027 = vld [vmem:[%s4 + $0x278] sm:$0xff]
        %v4028 = vld [vmem:[%s4 + $0x280] sm:$0xff]
        %v4029 = vld [vmem:[%s4 + $0x288] sm:$0xff]
        %v4030 = vld [vmem:[%s4 + $0x290] sm:$0xff]
        %v4031 = vld [vmem:[%s4 + $0x298] sm:$0xff]
        %v4032 = vld [vmem:[%s4 + $0x2a0] sm:$0xff]
        %v4033 = vld [vmem:[%s4 + $0x2a8] sm:$0xff]
        %v4034 = vld [vmem:[%s4 + $0x2b0] sm:$0xff]
        %v4035 = vld [vmem:[%s4 + $0x2b8] sm:$0xff]
        %v4036 = vld [vmem:[%s4 + $0x2c0] sm:$0xff]
        %v4037 = vld [vmem:[%s4 + $0x2c8] sm:$0xff]
        %v4038 = vld [vmem:[%s4 + $0x2d0] sm:$0xff]
        %v4039 = vld [vmem:[%s4 + $0x2d8] sm:$0xff]
        %v4040 = vld [vmem:[%s4 + $0x2e0] sm:$0xff]
        %v4041 = vld [vmem:[%s4 + $0x2e8] sm:$0xff]
        %v4042 = vld [vmem:[%s4 + $0x2f0] sm:$0xff]
        %v4043 = vld [vmem:[%s4 + $0x2f8] sm:$0xff]
        %v4045 = vsel %vm3397, %v3950, 0
        %v4048 = vsel %vm3397, %v3953, 0
        %v4051 = vsel %vm3397, %v3956, 0
        %v4054 = vsel %vm3397, %v3959, 0
        %v4057 = vsel %vm3397, %v3962, 0
        %v4060 = vsel %vm3397, %v3965, 0
        %v4063 = vsel %vm3397, %v3968, 0
        %v4066 = vsel %vm3397, %v3971, 0
        %v4069 = vsel %vm3397, %v3974, 0
        %v4072 = vsel %vm3397, %v3977, 0
        %v4075 = vsel %vm3397, %v3980, 0
        %v4078 = vsel %vm3397, %v3983, 0
        %v4081 = vsel %vm3397, %v3986, 0
        %v4084 = vsel %vm3397, %v3989, 0
        %v4087 = vsel %vm3397, %v3992, 0
        %v4090 = vsel %vm3397, %v3995, 0
        %v4093 = vsel %vm3397, %v3998, 0
        %v4096 = vsel %vm3397, %v4001, 0
        %v4099 = vsel %vm3397, %v4004, 0
        %v4102 = vsel %vm3397, %v4007, 0
        %v4105 = vsel %vm3397, %v4010, 0
        %v4108 = vsel %vm3397, %v4013, 0
        %v4111 = vsel %vm3397, %v4016, 0
        %v4114 = vsel %vm3397, %v4019, 0
        %v4117 = vsel %vm3397, %v4022, 0
        %v4120 = vsel %vm3397, %v4025, 0
        %v4123 = vsel %vm3397, %v4028, 0
        %v4126 = vsel %vm3397, %v4031, 0
        %v4129 = vsel %vm3397, %v4034, 0
        %v4132 = vsel %vm3397, %v4037, 0
        %v4135 = vsel %vm3397, %v4040, 0
        %v4138 = vsel %vm3397, %v4043, 0
        %4140 = vmatprep.subr.mxu0 0.0
        %4141 = vmatpush1.msra.mxu0 %v3375
        %4142 = vmatprep.subr.mxu0 0.0
        %4143 = vmatpush1.msra.mxu0 %v3374
        %4144 = vmatprep.subr.mxu0 0.0
        %4145 = vmatpush1.msra.mxu0 %v3373
        %4146 = vmatprep.subr.mxu0 0.0
        %4147 = vmatpush1.msra.mxu0 %v3372
        %4148 = vmatprep.subr.mxu0 0.0
        %4149 = vmatpush1.msra.mxu0 %v3371
        %4150 = vmatprep.subr.mxu0 0.0
        %4151 = vmatpush1.msra.mxu0 %v3370
        %4152 = vmatprep.subr.mxu0 0.0
        %4153 = vmatpush1.msra.mxu0 %v3369
        %4154 = vmatprep.subr.mxu0 0.0
        %4155 = vmatpush1.msra.mxu0 %v3368
        %4156 = vmatprep.subr.mxu0 0.0
        %4157 = vmatpush1.msra.mxu0 %v3367
        %4158 = vmatprep.subr.mxu0 0.0
        %4159 = vmatpush1.msra.mxu0 %v3366
        %4160 = vmatprep.subr.mxu0 0.0
        %4161 = vmatpush1.msra.mxu0 %v3365
        %4162 = vmatprep.subr.mxu0 0.0
        %4163 = vmatpush1.msra.mxu0 %v3364
        %4164 = vmatprep.subr.mxu0 0.0
        %4165 = vmatpush1.msra.mxu0 %v3363
        %4166 = vmatprep.subr.mxu0 0.0
        %4167 = vmatpush1.msra.mxu0 %v3362
        %4168 = vmatprep.subr.mxu0 0.0
        %4169 = vmatpush1.msra.mxu0 %v3361
        %4170 = vmatprep.subr.mxu0 0.0
        %4171 = vmatpush1.msra.mxu0 %v3360
        %4172 = vmatprep.subr.mxu0 0.0
        %4173 = vmatpush2.msra.mxu0 %v3391
        %4174 = vmatprep.subr.mxu0 0.0
        %4175 = vmatpush2.msra.mxu0 %v3390
        %4176 = vmatprep.subr.mxu0 0.0
        %4177 = vmatpush2.msra.mxu0 %v3389
        %4178 = vmatprep.subr.mxu0 0.0
        %4179 = vmatpush2.msra.mxu0 %v3388
        %4180 = vmatprep.subr.mxu0 0.0
        %4181 = vmatpush2.msra.mxu0 %v3387
        %4182 = vmatprep.subr.mxu0 0.0
        %4183 = vmatpush2.msra.mxu0 %v3386
        %4184 = vmatprep.subr.mxu0 0.0
        %4185 = vmatpush2.msra.mxu0 %v3385
        %4186 = vmatprep.subr.mxu0 0.0
        %4187 = vmatpush2.msra.mxu0 %v3384
        %4188 = vmatprep.subr.mxu0 0.0
        %4189 = vmatpush2.msra.mxu0 %v3383
        %4190 = vmatprep.subr.mxu0 0.0
        %4191 = vmatpush2.msra.mxu0 %v3382
        %4192 = vmatprep.subr.mxu0 0.0
        %4193 = vmatpush2.msra.mxu0 %v3381
        %4194 = vmatprep.subr.mxu0 0.0
        %4195 = vmatpush2.msra.mxu0 %v3380
        %4196 = vmatprep.subr.mxu0 0.0
        %4197 = vmatpush2.msra.mxu0 %v3379
        %4198 = vmatprep.subr.mxu0 0.0
        %4199 = vmatpush2.msra.mxu0 %v3378
        %4200 = vmatprep.subr.mxu0 0.0
        %4201 = vmatpush2.msra.mxu0 %v3377
        %4202 = vmatprep.subr.mxu0 0.0
        %4203 = vmatpush2.msra.mxu0 %v3376
        %4204 = vmatprep.mubr.f32.mxu0 %v3949
        %4205 = vmatmul.mubr.f32.gmra.mxu0 %v3948
        %v4206 = vpop.f32.mrf.mxu0
        %v4207 = vadd.f32 0.0, %v4206
        %v4208 = vpop.f32.mrf.mxu0
        %4209 = vmatprep.mubr.f32.mxu0 %v3952
        %4210 = vmatmul.mubr.f32.gmra.mxu0 %v3951
        %v4211 = vpop.f32.mrf.mxu0
        %v4212 = vadd.f32 0.0, %v4211
        %v4213 = vpop.f32.mrf.mxu0
        %4214 = vmatprep.mubr.f32.mxu0 %v3955
        %4215 = vmatmul.mubr.f32.gmra.mxu0 %v3954
        %v4216 = vpop.f32.mrf.mxu0
        %v4217 = vadd.f32 0.0, %v4216
        %v4218 = vpop.f32.mrf.mxu0
        %4219 = vmatprep.mubr.f32.mxu0 %v3958
        %4220 = vmatmul.mubr.f32.gmra.mxu0 %v3957
        %v4221 = vpop.f32.mrf.mxu0
        %v4222 = vadd.f32 0.0, %v4221
        %v4223 = vpop.f32.mrf.mxu0
        %4224 = vmatprep.mubr.f32.mxu0 %v3961
        %4225 = vmatmul.mubr.f32.gmra.mxu0 %v3960
        %v4226 = vpop.f32.mrf.mxu0
        %v4227 = vadd.f32 0.0, %v4226
        %v4228 = vpop.f32.mrf.mxu0
        %4229 = vmatprep.mubr.f32.mxu0 %v3964
        %4230 = vmatmul.mubr.f32.gmra.mxu0 %v3963
        %v4231 = vpop.f32.mrf.mxu0
        %v4232 = vadd.f32 0.0, %v4231
        %v4233 = vpop.f32.mrf.mxu0
        %4234 = vmatprep.mubr.f32.mxu0 %v3967
        %4235 = vmatmul.mubr.f32.gmra.mxu0 %v3966
        %v4236 = vpop.f32.mrf.mxu0
        %v4237 = vadd.f32 0.0, %v4236
        %v4238 = vpop.f32.mrf.mxu0
        %4239 = vmatprep.mubr.f32.mxu0 %v3970
        %4240 = vmatmul.mubr.f32.gmra.mxu0 %v3969
        %v4241 = vpop.f32.mrf.mxu0
        %v4242 = vadd.f32 0.0, %v4241
        %v4243 = vpop.f32.mrf.mxu0
        %4244 = vmatprep.mubr.f32.mxu0 %v3973
        %4245 = vmatmul.mubr.f32.gmra.mxu0 %v3972
        %v4246 = vpop.f32.mrf.mxu0
        %v4247 = vadd.f32 0.0, %v4246
        %v4248 = vpop.f32.mrf.mxu0
        %4249 = vmatprep.mubr.f32.mxu0 %v3976
        %4250 = vmatmul.mubr.f32.gmra.mxu0 %v3975
        %v4251 = vpop.f32.mrf.mxu0
        %v4252 = vadd.f32 0.0, %v4251
        %v4253 = vpop.f32.mrf.mxu0
        %4254 = vmatprep.mubr.f32.mxu0 %v3979
        %4255 = vmatmul.mubr.f32.gmra.mxu0 %v3978
        %v4256 = vpop.f32.mrf.mxu0
        %v4257 = vadd.f32 0.0, %v4256
        %v4258 = vpop.f32.mrf.mxu0
        %4259 = vmatprep.mubr.f32.mxu0 %v3982
        %4260 = vmatmul.mubr.f32.gmra.mxu0 %v3981
        %v4261 = vpop.f32.mrf.mxu0
        %v4262 = vadd.f32 0.0, %v4261
        %v4263 = vpop.f32.mrf.mxu0
        %4264 = vmatprep.mubr.f32.mxu0 %v3985
        %4265 = vmatmul.mubr.f32.gmra.mxu0 %v3984
        %v4266 = vpop.f32.mrf.mxu0
        %v4267 = vadd.f32 0.0, %v4266
        %v4268 = vpop.f32.mrf.mxu0
        %4269 = vmatprep.mubr.f32.mxu0 %v3988
        %4270 = vmatmul.mubr.f32.gmra.mxu0 %v3987
        %v4271 = vpop.f32.mrf.mxu0
        %v4272 = vadd.f32 0.0, %v4271
        %v4273 = vpop.f32.mrf.mxu0
        %4274 = vmatprep.mubr.f32.mxu0 %v3991
        %4275 = vmatmul.mubr.f32.gmra.mxu0 %v3990
        %v4276 = vpop.f32.mrf.mxu0
        %v4277 = vadd.f32 0.0, %v4276
        %v4278 = vpop.f32.mrf.mxu0
        %4279 = vmatprep.mubr.f32.mxu0 %v3994
        %4280 = vmatmul.mubr.f32.gmra.mxu0 %v3993
        %v4281 = vpop.f32.mrf.mxu0
        %v4282 = vadd.f32 0.0, %v4281
        %v4283 = vpop.f32.mrf.mxu0
        %4284 = vmatprep.mubr.f32.mxu0 %v3997
        %4285 = vmatmul.mubr.f32.gmra.mxu0 %v3996
        %v4286 = vpop.f32.mrf.mxu0
        %v4287 = vadd.f32 0.0, %v4286
        %v4288 = vpop.f32.mrf.mxu0
        %4289 = vmatprep.mubr.f32.mxu0 %v4000
        %4290 = vmatmul.mubr.f32.gmra.mxu0 %v3999
        %v4291 = vpop.f32.mrf.mxu0
        %v4292 = vadd.f32 0.0, %v4291
        %v4293 = vpop.f32.mrf.mxu0
        %4294 = vmatprep.mubr.f32.mxu0 %v4003
        %4295 = vmatmul.mubr.f32.gmra.mxu0 %v4002
        %v4296 = vpop.f32.mrf.mxu0
        %v4297 = vadd.f32 0.0, %v4296
        %v4298 = vpop.f32.mrf.mxu0
        %4299 = vmatprep.mubr.f32.mxu0 %v4006
        %4300 = vmatmul.mubr.f32.gmra.mxu0 %v4005
        %v4301 = vpop.f32.mrf.mxu0
        %v4302 = vadd.f32 0.0, %v4301
        %v4303 = vpop.f32.mrf.mxu0
        %4304 = vmatprep.mubr.f32.mxu0 %v4009
        %4305 = vmatmul.mubr.f32.gmra.mxu0 %v4008
        %v4306 = vpop.f32.mrf.mxu0
        %v4307 = vadd.f32 0.0, %v4306
        %v4308 = vpop.f32.mrf.mxu0
        %4309 = vmatprep.mubr.f32.mxu0 %v4012
        %4310 = vmatmul.mubr.f32.gmra.mxu0 %v4011
        %v4311 = vpop.f32.mrf.mxu0
        %v4312 = vadd.f32 0.0, %v4311
        %v4313 = vpop.f32.mrf.mxu0
        %4314 = vmatprep.mubr.f32.mxu0 %v4015
        %4315 = vmatmul.mubr.f32.gmra.mxu0 %v4014
        %v4316 = vpop.f32.mrf.mxu0
        %v4317 = vadd.f32 0.0, %v4316
        %v4318 = vpop.f32.mrf.mxu0
        %4319 = vmatprep.mubr.f32.mxu0 %v4018
        %4320 = vmatmul.mubr.f32.gmra.mxu0 %v4017
        %v4321 = vpop.f32.mrf.mxu0
        %v4322 = vadd.f32 0.0, %v4321
        %v4323 = vpop.f32.mrf.mxu0
        %4324 = vmatprep.mubr.f32.mxu0 %v4021
        %4325 = vmatmul.mubr.f32.gmra.mxu0 %v4020
        %v4326 = vpop.f32.mrf.mxu0
        %v4327 = vadd.f32 0.0, %v4326
        %v4328 = vpop.f32.mrf.mxu0
        %4329 = vmatprep.mubr.f32.mxu0 %v4024
        %4330 = vmatmul.mubr.f32.gmra.mxu0 %v4023
        %v4331 = vpop.f32.mrf.mxu0
        %v4332 = vadd.f32 0.0, %v4331
        %v4333 = vpop.f32.mrf.mxu0
        %4334 = vmatprep.mubr.f32.mxu0 %v4027
        %4335 = vmatmul.mubr.f32.gmra.mxu0 %v4026
        %v4336 = vpop.f32.mrf.mxu0
        %v4337 = vadd.f32 0.0, %v4336
        %v4338 = vpop.f32.mrf.mxu0
        %4339 = vmatprep.mubr.f32.mxu0 %v4030
        %4340 = vmatmul.mubr.f32.gmra.mxu0 %v4029
        %v4341 = vpop.f32.mrf.mxu0
        %v4342 = vadd.f32 0.0, %v4341
        %v4343 = vpop.f32.mrf.mxu0
        %4344 = vmatprep.mubr.f32.mxu0 %v4033
        %4345 = vmatmul.mubr.f32.gmra.mxu0 %v4032
        %v4346 = vpop.f32.mrf.mxu0
        %v4347 = vadd.f32 0.0, %v4346
        %v4348 = vpop.f32.mrf.mxu0
        %4349 = vmatprep.mubr.f32.mxu0 %v4036
        %4350 = vmatmul.mubr.f32.gmra.mxu0 %v4035
        %v4351 = vpop.f32.mrf.mxu0
        %v4352 = vadd.f32 0.0, %v4351
        %v4353 = vpop.f32.mrf.mxu0
        %4354 = vmatprep.mubr.f32.mxu0 %v4039
        %4355 = vmatmul.mubr.f32.gmra.mxu0 %v4038
        %v4356 = vpop.f32.mrf.mxu0
        %v4357 = vadd.f32 0.0, %v4356
        %v4358 = vpop.f32.mrf.mxu0
        %4359 = vmatprep.mubr.f32.mxu0 %v4042
        %4360 = vmatmul.mubr.f32.gmra.mxu0 %v4041
        %v4361 = vpop.f32.mrf.mxu0
        %v4362 = vadd.f32 0.0, %v4361
        %v4363 = vpop.f32.mrf.mxu0
        %4364 = vdwg.mxu0
        %4365 = vmatprep.subr.mxu0 0.0
        %4366 = vmatpush1.msra.mxu0 0.0
        %4367 = vmatprep.subr.mxu0 0.0
        %4368 = vmatpush1.msra.mxu0 0.0
        %4369 = vmatprep.subr.mxu0 0.0
        %4370 = vmatpush1.msra.mxu0 0.0
        %4371 = vmatprep.subr.mxu0 0.0
        %4372 = vmatpush1.msra.mxu0 0.0
        %4373 = vmatprep.subr.mxu0 0.0
        %4374 = vmatpush1.msra.mxu0 0.0
        %4375 = vmatprep.subr.mxu0 0.0
        %4376 = vmatpush1.msra.mxu0 0.0
        %4377 = vmatprep.subr.mxu0 0.0
        %4378 = vmatpush1.msra.mxu0 0.0
        %4379 = vmatprep.subr.mxu0 0.0
        %4380 = vmatpush1.msra.mxu0 0.0
        %4381 = vmatprep.subr.mxu0 0.0
        %4382 = vmatpush1.msra.mxu0 0.0
        %4383 = vmatprep.subr.mxu0 0.0
        %4384 = vmatpush1.msra.mxu0 0.0
        %4385 = vmatprep.subr.mxu0 0.0
        %4386 = vmatpush1.msra.mxu0 0.0
        %4387 = vmatprep.subr.mxu0 0.0
        %4388 = vmatpush1.msra.mxu0 %v3496
        %4389 = vmatprep.subr.mxu0 0.0
        %4390 = vmatpush1.msra.mxu0 %v3395
        %4391 = vmatprep.subr.mxu0 0.0
        %4392 = vmatpush1.msra.mxu0 %v3394
        %4393 = vmatprep.subr.mxu0 0.0
        %4394 = vmatpush1.msra.mxu0 %v3393
        %4395 = vmatprep.subr.mxu0 0.0
        %4396 = vmatpush1.msra.mxu0 %v3392
        %4397 = vmatprep.subr.mxu0 0.0
        %4398 = vmatpush2.msra.mxu0 0.0
        %4399 = vmatprep.subr.mxu0 0.0
        %4400 = vmatpush2.msra.mxu0 0.0
        %4401 = vmatprep.subr.mxu0 0.0
        %4402 = vmatpush2.msra.mxu0 0.0
        %4403 = vmatprep.subr.mxu0 0.0
        %4404 = vmatpush2.msra.mxu0 0.0
        %4405 = vmatprep.subr.mxu0 0.0
        %4406 = vmatpush2.msra.mxu0 0.0
        %4407 = vmatprep.subr.mxu0 0.0
        %4408 = vmatpush2.msra.mxu0 0.0
        %4409 = vmatprep.subr.mxu0 0.0
        %4410 = vmatpush2.msra.mxu0 0.0
        %4411 = vmatprep.subr.mxu0 0.0
        %4412 = vmatpush2.msra.mxu0 0.0
        %4413 = vmatprep.subr.mxu0 0.0
        %4414 = vmatpush2.msra.mxu0 0.0
        %4415 = vmatprep.subr.mxu0 0.0
        %4416 = vmatpush2.msra.mxu0 0.0
        %4417 = vmatprep.subr.mxu0 0.0
        %4418 = vmatpush2.msra.mxu0 0.0
        %4419 = vmatprep.subr.mxu0 0.0
        %4420 = vmatpush2.msra.mxu0 0.0
        %4421 = vmatprep.subr.mxu0 0.0
        %4422 = vmatpush2.msra.mxu0 0.0
        %4423 = vmatprep.subr.mxu0 0.0
        %4424 = vmatpush2.msra.mxu0 0.0
        %4425 = vmatprep.subr.mxu0 0.0
        %4426 = vmatpush2.msra.mxu0 0.0
        %4427 = vmatprep.subr.mxu0 0.0
        %4428 = vmatpush2.msra.mxu0 0.0
        %4429 = vmatprep.mubr.f32.mxu0 0.0
        %4430 = vmatmul.mubr.f32.gmra.mxu0 %v4045
        %v4431 = vpop.f32.mrf.mxu0
        %v4432 = vadd.f32 %v4207, %v4431
        %v4433 = vpop.f32.mrf.mxu0
        %4434 = vmatprep.mubr.f32.mxu0 0.0
        %4435 = vmatmul.mubr.f32.gmra.mxu0 %v4048
        %v4436 = vpop.f32.mrf.mxu0
        %v4437 = vadd.f32 %v4212, %v4436
        %v4438 = vpop.f32.mrf.mxu0
        %4439 = vmatprep.mubr.f32.mxu0 0.0
        %4440 = vmatmul.mubr.f32.gmra.mxu0 %v4051
        %v4441 = vpop.f32.mrf.mxu0
        %v4442 = vadd.f32 %v4217, %v4441
        %v4443 = vpop.f32.mrf.mxu0
        %4444 = vmatprep.mubr.f32.mxu0 0.0
        %4445 = vmatmul.mubr.f32.gmra.mxu0 %v4054
        %v4446 = vpop.f32.mrf.mxu0
        %v4447 = vadd.f32 %v4222, %v4446
        %v4448 = vpop.f32.mrf.mxu0
        %4449 = vmatprep.mubr.f32.mxu0 0.0
        %4450 = vmatmul.mubr.f32.gmra.mxu0 %v4057
        %v4451 = vpop.f32.mrf.mxu0
        %v4452 = vadd.f32 %v4227, %v4451
        %v4453 = vpop.f32.mrf.mxu0
        %4454 = vmatprep.mubr.f32.mxu0 0.0
        %4455 = vmatmul.mubr.f32.gmra.mxu0 %v4060
        %v4456 = vpop.f32.mrf.mxu0
        %v4457 = vadd.f32 %v4232, %v4456
        %v4458 = vpop.f32.mrf.mxu0
        %4459 = vmatprep.mubr.f32.mxu0 0.0
        %4460 = vmatmul.mubr.f32.gmra.mxu0 %v4063
        %v4461 = vpop.f32.mrf.mxu0
        %v4462 = vadd.f32 %v4237, %v4461
        %v4463 = vpop.f32.mrf.mxu0
        %4464 = vmatprep.mubr.f32.mxu0 0.0
        %4465 = vmatmul.mubr.f32.gmra.mxu0 %v4066
        %v4466 = vpop.f32.mrf.mxu0
        %v4467 = vadd.f32 %v4242, %v4466
        %v4468 = vpop.f32.mrf.mxu0
        %4469 = vmatprep.mubr.f32.mxu0 0.0
        %4470 = vmatmul.mubr.f32.gmra.mxu0 %v4069
        %v4471 = vpop.f32.mrf.mxu0
        %v4472 = vadd.f32 %v4247, %v4471
        %v4473 = vpop.f32.mrf.mxu0
        %4474 = vmatprep.mubr.f32.mxu0 0.0
        %4475 = vmatmul.mubr.f32.gmra.mxu0 %v4072
        %v4476 = vpop.f32.mrf.mxu0
        %v4477 = vadd.f32 %v4252, %v4476
        %v4478 = vpop.f32.mrf.mxu0
        %4479 = vmatprep.mubr.f32.mxu0 0.0
        %4480 = vmatmul.mubr.f32.gmra.mxu0 %v4075
        %v4481 = vpop.f32.mrf.mxu0
        %v4482 = vadd.f32 %v4257, %v4481
        %v4483 = vpop.f32.mrf.mxu0
        %4484 = vmatprep.mubr.f32.mxu0 0.0
        %4485 = vmatmul.mubr.f32.gmra.mxu0 %v4078
        %v4486 = vpop.f32.mrf.mxu0
        %v4487 = vadd.f32 %v4262, %v4486
        %v4488 = vpop.f32.mrf.mxu0
        %4489 = vmatprep.mubr.f32.mxu0 0.0
        %4490 = vmatmul.mubr.f32.gmra.mxu0 %v4081
        %v4491 = vpop.f32.mrf.mxu0
        %v4492 = vadd.f32 %v4267, %v4491
        %v4493 = vpop.f32.mrf.mxu0
        %4494 = vmatprep.mubr.f32.mxu0 0.0
        %4495 = vmatmul.mubr.f32.gmra.mxu0 %v4084
        %v4496 = vpop.f32.mrf.mxu0
        %v4497 = vadd.f32 %v4272, %v4496
        %v4498 = vpop.f32.mrf.mxu0
        %4499 = vmatprep.mubr.f32.mxu0 0.0
        %4500 = vmatmul.mubr.f32.gmra.mxu0 %v4087
        %v4501 = vpop.f32.mrf.mxu0
        %v4502 = vadd.f32 %v4277, %v4501
        %v4503 = vpop.f32.mrf.mxu0
        %4504 = vmatprep.mubr.f32.mxu0 0.0
        %4505 = vmatmul.mubr.f32.gmra.mxu0 %v4090
        %v4506 = vpop.f32.mrf.mxu0
        %v4507 = vadd.f32 %v4282, %v4506
        %v4508 = vpop.f32.mrf.mxu0
        %4509 = vmatprep.mubr.f32.mxu0 0.0
        %4510 = vmatmul.mubr.f32.gmra.mxu0 %v4093
        %v4511 = vpop.f32.mrf.mxu0
        %v4512 = vadd.f32 %v4287, %v4511
        %v4513 = vpop.f32.mrf.mxu0
        %4514 = vmatprep.mubr.f32.mxu0 0.0
        %4515 = vmatmul.mubr.f32.gmra.mxu0 %v4096
        %v4516 = vpop.f32.mrf.mxu0
        %v4517 = vadd.f32 %v4292, %v4516
        %v4518 = vpop.f32.mrf.mxu0
        %4519 = vmatprep.mubr.f32.mxu0 0.0
        %4520 = vmatmul.mubr.f32.gmra.mxu0 %v4099
        %v4521 = vpop.f32.mrf.mxu0
        %v4522 = vadd.f32 %v4297, %v4521
        %v4523 = vpop.f32.mrf.mxu0
        %4524 = vmatprep.mubr.f32.mxu0 0.0
        %4525 = vmatmul.mubr.f32.gmra.mxu0 %v4102
        %v4526 = vpop.f32.mrf.mxu0
        %v4527 = vadd.f32 %v4302, %v4526
        %v4528 = vpop.f32.mrf.mxu0
        %4529 = vmatprep.mubr.f32.mxu0 0.0
        %4530 = vmatmul.mubr.f32.gmra.mxu0 %v4105
        %v4531 = vpop.f32.mrf.mxu0
        %v4532 = vadd.f32 %v4307, %v4531
        %v4533 = vpop.f32.mrf.mxu0
        %4534 = vmatprep.mubr.f32.mxu0 0.0
        %4535 = vmatmul.mubr.f32.gmra.mxu0 %v4108
        %v4536 = vpop.f32.mrf.mxu0
        %v4537 = vadd.f32 %v4312, %v4536
        %v4538 = vpop.f32.mrf.mxu0
        %4539 = vmatprep.mubr.f32.mxu0 0.0
        %4540 = vmatmul.mubr.f32.gmra.mxu0 %v4111
        %v4541 = vpop.f32.mrf.mxu0
        %v4542 = vadd.f32 %v4317, %v4541
        %v4543 = vpop.f32.mrf.mxu0
        %4544 = vmatprep.mubr.f32.mxu0 0.0
        %4545 = vmatmul.mubr.f32.gmra.mxu0 %v4114
        %v4546 = vpop.f32.mrf.mxu0
        %v4547 = vadd.f32 %v4322, %v4546
        %v4548 = vpop.f32.mrf.mxu0
        %4549 = vmatprep.mubr.f32.mxu0 0.0
        %4550 = vmatmul.mubr.f32.gmra.mxu0 %v4117
        %v4551 = vpop.f32.mrf.mxu0
        %v4552 = vadd.f32 %v4327, %v4551
        %v4553 = vpop.f32.mrf.mxu0
        %4554 = vmatprep.mubr.f32.mxu0 0.0
        %4555 = vmatmul.mubr.f32.gmra.mxu0 %v4120
        %v4556 = vpop.f32.mrf.mxu0
        %v4557 = vadd.f32 %v4332, %v4556
        %v4558 = vpop.f32.mrf.mxu0
        %4559 = vmatprep.mubr.f32.mxu0 0.0
        %4560 = vmatmul.mubr.f32.gmra.mxu0 %v4123
        %v4561 = vpop.f32.mrf.mxu0
        %v4562 = vadd.f32 %v4337, %v4561
        %v4563 = vpop.f32.mrf.mxu0
        %4564 = vmatprep.mubr.f32.mxu0 0.0
        %4565 = vmatmul.mubr.f32.gmra.mxu0 %v4126
        %v4566 = vpop.f32.mrf.mxu0
        %v4567 = vadd.f32 %v4342, %v4566
        %v4568 = vpop.f32.mrf.mxu0
        %4569 = vmatprep.mubr.f32.mxu0 0.0
        %4570 = vmatmul.mubr.f32.gmra.mxu0 %v4129
        %v4571 = vpop.f32.mrf.mxu0
        %v4572 = vadd.f32 %v4347, %v4571
        %v4573 = vpop.f32.mrf.mxu0
        %4574 = vmatprep.mubr.f32.mxu0 0.0
        %4575 = vmatmul.mubr.f32.gmra.mxu0 %v4132
        %v4576 = vpop.f32.mrf.mxu0
        %v4577 = vadd.f32 %v4352, %v4576
        %v4578 = vpop.f32.mrf.mxu0
        %4579 = vmatprep.mubr.f32.mxu0 0.0
        %4580 = vmatmul.mubr.f32.gmra.mxu0 %v4135
        %v4581 = vpop.f32.mrf.mxu0
        %v4582 = vadd.f32 %v4357, %v4581
        %v4583 = vpop.f32.mrf.mxu0
        %4584 = vmatprep.mubr.f32.mxu0 0.0
        %4585 = vmatmul.mubr.f32.gmra.mxu0 %v4138
        %v4586 = vpop.f32.mrf.mxu0
        %v4587 = vadd.f32 %v4362, %v4586
        %v4588 = vpop.f32.mrf.mxu0
        %4589 = vdwg.mxu0
        %v4590 = vlaneseq
        %v4591 = vand.u32 %v4590, 127
        %v4592 = vand.u32 %v4591, 8
        %vm4593 = vcmp.eq.s32.totalorder %v4592, 0
        %v4594 = vsel %vm4593, %v3790, %v4432
        %v4595 = vsel %vm4593, %v3795, %v4437
        %v4596 = vsel %vm4593, %v3800, %v4442
        %v4597 = vsel %vm4593, %v3805, %v4447
        %v4598 = vsel %vm4593, %v3810, %v4452
        %v4599 = vsel %vm4593, %v3815, %v4457
        %v4600 = vsel %vm4593, %v3820, %v4462
        %v4601 = vsel %vm4593, %v3825, %v4467
        %v4602 = vsel %vm4593, %v3830, %v4472
        %v4603 = vsel %vm4593, %v3835, %v4477
        %v4604 = vsel %vm4593, %v3840, %v4482
        %v4605 = vsel %vm4593, %v3845, %v4487
        %v4606 = vsel %vm4593, %v3850, %v4492
        %v4607 = vsel %vm4593, %v3855, %v4497
        %v4608 = vsel %vm4593, %v3860, %v4502
        %v4609 = vsel %vm4593, %v3865, %v4507
        %v4610 = vsel %vm4593, %v3870, %v4512
        %v4611 = vsel %vm4593, %v3875, %v4517
        %v4612 = vsel %vm4593, %v3880, %v4522
        %v4613 = vsel %vm4593, %v3885, %v4527
        %v4614 = vsel %vm4593, %v3890, %v4532
        %v4615 = vsel %vm4593, %v3895, %v4537
        %v4616 = vsel %vm4593, %v3900, %v4542
        %v4617 = vsel %vm4593, %v3905, %v4547
        %v4618 = vsel %vm4593, %v3910, %v4552
        %v4619 = vsel %vm4593, %v3915, %v4557
        %v4620 = vsel %vm4593, %v3920, %v4562
        %v4621 = vsel %vm4593, %v3925, %v4567
        %v4622 = vsel %vm4593, %v3930, %v4572
        %v4623 = vsel %vm4593, %v3935, %v4577
        %v4624 = vsel %vm4593, %v3940, %v4582
        %v4625 = vsel %vm4593, %v3945, %v4587
        %v4626 = vld [vmem:[%s10] sm:$0xff]
        %v4627 = vld [vmem:[%s10 + $0x8] sm:$0xff]
        %v4628 = vld [vmem:[%s10 + $0x10] sm:$0xff]
        %v4629 = vld [vmem:[%s10 + $0x18] sm:$0xff]
        %s4630 = scalar_lea.vmem %s10, 32
        %v4631 = vld [vmem:[%s4630] sm:$0xff]
        %v4632 = vld [vmem:[%s4630 + $0x8] sm:$0xff]
        %v4633 = vld [vmem:[%s4630 + $0x10] sm:$0xff]
        %v4634 = vld [vmem:[%s4630 + $0x18] sm:$0xff]
        %v4636 = vsel %vm3225, %v4602, 0
        %v4639 = vsel %vm3225, %v4603, 0
        %v4642 = vsel %vm3225, %v4604, 0
        %v4645 = vsel %vm3225, %v4605, 0
        %v4648 = vsel %vm3225, %v4606, 0
        %v4651 = vsel %vm3225, %v4607, 0
        %v4654 = vsel %vm3225, %v4608, 0
        %v4657 = vsel %vm3225, %v4609, 0
        %4659 = vmatprep.subr.mxu0 0.0
        %4660 = vmatpush1.msra.mxu0 0.0
        %4661 = vmatprep.subr.mxu0 0.0
        %4662 = vmatpush1.msra.mxu0 0.0
        %4663 = vmatprep.subr.mxu0 0.0
        %4664 = vmatpush1.msra.mxu0 0.0
        %4665 = vmatprep.subr.mxu0 0.0
        %4666 = vmatpush1.msra.mxu0 0.0
        %4667 = vmatprep.subr.mxu0 0.0
        %4668 = vmatpush1.msra.mxu0 0.0
        %4669 = vmatprep.subr.mxu0 0.0
        %4670 = vmatpush1.msra.mxu0 0.0
        %4671 = vmatprep.subr.mxu0 0.0
        %4672 = vmatpush1.msra.mxu0 0.0
        %4673 = vmatprep.subr.mxu0 0.0
        %4674 = vmatpush1.msra.mxu0 0.0
        %4675 = vmatprep.subr.mxu0 0.0
        %4676 = vmatpush1.msra.mxu0 0.0
        %4677 = vmatprep.subr.mxu0 0.0
        %4678 = vmatpush1.msra.mxu0 0.0
        %4679 = vmatprep.subr.mxu0 0.0
        %4680 = vmatpush1.msra.mxu0 0.0
        %4681 = vmatprep.subr.mxu0 0.0
        %4682 = vmatpush1.msra.mxu0 0.0
        %4683 = vmatprep.subr.mxu0 0.0
        %4684 = vmatpush1.msra.mxu0 %v4634
        %4685 = vmatprep.subr.mxu0 0.0
        %4686 = vmatpush1.msra.mxu0 %v4633
        %4687 = vmatprep.subr.mxu0 0.0
        %4688 = vmatpush1.msra.mxu0 %v4632
        %4689 = vmatprep.subr.mxu0 0.0
        %4690 = vmatpush1.msra.mxu0 %v4631
        %4691 = vmatprep.subr.mxu0 0.0
        %4692 = vmatpush2.msra.mxu0 0.0
        %4693 = vmatprep.subr.mxu0 0.0
        %4694 = vmatpush2.msra.mxu0 0.0
        %4695 = vmatprep.subr.mxu0 0.0
        %4696 = vmatpush2.msra.mxu0 0.0
        %4697 = vmatprep.subr.mxu0 0.0
        %4698 = vmatpush2.msra.mxu0 0.0
        %4699 = vmatprep.subr.mxu0 0.0
        %4700 = vmatpush2.msra.mxu0 0.0
        %4701 = vmatprep.subr.mxu0 0.0
        %4702 = vmatpush2.msra.mxu0 0.0
        %4703 = vmatprep.subr.mxu0 0.0
        %4704 = vmatpush2.msra.mxu0 0.0
        %4705 = vmatprep.subr.mxu0 0.0
        %4706 = vmatpush2.msra.mxu0 0.0
        %4707 = vmatprep.subr.mxu0 0.0
        %4708 = vmatpush2.msra.mxu0 0.0
        %4709 = vmatprep.subr.mxu0 0.0
        %4710 = vmatpush2.msra.mxu0 0.0
        %4711 = vmatprep.subr.mxu0 0.0
        %4712 = vmatpush2.msra.mxu0 0.0
        %4713 = vmatprep.subr.mxu0 0.0
        %4714 = vmatpush2.msra.mxu0 0.0
        %4715 = vmatprep.subr.mxu0 0.0
        %4716 = vmatpush2.msra.mxu0 0.0
        %4717 = vmatprep.subr.mxu0 0.0
        %4718 = vmatpush2.msra.mxu0 0.0
        %4719 = vmatprep.subr.mxu0 0.0
        %4720 = vmatpush2.msra.mxu0 0.0
        %4721 = vmatprep.subr.mxu0 0.0
        %4722 = vmatpush2.msra.mxu0 0.0
        %4723 = vmatprep.mubr.f32.mxu0 0.0
        %4724 = vmatmul.mubr.f32.gmra.mxu0 %v4636
        %v4725 = vpop.f32.mrf.mxu0
        %v4726 = vadd.f32 0.0, %v4725
        %v4727 = vpop.f32.mrf.mxu0
        %4728 = vmatprep.mubr.f32.mxu0 0.0
        %4729 = vmatmul.mubr.f32.gmra.mxu0 %v4639
        %v4730 = vpop.f32.mrf.mxu0
        %v4731 = vadd.f32 0.0, %v4730
        %v4732 = vpop.f32.mrf.mxu0
        %4733 = vmatprep.mubr.f32.mxu0 0.0
        %4734 = vmatmul.mubr.f32.gmra.mxu0 %v4642
        %v4735 = vpop.f32.mrf.mxu0
        %v4736 = vadd.f32 0.0, %v4735
        %v4737 = vpop.f32.mrf.mxu0
        %4738 = vmatprep.mubr.f32.mxu0 0.0
        %4739 = vmatmul.mubr.f32.gmra.mxu0 %v4645
        %v4740 = vpop.f32.mrf.mxu0
        %v4741 = vadd.f32 0.0, %v4740
        %v4742 = vpop.f32.mrf.mxu0
        %4743 = vmatprep.mubr.f32.mxu0 0.0
        %4744 = vmatmul.mubr.f32.gmra.mxu0 %v4648
        %v4745 = vpop.f32.mrf.mxu0
        %v4746 = vadd.f32 0.0, %v4745
        %v4747 = vpop.f32.mrf.mxu0
        %4748 = vmatprep.mubr.f32.mxu0 0.0
        %4749 = vmatmul.mubr.f32.gmra.mxu0 %v4651
        %v4750 = vpop.f32.mrf.mxu0
        %v4751 = vadd.f32 0.0, %v4750
        %v4752 = vpop.f32.mrf.mxu0
        %4753 = vmatprep.mubr.f32.mxu0 0.0
        %4754 = vmatmul.mubr.f32.gmra.mxu0 %v4654
        %v4755 = vpop.f32.mrf.mxu0
        %v4756 = vadd.f32 0.0, %v4755
        %v4757 = vpop.f32.mrf.mxu0
        %4758 = vmatprep.mubr.f32.mxu0 0.0
        %4759 = vmatmul.mubr.f32.gmra.mxu0 %v4657
        %v4760 = vpop.f32.mrf.mxu0
        %v4761 = vadd.f32 0.0, %v4760
        %v4762 = vpop.f32.mrf.mxu0
        %4763 = vdwg.mxu0
        %v4765 = vsel %vm3225, %v4594, 0
        %v4768 = vsel %vm3225, %v4595, 0
        %v4771 = vsel %vm3225, %v4596, 0
        %v4774 = vsel %vm3225, %v4597, 0
        %v4777 = vsel %vm3225, %v4598, 0
        %v4780 = vsel %vm3225, %v4599, 0
        %v4783 = vsel %vm3225, %v4600, 0
        %v4786 = vsel %vm3225, %v4601, 0
        %4788 = vmatprep.subr.mxu0 0.0
        %4789 = vmatpush1.msra.mxu0 0.0
        %4790 = vmatprep.subr.mxu0 0.0
        %4791 = vmatpush1.msra.mxu0 0.0
        %4792 = vmatprep.subr.mxu0 0.0
        %4793 = vmatpush1.msra.mxu0 0.0
        %4794 = vmatprep.subr.mxu0 0.0
        %4795 = vmatpush1.msra.mxu0 0.0
        %4796 = vmatprep.subr.mxu0 0.0
        %4797 = vmatpush1.msra.mxu0 0.0
        %4798 = vmatprep.subr.mxu0 0.0
        %4799 = vmatpush1.msra.mxu0 0.0
        %4800 = vmatprep.subr.mxu0 0.0
        %4801 = vmatpush1.msra.mxu0 0.0
        %4802 = vmatprep.subr.mxu0 0.0
        %4803 = vmatpush1.msra.mxu0 0.0
        %4804 = vmatprep.subr.mxu0 0.0
        %4805 = vmatpush1.msra.mxu0 0.0
        %4806 = vmatprep.subr.mxu0 0.0
        %4807 = vmatpush1.msra.mxu0 0.0
        %4808 = vmatprep.subr.mxu0 0.0
        %4809 = vmatpush1.msra.mxu0 0.0
        %4810 = vmatprep.subr.mxu0 0.0
        %4811 = vmatpush1.msra.mxu0 0.0
        %4812 = vmatprep.subr.mxu0 0.0
        %4813 = vmatpush1.msra.mxu0 %v4629
        %4814 = vmatprep.subr.mxu0 0.0
        %4815 = vmatpush1.msra.mxu0 %v4628
        %4816 = vmatprep.subr.mxu0 0.0
        %4817 = vmatpush1.msra.mxu0 %v4627
        %4818 = vmatprep.subr.mxu0 0.0
        %4819 = vmatpush1.msra.mxu0 %v4626
        %4820 = vmatprep.subr.mxu0 0.0
        %4821 = vmatpush2.msra.mxu0 0.0
        %4822 = vmatprep.subr.mxu0 0.0
        %4823 = vmatpush2.msra.mxu0 0.0
        %4824 = vmatprep.subr.mxu0 0.0
        %4825 = vmatpush2.msra.mxu0 0.0
        %4826 = vmatprep.subr.mxu0 0.0
        %4827 = vmatpush2.msra.mxu0 0.0
        %4828 = vmatprep.subr.mxu0 0.0
        %4829 = vmatpush2.msra.mxu0 0.0
        %4830 = vmatprep.subr.mxu0 0.0
        %4831 = vmatpush2.msra.mxu0 0.0
        %4832 = vmatprep.subr.mxu0 0.0
        %4833 = vmatpush2.msra.mxu0 0.0
        %4834 = vmatprep.subr.mxu0 0.0
        %4835 = vmatpush2.msra.mxu0 0.0
        %4836 = vmatprep.subr.mxu0 0.0
        %4837 = vmatpush2.msra.mxu0 0.0
        %4838 = vmatprep.subr.mxu0 0.0
        %4839 = vmatpush2.msra.mxu0 0.0
        %4840 = vmatprep.subr.mxu0 0.0
        %4841 = vmatpush2.msra.mxu0 0.0
        %4842 = vmatprep.subr.mxu0 0.0
        %4843 = vmatpush2.msra.mxu0 0.0
        %4844 = vmatprep.subr.mxu0 0.0
        %4845 = vmatpush2.msra.mxu0 0.0
        %4846 = vmatprep.subr.mxu0 0.0
        %4847 = vmatpush2.msra.mxu0 0.0
        %4848 = vmatprep.subr.mxu0 0.0
        %4849 = vmatpush2.msra.mxu0 0.0
        %4850 = vmatprep.subr.mxu0 0.0
        %4851 = vmatpush2.msra.mxu0 0.0
        %4852 = vmatprep.mubr.f32.mxu0 0.0
        %4853 = vmatmul.mubr.f32.gmra.mxu0 %v4765
        %v4854 = vpop.f32.mrf.mxu0
        %v4855 = vadd.f32 %v4726, %v4854
        %v4856 = vpop.f32.mrf.mxu0
        %4857 = vmatprep.mubr.f32.mxu0 0.0
        %4858 = vmatmul.mubr.f32.gmra.mxu0 %v4768
        %v4859 = vpop.f32.mrf.mxu0
        %v4860 = vadd.f32 %v4731, %v4859
        %v4861 = vpop.f32.mrf.mxu0
        %4862 = vmatprep.mubr.f32.mxu0 0.0
        %4863 = vmatmul.mubr.f32.gmra.mxu0 %v4771
        %v4864 = vpop.f32.mrf.mxu0
        %v4865 = vadd.f32 %v4736, %v4864
        %v4866 = vpop.f32.mrf.mxu0
        %4867 = vmatprep.mubr.f32.mxu0 0.0
        %4868 = vmatmul.mubr.f32.gmra.mxu0 %v4774
        %v4869 = vpop.f32.mrf.mxu0
        %v4870 = vadd.f32 %v4741, %v4869
        %v4871 = vpop.f32.mrf.mxu0
        %4872 = vmatprep.mubr.f32.mxu0 0.0
        %4873 = vmatmul.mubr.f32.gmra.mxu0 %v4777
        %v4874 = vpop.f32.mrf.mxu0
        %v4875 = vadd.f32 %v4746, %v4874
        %v4876 = vpop.f32.mrf.mxu0
        %4877 = vmatprep.mubr.f32.mxu0 0.0
        %4878 = vmatmul.mubr.f32.gmra.mxu0 %v4780
        %v4879 = vpop.f32.mrf.mxu0
        %v4880 = vadd.f32 %v4751, %v4879
        %v4881 = vpop.f32.mrf.mxu0
        %4882 = vmatprep.mubr.f32.mxu0 0.0
        %4883 = vmatmul.mubr.f32.gmra.mxu0 %v4783
        %v4884 = vpop.f32.mrf.mxu0
        %v4885 = vadd.f32 %v4756, %v4884
        %v4886 = vpop.f32.mrf.mxu0
        %4887 = vmatprep.mubr.f32.mxu0 0.0
        %4888 = vmatmul.mubr.f32.gmra.mxu0 %v4786
        %v4889 = vpop.f32.mrf.mxu0
        %v4890 = vadd.f32 %v4761, %v4889
        %v4891 = vpop.f32.mrf.mxu0
        %4892 = vdwg.mxu0
        %s4893 = scalar_lea.vmem %s10, 64
        %v4894 = vld [vmem:[%s4893] sm:$0xff]
        %v4895 = vld [vmem:[%s4893 + $0x8] sm:$0xff]
        %v4896 = vld [vmem:[%s4893 + $0x10] sm:$0xff]
        %v4897 = vld [vmem:[%s4893 + $0x18] sm:$0xff]
        %v4899 = vsel %vm3225, %v4610, 0
        %v4902 = vsel %vm3225, %v4611, 0
        %v4905 = vsel %vm3225, %v4612, 0
        %v4908 = vsel %vm3225, %v4613, 0
        %v4911 = vsel %vm3225, %v4614, 0
        %v4914 = vsel %vm3225, %v4615, 0
        %v4917 = vsel %vm3225, %v4616, 0
        %v4920 = vsel %vm3225, %v4617, 0
        %4922 = vmatprep.subr.mxu0 0.0
        %4923 = vmatpush1.msra.mxu0 0.0
        %4924 = vmatprep.subr.mxu0 0.0
        %4925 = vmatpush1.msra.mxu0 0.0
        %4926 = vmatprep.subr.mxu0 0.0
        %4927 = vmatpush1.msra.mxu0 0.0
        %4928 = vmatprep.subr.mxu0 0.0
        %4929 = vmatpush1.msra.mxu0 0.0
        %4930 = vmatprep.subr.mxu0 0.0
        %4931 = vmatpush1.msra.mxu0 0.0
        %4932 = vmatprep.subr.mxu0 0.0
        %4933 = vmatpush1.msra.mxu0 0.0
        %4934 = vmatprep.subr.mxu0 0.0
        %4935 = vmatpush1.msra.mxu0 0.0
        %4936 = vmatprep.subr.mxu0 0.0
        %4937 = vmatpush1.msra.mxu0 0.0
        %4938 = vmatprep.subr.mxu0 0.0
        %4939 = vmatpush1.msra.mxu0 0.0
        %4940 = vmatprep.subr.mxu0 0.0
        %4941 = vmatpush1.msra.mxu0 0.0
        %4942 = vmatprep.subr.mxu0 0.0
        %4943 = vmatpush1.msra.mxu0 0.0
        %4944 = vmatprep.subr.mxu0 0.0
        %4945 = vmatpush1.msra.mxu0 0.0
        %4946 = vmatprep.subr.mxu0 0.0
        %4947 = vmatpush1.msra.mxu0 %v4897
        %4948 = vmatprep.subr.mxu0 0.0
        %4949 = vmatpush1.msra.mxu0 %v4896
        %4950 = vmatprep.subr.mxu0 0.0
        %4951 = vmatpush1.msra.mxu0 %v4895
        %4952 = vmatprep.subr.mxu0 0.0
        %4953 = vmatpush1.msra.mxu0 %v4894
        %4954 = vmatprep.subr.mxu0 0.0
        %4955 = vmatpush2.msra.mxu0 0.0
        %4956 = vmatprep.subr.mxu0 0.0
        %4957 = vmatpush2.msra.mxu0 0.0
        %4958 = vmatprep.subr.mxu0 0.0
        %4959 = vmatpush2.msra.mxu0 0.0
        %4960 = vmatprep.subr.mxu0 0.0
        %4961 = vmatpush2.msra.mxu0 0.0
        %4962 = vmatprep.subr.mxu0 0.0
        %4963 = vmatpush2.msra.mxu0 0.0
        %4964 = vmatprep.subr.mxu0 0.0
        %4965 = vmatpush2.msra.mxu0 0.0
        %4966 = vmatprep.subr.mxu0 0.0
        %4967 = vmatpush2.msra.mxu0 0.0
        %4968 = vmatprep.subr.mxu0 0.0
        %4969 = vmatpush2.msra.mxu0 0.0
        %4970 = vmatprep.subr.mxu0 0.0
        %4971 = vmatpush2.msra.mxu0 0.0
        %4972 = vmatprep.subr.mxu0 0.0
        %4973 = vmatpush2.msra.mxu0 0.0
        %4974 = vmatprep.subr.mxu0 0.0
        %4975 = vmatpush2.msra.mxu0 0.0
        %4976 = vmatprep.subr.mxu0 0.0
        %4977 = vmatpush2.msra.mxu0 0.0
        %4978 = vmatprep.subr.mxu0 0.0
        %4979 = vmatpush2.msra.mxu0 0.0
        %4980 = vmatprep.subr.mxu0 0.0
        %4981 = vmatpush2.msra.mxu0 0.0
        %4982 = vmatprep.subr.mxu0 0.0
        %4983 = vmatpush2.msra.mxu0 0.0
        %4984 = vmatprep.subr.mxu0 0.0
        %4985 = vmatpush2.msra.mxu0 0.0
        %4986 = vmatprep.mubr.f32.mxu0 0.0
        %4987 = vmatmul.mubr.f32.gmra.mxu0 %v4899
        %v4988 = vpop.f32.mrf.mxu0
        %v4989 = vadd.f32 0.0, %v4988
        %v4990 = vpop.f32.mrf.mxu0
        %4991 = vmatprep.mubr.f32.mxu0 0.0
        %4992 = vmatmul.mubr.f32.gmra.mxu0 %v4902
        %v4993 = vpop.f32.mrf.mxu0
        %v4994 = vadd.f32 0.0, %v4993
        %v4995 = vpop.f32.mrf.mxu0
        %4996 = vmatprep.mubr.f32.mxu0 0.0
        %4997 = vmatmul.mubr.f32.gmra.mxu0 %v4905
        %v4998 = vpop.f32.mrf.mxu0
        %v4999 = vadd.f32 0.0, %v4998
        %v5000 = vpop.f32.mrf.mxu0
        %5001 = vmatprep.mubr.f32.mxu0 0.0
        %5002 = vmatmul.mubr.f32.gmra.mxu0 %v4908
        %v5003 = vpop.f32.mrf.mxu0
        %v5004 = vadd.f32 0.0, %v5003
        %v5005 = vpop.f32.mrf.mxu0
        %5006 = vmatprep.mubr.f32.mxu0 0.0
        %5007 = vmatmul.mubr.f32.gmra.mxu0 %v4911
        %v5008 = vpop.f32.mrf.mxu0
        %v5009 = vadd.f32 0.0, %v5008
        %v5010 = vpop.f32.mrf.mxu0
        %5011 = vmatprep.mubr.f32.mxu0 0.0
        %5012 = vmatmul.mubr.f32.gmra.mxu0 %v4914
        %v5013 = vpop.f32.mrf.mxu0
        %v5014 = vadd.f32 0.0, %v5013
        %v5015 = vpop.f32.mrf.mxu0
        %5016 = vmatprep.mubr.f32.mxu0 0.0
        %5017 = vmatmul.mubr.f32.gmra.mxu0 %v4917
        %v5018 = vpop.f32.mrf.mxu0
        %v5019 = vadd.f32 0.0, %v5018
        %v5020 = vpop.f32.mrf.mxu0
        %5021 = vmatprep.mubr.f32.mxu0 0.0
        %5022 = vmatmul.mubr.f32.gmra.mxu0 %v4920
        %v5023 = vpop.f32.mrf.mxu0
        %v5024 = vadd.f32 0.0, %v5023
        %v5025 = vpop.f32.mrf.mxu0
        %5026 = vdwg.mxu0
        %v5027 = vadd.f32 %v4855, %v4989
        %v5028 = vadd.f32 %v4860, %v4994
        %v5029 = vadd.f32 %v4865, %v4999
        %v5030 = vadd.f32 %v4870, %v5004
        %v5031 = vadd.f32 %v4875, %v5009
        %v5032 = vadd.f32 %v4880, %v5014
        %v5033 = vadd.f32 %v4885, %v5019
        %v5034 = vadd.f32 %v4890, %v5024
        %s5035 = scalar_lea.vmem %s10, 96
        %v5036 = vld [vmem:[%s5035] sm:$0xff]
        %v5037 = vld [vmem:[%s5035 + $0x8] sm:$0xff]
        %v5038 = vld [vmem:[%s5035 + $0x10] sm:$0xff]
        %v5039 = vld [vmem:[%s5035 + $0x18] sm:$0xff]
        %v5041 = vsel %vm3225, %v4618, 0
        %v5044 = vsel %vm3225, %v4619, 0
        %v5047 = vsel %vm3225, %v4620, 0
        %v5050 = vsel %vm3225, %v4621, 0
        %v5053 = vsel %vm3225, %v4622, 0
        %v5056 = vsel %vm3225, %v4623, 0
        %v5059 = vsel %vm3225, %v4624, 0
        %v5062 = vsel %vm3225, %v4625, 0
        %5064 = vmatprep.subr.mxu0 0.0
        %5065 = vmatpush1.msra.mxu0 0.0
        %5066 = vmatprep.subr.mxu0 0.0
        %5067 = vmatpush1.msra.mxu0 0.0
        %5068 = vmatprep.subr.mxu0 0.0
        %5069 = vmatpush1.msra.mxu0 0.0
        %5070 = vmatprep.subr.mxu0 0.0
        %5071 = vmatpush1.msra.mxu0 0.0
        %5072 = vmatprep.subr.mxu0 0.0
        %5073 = vmatpush1.msra.mxu0 0.0
        %5074 = vmatprep.subr.mxu0 0.0
        %5075 = vmatpush1.msra.mxu0 0.0
        %5076 = vmatprep.subr.mxu0 0.0
        %5077 = vmatpush1.msra.mxu0 0.0
        %5078 = vmatprep.subr.mxu0 0.0
        %5079 = vmatpush1.msra.mxu0 0.0
        %5080 = vmatprep.subr.mxu0 0.0
        %5081 = vmatpush1.msra.mxu0 0.0
        %5082 = vmatprep.subr.mxu0 0.0
        %5083 = vmatpush1.msra.mxu0 0.0
        %5084 = vmatprep.subr.mxu0 0.0
        %5085 = vmatpush1.msra.mxu0 0.0
        %5086 = vmatprep.subr.mxu0 0.0
        %5087 = vmatpush1.msra.mxu0 0.0
        %5088 = vmatprep.subr.mxu0 0.0
        %5089 = vmatpush1.msra.mxu0 %v5039
        %5090 = vmatprep.subr.mxu0 0.0
        %5091 = vmatpush1.msra.mxu0 %v5038
        %5092 = vmatprep.subr.mxu0 0.0
        %5093 = vmatpush1.msra.mxu0 %v5037
        %5094 = vmatprep.subr.mxu0 0.0
        %5095 = vmatpush1.msra.mxu0 %v5036
        %5096 = vmatprep.subr.mxu0 0.0
        %5097 = vmatpush2.msra.mxu0 0.0
        %5098 = vmatprep.subr.mxu0 0.0
        %5099 = vmatpush2.msra.mxu0 0.0
        %5100 = vmatprep.subr.mxu0 0.0
        %5101 = vmatpush2.msra.mxu0 0.0
        %5102 = vmatprep.subr.mxu0 0.0
        %5103 = vmatpush2.msra.mxu0 0.0
        %5104 = vmatprep.subr.mxu0 0.0
        %5105 = vmatpush2.msra.mxu0 0.0
        %5106 = vmatprep.subr.mxu0 0.0
        %5107 = vmatpush2.msra.mxu0 0.0
        %5108 = vmatprep.subr.mxu0 0.0
        %5109 = vmatpush2.msra.mxu0 0.0
        %5110 = vmatprep.subr.mxu0 0.0
        %5111 = vmatpush2.msra.mxu0 0.0
        %5112 = vmatprep.subr.mxu0 0.0
        %5113 = vmatpush2.msra.mxu0 0.0
        %5114 = vmatprep.subr.mxu0 0.0
        %5115 = vmatpush2.msra.mxu0 0.0
        %5116 = vmatprep.subr.mxu0 0.0
        %5117 = vmatpush2.msra.mxu0 0.0
        %5118 = vmatprep.subr.mxu0 0.0
        %5119 = vmatpush2.msra.mxu0 0.0
        %5120 = vmatprep.subr.mxu0 0.0
        %5121 = vmatpush2.msra.mxu0 0.0
        %5122 = vmatprep.subr.mxu0 0.0
        %5123 = vmatpush2.msra.mxu0 0.0
        %5124 = vmatprep.subr.mxu0 0.0
        %5125 = vmatpush2.msra.mxu0 0.0
        %5126 = vmatprep.subr.mxu0 0.0
        %5127 = vmatpush2.msra.mxu0 0.0
        %5128 = vmatprep.mubr.f32.mxu0 0.0
        %5129 = vmatmul.mubr.f32.gmra.mxu0 %v5041
        %v5130 = vpop.f32.mrf.mxu0
        %v5131 = vadd.f32 0.0, %v5130
        %v5132 = vpop.f32.mrf.mxu0
        %5133 = vmatprep.mubr.f32.mxu0 0.0
        %5134 = vmatmul.mubr.f32.gmra.mxu0 %v5044
        %v5135 = vpop.f32.mrf.mxu0
        %v5136 = vadd.f32 0.0, %v5135
        %v5137 = vpop.f32.mrf.mxu0
        %5138 = vmatprep.mubr.f32.mxu0 0.0
        %5139 = vmatmul.mubr.f32.gmra.mxu0 %v5047
        %v5140 = vpop.f32.mrf.mxu0
        %v5141 = vadd.f32 0.0, %v5140
        %v5142 = vpop.f32.mrf.mxu0
        %5143 = vmatprep.mubr.f32.mxu0 0.0
        %5144 = vmatmul.mubr.f32.gmra.mxu0 %v5050
        %v5145 = vpop.f32.mrf.mxu0
        %v5146 = vadd.f32 0.0, %v5145
        %v5147 = vpop.f32.mrf.mxu0
        %5148 = vmatprep.mubr.f32.mxu0 0.0
        %5149 = vmatmul.mubr.f32.gmra.mxu0 %v5053
        %v5150 = vpop.f32.mrf.mxu0
        %v5151 = vadd.f32 0.0, %v5150
        %v5152 = vpop.f32.mrf.mxu0
        %5153 = vmatprep.mubr.f32.mxu0 0.0
        %5154 = vmatmul.mubr.f32.gmra.mxu0 %v5056
        %v5155 = vpop.f32.mrf.mxu0
        %v5156 = vadd.f32 0.0, %v5155
        %v5157 = vpop.f32.mrf.mxu0
        %5158 = vmatprep.mubr.f32.mxu0 0.0
        %5159 = vmatmul.mubr.f32.gmra.mxu0 %v5059
        %v5160 = vpop.f32.mrf.mxu0
        %v5161 = vadd.f32 0.0, %v5160
        %v5162 = vpop.f32.mrf.mxu0
        %5163 = vmatprep.mubr.f32.mxu0 0.0
        %5164 = vmatmul.mubr.f32.gmra.mxu0 %v5062
        %v5165 = vpop.f32.mrf.mxu0
        %v5166 = vadd.f32 0.0, %v5165
        %v5167 = vpop.f32.mrf.mxu0
        %5168 = vdwg.mxu0
        %v5169 = vadd.f32 %v5027, %v5131
        %v5170 = vadd.f32 %v5028, %v5136
        %v5171 = vadd.f32 %v5029, %v5141
        %v5172 = vadd.f32 %v5030, %v5146
        %v5173 = vadd.f32 %v5031, %v5151
        %v5174 = vadd.f32 %v5032, %v5156
        %v5175 = vadd.f32 %v5033, %v5161
        %v5176 = vadd.f32 %v5034, %v5166
        %v5177 = vld [vmem:[%s11] sm:$0x1]
        %v5179 = vlaneseq
        %v5180 = vshrl.u32 %v5179, 7
        %v5181 = vsub.s32 0, %v5180
        %v5182 = vrot.slane %v5177, %v5181
        %v5184 = vadd.f32 %v5169, %v5182
        %v5185 = vadd.f32 %v5170, %v5182
        %v5186 = vadd.f32 %v5171, %v5182
        %v5187 = vadd.f32 %v5172, %v5182
        %v5188 = vadd.f32 %v5173, %v5182
        %v5189 = vadd.f32 %v5174, %v5182
        %v5190 = vadd.f32 %v5175, %v5182
        %v5191 = vadd.f32 %v5176, %v5182
        %v5192 = vmax.f32 %v5184, 0.0
        %v5193 = vmax.f32 %v5185, 0.0
        %v5194 = vmax.f32 %v5186, 0.0
        %v5195 = vmax.f32 %v5187, 0.0
        %v5196 = vmax.f32 %v5188, 0.0
        %v5197 = vmax.f32 %v5189, 0.0
        %v5198 = vmax.f32 %v5190, 0.0
        %v5199 = vmax.f32 %v5191, 0.0
        %5200 = vst.msk [vmem:[%s511] sm:$0xff] %vm3225, %v5192
        %5201 = vst.msk [vmem:[%s511 + $0x8] sm:$0xff] %vm3225, %v5193
        %5202 = vst.msk [vmem:[%s511 + $0x10] sm:$0xff] %vm3225, %v5194
        %5203 = vst.msk [vmem:[%s511 + $0x18] sm:$0xff] %vm3225, %v5195
        %5204 = vst.msk [vmem:[%s511 + $0x20] sm:$0xff] %vm3225, %v5196
        %5205 = vst.msk [vmem:[%s511 + $0x28] sm:$0xff] %vm3225, %v5197
        %5206 = vst.msk [vmem:[%s511 + $0x30] sm:$0xff] %vm3225, %v5198
        %5207 = vst.msk [vmem:[%s511 + $0x38] sm:$0xff] %vm3225, %v5199
        %v5208 = vld [vmem:[%s5] sm:$0xff]
        %v5209 = vld [vmem:[%s5 + $0x8] sm:$0xff]
        %v5210 = vld [vmem:[%s5 + $0x10] sm:$0xff]
        %v5211 = vld [vmem:[%s5 + $0x18] sm:$0xff]
        %v5212 = vld [vmem:[%s5 + $0x20] sm:$0xff]
        %v5213 = vld [vmem:[%s5 + $0x28] sm:$0xff]
        %v5214 = vld [vmem:[%s5 + $0x30] sm:$0xff]
        %v5215 = vld [vmem:[%s5 + $0x38] sm:$0xff]
        %v5217 = vsel %vm523, %v5208, 0
        %v5220 = vsel %vm523, %v5209, 0
        %v5223 = vsel %vm523, %v5210, 0
        %v5226 = vsel %vm523, %v5211, 0
        %v5229 = vsel %vm523, %v5212, 0
        %v5232 = vsel %vm523, %v5213, 0
        %v5235 = vsel %vm523, %v5214, 0
        %v5238 = vsel %vm523, %v5215, 0
        %5240 = vmatprep.subr.mxu0 0.0
        %5241 = vmatpush1.msra.mxu0 0.0
        %5242 = vmatprep.subr.mxu0 0.0
        %5243 = vmatpush1.msra.mxu0 0.0
        %5244 = vmatprep.subr.mxu0 0.0
        %5245 = vmatpush1.msra.mxu0 0.0
        %5246 = vmatprep.subr.mxu0 0.0
        %5247 = vmatpush1.msra.mxu0 0.0
        %5248 = vmatprep.subr.mxu0 0.0
        %5249 = vmatpush1.msra.mxu0 0.0
        %5250 = vmatprep.subr.mxu0 0.0
        %5251 = vmatpush1.msra.mxu0 0.0
        %5252 = vmatprep.subr.mxu0 0.0
        %5253 = vmatpush1.msra.mxu0 0.0
        %5254 = vmatprep.subr.mxu0 0.0
        %5255 = vmatpush1.msra.mxu0 0.0
        %5256 = vmatprep.subr.mxu0 0.0
        %5257 = vmatpush1.msra.mxu0 %v5199
        %5258 = vmatprep.subr.mxu0 0.0
        %5259 = vmatpush1.msra.mxu0 %v5198
        %5260 = vmatprep.subr.mxu0 0.0
        %5261 = vmatpush1.msra.mxu0 %v5197
        %5262 = vmatprep.subr.mxu0 0.0
        %5263 = vmatpush1.msra.mxu0 %v5196
        %5264 = vmatprep.subr.mxu0 0.0
        %5265 = vmatpush1.msra.mxu0 %v5195
        %5266 = vmatprep.subr.mxu0 0.0
        %5267 = vmatpush1.msra.mxu0 %v5194
        %5268 = vmatprep.subr.mxu0 0.0
        %5269 = vmatpush1.msra.mxu0 %v5193
        %5270 = vmatprep.subr.mxu0 0.0
        %5271 = vmatpush1.msra.mxu0 %v5192
        %5272 = vmatprep.subr.mxu0 0.0
        %5273 = vmatpush2.msra.mxu0 0.0
        %5274 = vmatprep.subr.mxu0 0.0
        %5275 = vmatpush2.msra.mxu0 0.0
        %5276 = vmatprep.subr.mxu0 0.0
        %5277 = vmatpush2.msra.mxu0 0.0
        %5278 = vmatprep.subr.mxu0 0.0
        %5279 = vmatpush2.msra.mxu0 0.0
        %5280 = vmatprep.subr.mxu0 0.0
        %5281 = vmatpush2.msra.mxu0 0.0
        %5282 = vmatprep.subr.mxu0 0.0
        %5283 = vmatpush2.msra.mxu0 0.0
        %5284 = vmatprep.subr.mxu0 0.0
        %5285 = vmatpush2.msra.mxu0 0.0
        %5286 = vmatprep.subr.mxu0 0.0
        %5287 = vmatpush2.msra.mxu0 0.0
        %5288 = vmatprep.subr.mxu0 0.0
        %5289 = vmatpush2.msra.mxu0 0.0
        %5290 = vmatprep.subr.mxu0 0.0
        %5291 = vmatpush2.msra.mxu0 0.0
        %5292 = vmatprep.subr.mxu0 0.0
        %5293 = vmatpush2.msra.mxu0 0.0
        %5294 = vmatprep.subr.mxu0 0.0
        %5295 = vmatpush2.msra.mxu0 0.0
        %5296 = vmatprep.subr.mxu0 0.0
        %5297 = vmatpush2.msra.mxu0 0.0
        %5298 = vmatprep.subr.mxu0 0.0
        %5299 = vmatpush2.msra.mxu0 0.0
        %5300 = vmatprep.subr.mxu0 0.0
        %5301 = vmatpush2.msra.mxu0 0.0
        %5302 = vmatprep.subr.mxu0 0.0
        %5303 = vmatpush2.msra.mxu0 0.0
        %5304 = vmatprep.mubr.f32.mxu0 0.0
        %5305 = vmatmul.mubr.f32.gmra.mxu0 %v5217
        %v5306 = vpop.f32.mrf.mxu0
        %v5307 = vadd.f32 0.0, %v5306
        %v5308 = vpop.f32.mrf.mxu0
        %5309 = vmatprep.mubr.f32.mxu0 0.0
        %5310 = vmatmul.mubr.f32.gmra.mxu0 %v5220
        %v5311 = vpop.f32.mrf.mxu0
        %v5312 = vadd.f32 0.0, %v5311
        %v5313 = vpop.f32.mrf.mxu0
        %5314 = vmatprep.mubr.f32.mxu0 0.0
        %5315 = vmatmul.mubr.f32.gmra.mxu0 %v5223
        %v5316 = vpop.f32.mrf.mxu0
        %v5317 = vadd.f32 0.0, %v5316
        %v5318 = vpop.f32.mrf.mxu0
        %5319 = vmatprep.mubr.f32.mxu0 0.0
        %5320 = vmatmul.mubr.f32.gmra.mxu0 %v5226
        %v5321 = vpop.f32.mrf.mxu0
        %v5322 = vadd.f32 0.0, %v5321
        %v5323 = vpop.f32.mrf.mxu0
        %5324 = vmatprep.mubr.f32.mxu0 0.0
        %5325 = vmatmul.mubr.f32.gmra.mxu0 %v5229
        %v5326 = vpop.f32.mrf.mxu0
        %v5327 = vadd.f32 0.0, %v5326
        %v5328 = vpop.f32.mrf.mxu0
        %5329 = vmatprep.mubr.f32.mxu0 0.0
        %5330 = vmatmul.mubr.f32.gmra.mxu0 %v5232
        %v5331 = vpop.f32.mrf.mxu0
        %v5332 = vadd.f32 0.0, %v5331
        %v5333 = vpop.f32.mrf.mxu0
        %5334 = vmatprep.mubr.f32.mxu0 0.0
        %5335 = vmatmul.mubr.f32.gmra.mxu0 %v5235
        %v5336 = vpop.f32.mrf.mxu0
        %v5337 = vadd.f32 0.0, %v5336
        %v5338 = vpop.f32.mrf.mxu0
        %5339 = vmatprep.mubr.f32.mxu0 0.0
        %5340 = vmatmul.mubr.f32.gmra.mxu0 %v5238
        %v5341 = vpop.f32.mrf.mxu0
        %v5342 = vadd.f32 0.0, %v5341
        %v5343 = vpop.f32.mrf.mxu0
        %5344 = vdwg.mxu0
        %v5345 = vld [vmem:[%s12] sm:$0xff]
        %v5346 = vld [vmem:[%s12 + $0x8] sm:$0xff]
        %v5347 = vld [vmem:[%s12 + $0x10] sm:$0xff]
        %v5348 = vld [vmem:[%s12 + $0x18] sm:$0xff]
        %s5349 = scalar_lea.vmem %s12, 32
        %v5350 = vld [vmem:[%s5349] sm:$0xff]
        %v5351 = vld [vmem:[%s5349 + $0x8] sm:$0xff]
        %v5352 = vld [vmem:[%s5349 + $0x10] sm:$0xff]
        %v5353 = vld [vmem:[%s5349 + $0x18] sm:$0xff]
        %v5355 = vsel %vm3225, %v5317, 0
        %v5358 = vsel %vm3225, %v5322, 0
        %5360 = vmatprep.subr.mxu0 0.0
        %5361 = vmatpush1.msra.mxu0 0.0
        %5362 = vmatprep.subr.mxu0 0.0
        %5363 = vmatpush1.msra.mxu0 0.0
        %5364 = vmatprep.subr.mxu0 0.0
        %5365 = vmatpush1.msra.mxu0 0.0
        %5366 = vmatprep.subr.mxu0 0.0
        %5367 = vmatpush1.msra.mxu0 0.0
        %5368 = vmatprep.subr.mxu0 0.0
        %5369 = vmatpush1.msra.mxu0 0.0
        %5370 = vmatprep.subr.mxu0 0.0
        %5371 = vmatpush1.msra.mxu0 0.0
        %5372 = vmatprep.subr.mxu0 0.0
        %5373 = vmatpush1.msra.mxu0 0.0
        %5374 = vmatprep.subr.mxu0 0.0
        %5375 = vmatpush1.msra.mxu0 0.0
        %5376 = vmatprep.subr.mxu0 0.0
        %5377 = vmatpush1.msra.mxu0 0.0
        %5378 = vmatprep.subr.mxu0 0.0
        %5379 = vmatpush1.msra.mxu0 0.0
        %5380 = vmatprep.subr.mxu0 0.0
        %5381 = vmatpush1.msra.mxu0 0.0
        %5382 = vmatprep.subr.mxu0 0.0
        %5383 = vmatpush1.msra.mxu0 0.0
        %5384 = vmatprep.subr.mxu0 0.0
        %5385 = vmatpush1.msra.mxu0 %v5353
        %5386 = vmatprep.subr.mxu0 0.0
        %5387 = vmatpush1.msra.mxu0 %v5352
        %5388 = vmatprep.subr.mxu0 0.0
        %5389 = vmatpush1.msra.mxu0 %v5351
        %5390 = vmatprep.subr.mxu0 0.0
        %5391 = vmatpush1.msra.mxu0 %v5350
        %5392 = vmatprep.subr.mxu0 0.0
        %5393 = vmatpush2.msra.mxu0 0.0
        %5394 = vmatprep.subr.mxu0 0.0
        %5395 = vmatpush2.msra.mxu0 0.0
        %5396 = vmatprep.subr.mxu0 0.0
        %5397 = vmatpush2.msra.mxu0 0.0
        %5398 = vmatprep.subr.mxu0 0.0
        %5399 = vmatpush2.msra.mxu0 0.0
        %5400 = vmatprep.subr.mxu0 0.0
        %5401 = vmatpush2.msra.mxu0 0.0
        %5402 = vmatprep.subr.mxu0 0.0
        %5403 = vmatpush2.msra.mxu0 0.0
        %5404 = vmatprep.subr.mxu0 0.0
        %5405 = vmatpush2.msra.mxu0 0.0
        %5406 = vmatprep.subr.mxu0 0.0
        %5407 = vmatpush2.msra.mxu0 0.0
        %5408 = vmatprep.subr.mxu0 0.0
        %5409 = vmatpush2.msra.mxu0 0.0
        %5410 = vmatprep.subr.mxu0 0.0
        %5411 = vmatpush2.msra.mxu0 0.0
        %5412 = vmatprep.subr.mxu0 0.0
        %5413 = vmatpush2.msra.mxu0 0.0
        %5414 = vmatprep.subr.mxu0 0.0
        %5415 = vmatpush2.msra.mxu0 0.0
        %5416 = vmatprep.subr.mxu0 0.0
        %5417 = vmatpush2.msra.mxu0 0.0
        %5418 = vmatprep.subr.mxu0 0.0
        %5419 = vmatpush2.msra.mxu0 0.0
        %5420 = vmatprep.subr.mxu0 0.0
        %5421 = vmatpush2.msra.mxu0 0.0
        %5422 = vmatprep.subr.mxu0 0.0
        %5423 = vmatpush2.msra.mxu0 0.0
        %5424 = vmatprep.mubr.f32.mxu0 0.0
        %5425 = vmatmul.mubr.f32.gmra.mxu0 %v5355
        %v5426 = vpop.f32.mrf.mxu0
        %v5427 = vadd.f32 0.0, %v5426
        %v5428 = vpop.f32.mrf.mxu0
        %5429 = vmatprep.mubr.f32.mxu0 0.0
        %5430 = vmatmul.mubr.f32.gmra.mxu0 %v5358
        %v5431 = vpop.f32.mrf.mxu0
        %v5432 = vadd.f32 0.0, %v5431
        %v5433 = vpop.f32.mrf.mxu0
        %5434 = vdwg.mxu0
        %v5436 = vsel %vm3225, %v5307, 0
        %v5439 = vsel %vm3225, %v5312, 0
        %5441 = vmatprep.subr.mxu0 0.0
        %5442 = vmatpush1.msra.mxu0 0.0
        %5443 = vmatprep.subr.mxu0 0.0
        %5444 = vmatpush1.msra.mxu0 0.0
        %5445 = vmatprep.subr.mxu0 0.0
        %5446 = vmatpush1.msra.mxu0 0.0
        %5447 = vmatprep.subr.mxu0 0.0
        %5448 = vmatpush1.msra.mxu0 0.0
        %5449 = vmatprep.subr.mxu0 0.0
        %5450 = vmatpush1.msra.mxu0 0.0
        %5451 = vmatprep.subr.mxu0 0.0
        %5452 = vmatpush1.msra.mxu0 0.0
        %5453 = vmatprep.subr.mxu0 0.0
        %5454 = vmatpush1.msra.mxu0 0.0
        %5455 = vmatprep.subr.mxu0 0.0
        %5456 = vmatpush1.msra.mxu0 0.0
        %5457 = vmatprep.subr.mxu0 0.0
        %5458 = vmatpush1.msra.mxu0 0.0
        %5459 = vmatprep.subr.mxu0 0.0
        %5460 = vmatpush1.msra.mxu0 0.0
        %5461 = vmatprep.subr.mxu0 0.0
        %5462 = vmatpush1.msra.mxu0 0.0
        %5463 = vmatprep.subr.mxu0 0.0
        %5464 = vmatpush1.msra.mxu0 0.0
        %5465 = vmatprep.subr.mxu0 0.0
        %5466 = vmatpush1.msra.mxu0 %v5348
        %5467 = vmatprep.subr.mxu0 0.0
        %5468 = vmatpush1.msra.mxu0 %v5347
        %5469 = vmatprep.subr.mxu0 0.0
        %5470 = vmatpush1.msra.mxu0 %v5346
        %5471 = vmatprep.subr.mxu0 0.0
        %5472 = vmatpush1.msra.mxu0 %v5345
        %5473 = vmatprep.subr.mxu0 0.0
        %5474 = vmatpush2.msra.mxu0 0.0
        %5475 = vmatprep.subr.mxu0 0.0
        %5476 = vmatpush2.msra.mxu0 0.0
        %5477 = vmatprep.subr.mxu0 0.0
        %5478 = vmatpush2.msra.mxu0 0.0
        %5479 = vmatprep.subr.mxu0 0.0
        %5480 = vmatpush2.msra.mxu0 0.0
        %5481 = vmatprep.subr.mxu0 0.0
        %5482 = vmatpush2.msra.mxu0 0.0
        %5483 = vmatprep.subr.mxu0 0.0
        %5484 = vmatpush2.msra.mxu0 0.0
        %5485 = vmatprep.subr.mxu0 0.0
        %5486 = vmatpush2.msra.mxu0 0.0
        %5487 = vmatprep.subr.mxu0 0.0
        %5488 = vmatpush2.msra.mxu0 0.0
        %5489 = vmatprep.subr.mxu0 0.0
        %5490 = vmatpush2.msra.mxu0 0.0
        %5491 = vmatprep.subr.mxu0 0.0
        %5492 = vmatpush2.msra.mxu0 0.0
        %5493 = vmatprep.subr.mxu0 0.0
        %5494 = vmatpush2.msra.mxu0 0.0
        %5495 = vmatprep.subr.mxu0 0.0
        %5496 = vmatpush2.msra.mxu0 0.0
        %5497 = vmatprep.subr.mxu0 0.0
        %5498 = vmatpush2.msra.mxu0 0.0
        %5499 = vmatprep.subr.mxu0 0.0
        %5500 = vmatpush2.msra.mxu0 0.0
        %5501 = vmatprep.subr.mxu0 0.0
        %5502 = vmatpush2.msra.mxu0 0.0
        %5503 = vmatprep.subr.mxu0 0.0
        %5504 = vmatpush2.msra.mxu0 0.0
        %5505 = vmatprep.mubr.f32.mxu0 0.0
        %5506 = vmatmul.mubr.f32.gmra.mxu0 %v5436
        %v5507 = vpop.f32.mrf.mxu0
        %v5508 = vadd.f32 %v5427, %v5507
        %v5509 = vpop.f32.mrf.mxu0
        %5510 = vmatprep.mubr.f32.mxu0 0.0
        %5511 = vmatmul.mubr.f32.gmra.mxu0 %v5439
        %v5512 = vpop.f32.mrf.mxu0
        %v5513 = vadd.f32 %v5432, %v5512
        %v5514 = vpop.f32.mrf.mxu0
        %5515 = vdwg.mxu0
        %s5516 = scalar_lea.vmem %s12, 64
        %v5517 = vld [vmem:[%s5516] sm:$0xff]
        %v5518 = vld [vmem:[%s5516 + $0x8] sm:$0xff]
        %v5519 = vld [vmem:[%s5516 + $0x10] sm:$0xff]
        %v5520 = vld [vmem:[%s5516 + $0x18] sm:$0xff]
        %v5522 = vsel %vm3225, %v5327, 0
        %v5525 = vsel %vm3225, %v5332, 0
        %5527 = vmatprep.subr.mxu0 0.0
        %5528 = vmatpush1.msra.mxu0 0.0
        %5529 = vmatprep.subr.mxu0 0.0
        %5530 = vmatpush1.msra.mxu0 0.0
        %5531 = vmatprep.subr.mxu0 0.0
        %5532 = vmatpush1.msra.mxu0 0.0
        %5533 = vmatprep.subr.mxu0 0.0
        %5534 = vmatpush1.msra.mxu0 0.0
        %5535 = vmatprep.subr.mxu0 0.0
        %5536 = vmatpush1.msra.mxu0 0.0
        %5537 = vmatprep.subr.mxu0 0.0
        %5538 = vmatpush1.msra.mxu0 0.0
        %5539 = vmatprep.subr.mxu0 0.0
        %5540 = vmatpush1.msra.mxu0 0.0
        %5541 = vmatprep.subr.mxu0 0.0
        %5542 = vmatpush1.msra.mxu0 0.0
        %5543 = vmatprep.subr.mxu0 0.0
        %5544 = vmatpush1.msra.mxu0 0.0
        %5545 = vmatprep.subr.mxu0 0.0
        %5546 = vmatpush1.msra.mxu0 0.0
        %5547 = vmatprep.subr.mxu0 0.0
        %5548 = vmatpush1.msra.mxu0 0.0
        %5549 = vmatprep.subr.mxu0 0.0
        %5550 = vmatpush1.msra.mxu0 0.0
        %5551 = vmatprep.subr.mxu0 0.0
        %5552 = vmatpush1.msra.mxu0 %v5520
        %5553 = vmatprep.subr.mxu0 0.0
        %5554 = vmatpush1.msra.mxu0 %v5519
        %5555 = vmatprep.subr.mxu0 0.0
        %5556 = vmatpush1.msra.mxu0 %v5518
        %5557 = vmatprep.subr.mxu0 0.0
        %5558 = vmatpush1.msra.mxu0 %v5517
        %5559 = vmatprep.subr.mxu0 0.0
        %5560 = vmatpush2.msra.mxu0 0.0
        %5561 = vmatprep.subr.mxu0 0.0
        %5562 = vmatpush2.msra.mxu0 0.0
        %5563 = vmatprep.subr.mxu0 0.0
        %5564 = vmatpush2.msra.mxu0 0.0
        %5565 = vmatprep.subr.mxu0 0.0
        %5566 = vmatpush2.msra.mxu0 0.0
        %5567 = vmatprep.subr.mxu0 0.0
        %5568 = vmatpush2.msra.mxu0 0.0
        %5569 = vmatprep.subr.mxu0 0.0
        %5570 = vmatpush2.msra.mxu0 0.0
        %5571 = vmatprep.subr.mxu0 0.0
        %5572 = vmatpush2.msra.mxu0 0.0
        %5573 = vmatprep.subr.mxu0 0.0
        %5574 = vmatpush2.msra.mxu0 0.0
        %5575 = vmatprep.subr.mxu0 0.0
        %5576 = vmatpush2.msra.mxu0 0.0
        %5577 = vmatprep.subr.mxu0 0.0
        %5578 = vmatpush2.msra.mxu0 0.0
        %5579 = vmatprep.subr.mxu0 0.0
        %5580 = vmatpush2.msra.mxu0 0.0
        %5581 = vmatprep.subr.mxu0 0.0
        %5582 = vmatpush2.msra.mxu0 0.0
        %5583 = vmatprep.subr.mxu0 0.0
        %5584 = vmatpush2.msra.mxu0 0.0
        %5585 = vmatprep.subr.mxu0 0.0
        %5586 = vmatpush2.msra.mxu0 0.0
        %5587 = vmatprep.subr.mxu0 0.0
        %5588 = vmatpush2.msra.mxu0 0.0
        %5589 = vmatprep.subr.mxu0 0.0
        %5590 = vmatpush2.msra.mxu0 0.0
        %5591 = vmatprep.mubr.f32.mxu0 0.0
        %5592 = vmatmul.mubr.f32.gmra.mxu0 %v5522
        %v5593 = vpop.f32.mrf.mxu0
        %v5594 = vadd.f32 0.0, %v5593
        %v5595 = vpop.f32.mrf.mxu0
        %5596 = vmatprep.mubr.f32.mxu0 0.0
        %5597 = vmatmul.mubr.f32.gmra.mxu0 %v5525
        %v5598 = vpop.f32.mrf.mxu0
        %v5599 = vadd.f32 0.0, %v5598
        %v5600 = vpop.f32.mrf.mxu0
        %5601 = vdwg.mxu0
        %v5602 = vadd.f32 %v5508, %v5594
        %v5603 = vadd.f32 %v5513, %v5599
        %s5604 = scalar_lea.vmem %s12, 96
        %v5605 = vld [vmem:[%s5604] sm:$0xff]
        %v5606 = vld [vmem:[%s5604 + $0x8] sm:$0xff]
        %v5607 = vld [vmem:[%s5604 + $0x10] sm:$0xff]
        %v5608 = vld [vmem:[%s5604 + $0x18] sm:$0xff]
        %v5610 = vsel %vm3225, %v5337, 0
        %v5613 = vsel %vm3225, %v5342, 0
        %5615 = vmatprep.subr.mxu0 0.0
        %5616 = vmatpush1.msra.mxu0 0.0
        %5617 = vmatprep.subr.mxu0 0.0
        %5618 = vmatpush1.msra.mxu0 0.0
        %5619 = vmatprep.subr.mxu0 0.0
        %5620 = vmatpush1.msra.mxu0 0.0
        %5621 = vmatprep.subr.mxu0 0.0
        %5622 = vmatpush1.msra.mxu0 0.0
        %5623 = vmatprep.subr.mxu0 0.0
        %5624 = vmatpush1.msra.mxu0 0.0
        %5625 = vmatprep.subr.mxu0 0.0
        %5626 = vmatpush1.msra.mxu0 0.0
        %5627 = vmatprep.subr.mxu0 0.0
        %5628 = vmatpush1.msra.mxu0 0.0
        %5629 = vmatprep.subr.mxu0 0.0
        %5630 = vmatpush1.msra.mxu0 0.0
        %5631 = vmatprep.subr.mxu0 0.0
        %5632 = vmatpush1.msra.mxu0 0.0
        %5633 = vmatprep.subr.mxu0 0.0
        %5634 = vmatpush1.msra.mxu0 0.0
        %5635 = vmatprep.subr.mxu0 0.0
        %5636 = vmatpush1.msra.mxu0 0.0
        %5637 = vmatprep.subr.mxu0 0.0
        %5638 = vmatpush1.msra.mxu0 0.0
        %5639 = vmatprep.subr.mxu0 0.0
        %5640 = vmatpush1.msra.mxu0 %v5608
        %5641 = vmatprep.subr.mxu0 0.0
        %5642 = vmatpush1.msra.mxu0 %v5607
        %5643 = vmatprep.subr.mxu0 0.0
        %5644 = vmatpush1.msra.mxu0 %v5606
        %5645 = vmatprep.subr.mxu0 0.0
        %5646 = vmatpush1.msra.mxu0 %v5605
        %5647 = vmatprep.subr.mxu0 0.0
        %5648 = vmatpush2.msra.mxu0 0.0
        %5649 = vmatprep.subr.mxu0 0.0
        %5650 = vmatpush2.msra.mxu0 0.0
        %5651 = vmatprep.subr.mxu0 0.0
        %5652 = vmatpush2.msra.mxu0 0.0
        %5653 = vmatprep.subr.mxu0 0.0
        %5654 = vmatpush2.msra.mxu0 0.0
        %5655 = vmatprep.subr.mxu0 0.0
        %5656 = vmatpush2.msra.mxu0 0.0
        %5657 = vmatprep.subr.mxu0 0.0
        %5658 = vmatpush2.msra.mxu0 0.0
        %5659 = vmatprep.subr.mxu0 0.0
        %5660 = vmatpush2.msra.mxu0 0.0
        %5661 = vmatprep.subr.mxu0 0.0
        %5662 = vmatpush2.msra.mxu0 0.0
        %5663 = vmatprep.subr.mxu0 0.0
        %5664 = vmatpush2.msra.mxu0 0.0
        %5665 = vmatprep.subr.mxu0 0.0
        %5666 = vmatpush2.msra.mxu0 0.0
        %5667 = vmatprep.subr.mxu0 0.0
        %5668 = vmatpush2.msra.mxu0 0.0
        %5669 = vmatprep.subr.mxu0 0.0
        %5670 = vmatpush2.msra.mxu0 0.0
        %5671 = vmatprep.subr.mxu0 0.0
        %5672 = vmatpush2.msra.mxu0 0.0
        %5673 = vmatprep.subr.mxu0 0.0
        %5674 = vmatpush2.msra.mxu0 0.0
        %5675 = vmatprep.subr.mxu0 0.0
        %5676 = vmatpush2.msra.mxu0 0.0
        %5677 = vmatprep.subr.mxu0 0.0
        %5678 = vmatpush2.msra.mxu0 0.0
        %5679 = vmatprep.mubr.f32.mxu0 0.0
        %5680 = vmatmul.mubr.f32.gmra.mxu0 %v5610
        %v5681 = vpop.f32.mrf.mxu0
        %v5682 = vadd.f32 0.0, %v5681
        %v5683 = vpop.f32.mrf.mxu0
        %5684 = vmatprep.mubr.f32.mxu0 0.0
        %5685 = vmatmul.mubr.f32.gmra.mxu0 %v5613
        %v5686 = vpop.f32.mrf.mxu0
        %v5687 = vadd.f32 0.0, %v5686
        %v5688 = vpop.f32.mrf.mxu0
        %5689 = vdwg.mxu0
        %v5690 = vadd.f32 %v5602, %v5682
        %v5691 = vadd.f32 %v5603, %v5687
        %v5692 = vld [vmem:[%s13] sm:$0x1]
        %v5694 = vlaneseq
        %v5695 = vshrl.u32 %v5694, 7
        %v5696 = vsub.s32 0, %v5695
        %v5697 = vrot.slane %v5692, %v5696
        %v5699 = vadd.f32 %v5690, %v5697
        %v5700 = vadd.f32 %v5691, %v5697
        %v5701 = vmax.f32 %v5699, 0.0
        %v5702 = vmax.f32 %v5700, 0.0
        %5703 = vst.msk [vmem:[%s504] sm:$0xff] %vm523, %v5701
        %5704 = vst.msk [vmem:[%s504 + $0x8] sm:$0xff] %vm523, %v5702
        %s5705 = sand.u32 %s345, 1
        %s5706 = scalar_lea.sflag [#allocation5], %s5705
        %s5707 = sand.u32 %s345, 1
        %s5708 = smul.addr %s5707, 16
        %s5709 = scalar_lea.vmem [#allocation4], %s5708
        %s5710 = sand.u32 %s371, 1
        %s5711 = scalar_lea.sflag [#allocation7], %s5710
        %s5712 = sand.u32 %s371, 1
        %s5713 = smul.addr %s5712, 64
        %s5714 = scalar_lea.vmem [#allocation6], %s5713
        // Predicated region
        $region77: #{encoder_12k.1} parent=75 // pred_check
          %p5715 = pneg %p355
        $region78: #{encoder_12k.1} parent=75 // pred_check_branch
          %5717 = sbr.rel (%p5715) target = $region80
        $region79: #{encoder_12k.1} parent=75 // pred_region
          %s5719 = ssub.s32 256, 256
          %5720 = vsyncadd %s5706, %s5719
          %s5721 = smul.addr %s33, 2
          %s5722 = smul.addr %s5721, 128
          %s5723 = scalar_lea.hbm %s14, %s5722
          %s5724 = sshll.u32 %s5709, 4
          %s5725 = int_to_ptr.vmem [resolvable:$true] %s5724
          %5730 = dma.vmem_to_hbm [thread:$0]  %s5725, 256, %s5723, %s5706, 128, 128, 8
        $region80: #{encoder_12k.1} parent=75 // pred_fallthru
          _
        // Predicated region
        $region81: #{encoder_12k.1} parent=75 // pred_check
          %p5731 = pneg %p381
        $region82: #{encoder_12k.1} parent=75 // pred_check_branch
          %5733 = sbr.rel (%p5731) target = $region84
        $region83: #{encoder_12k.1} parent=75 // pred_region
          %s5735 = ssub.s32 1024, 1024
          %5736 = vsyncadd %s5711, %s5735
          %s5737 = smul.addr %s33, 8
          %s5738 = smul.addr %s5737, 128
          %s5739 = scalar_lea.hbm %s15, %s5738
          %s5740 = sshll.u32 %s5714, 4
          %s5741 = int_to_ptr.vmem [resolvable:$true] %s5740
          %5746 = dma.vmem_to_hbm [thread:$0]  %s5741, 1024, %s5739, %s5711, 128, 128, 8
        $region84: #{encoder_12k.1} parent=75 // pred_fallthru
          _
      $region76: #{encoder_12k.1} parent=5 // pred_fallthru
        _
      %p5747 = scmp.le.s32.totalorder 2, %s28
      // Predicated region
      $region85: #{encoder_12k.1} parent=5 // pred_check
        %p5748 = pneg %p5747
      $region86: #{encoder_12k.1} parent=5 // pred_check_branch
        %5750 = sbr.rel (%p5748) target = $region88
      $region87: #{encoder_12k.1} parent=5 // pred_region
        %s5751 = ssub.s32 %s28, 2
        // Predicated region
        $region89: #{encoder_12k.1} parent=87 // pred_check
          %p5752 = pneg %p361
        $region90: #{encoder_12k.1} parent=87 // pred_check_branch
          %5754 = sbr.rel (%p5752) target = $region92
        $region91: #{encoder_12k.1} parent=87 // pred_region
          %s5755 = sand.u32 %s346, 1
          %s5756 = scalar_lea.sflag [#allocation5], %s5755
          %s5757 = sand.u32 %s346, 1
          %s5758 = smul.addr %s5757, 16
          %s5759 = scalar_lea.vmem [#allocation4], %s5758
          %5760 = dma.done %s5756, 256
        $region92: #{encoder_12k.1} parent=87 // pred_fallthru
          _
        // Predicated region
        $region93: #{encoder_12k.1} parent=87 // pred_check
          %p5761 = pneg %p387
        $region94: #{encoder_12k.1} parent=87 // pred_check_branch
          %5763 = sbr.rel (%p5761) target = $region96
        $region95: #{encoder_12k.1} parent=87 // pred_region
          %s5764 = sand.u32 %s372, 1
          %s5765 = scalar_lea.sflag [#allocation7], %s5764
          %s5766 = sand.u32 %s372, 1
          %s5767 = smul.addr %s5766, 64
          %s5768 = scalar_lea.vmem [#allocation6], %s5767
          %5769 = dma.done %s5765, 1024
        $region96: #{encoder_12k.1} parent=87 // pred_fallthru
          _
      $region88: #{encoder_12k.1} parent=5 // pred_fallthru
        _
    $region6: #{encoder_12k.1} parent=1 // loop_footer
      %s32 = sadd.s32 1, %s28
    $region7: #{encoder_12k.1} parent=1 // loop_footer_branch
      %27 = sbr.rel target = $region3
    $region8: #{encoder_12k.1} parent=1 // loop_exit
      _
    %5770 = vsyncpa [#allocation5], 1
    %s5771 = scalar_lea.sflag [#allocation5], 1
    %5772 = vsyncpa %s5771, 1
    %5773 = vsyncpa [#allocation7], 1
    %s5774 = scalar_lea.sflag [#allocation7], 1
    %5775 = vsyncpa %s5774, 1

</llo_original>
